<compile_context>
chip_gen: v6e
topology: v6e:2x2x1
jax: 0.10.0
libtpu: 0.0.40
codegen_flags: <defaults>
</compile_context>

<pallas_src>
import math
import functools

import jax
import jax.numpy as jnp
from jax.experimental import pallas as pl
from jax.experimental.pallas import tpu as pltpu


def _linformer_kernel(x_ref, w_ref, b_ref, et_ref, ft_ref, o_ref, *,
                      batch_tile, seq_len, num_head, head_dim,
                      compute_dtype, approx_recip):
    """One grid step processes `batch_tile` batch elements.

    x_ref : (Bt*S, D)   input rows (batch-major, S rows per batch element)
    w_ref : (D, 3D)     fused [Wq/sqrt(hd) | Wk | Wv], pre-cast to compute dtype
    b_ref : (1, 3D)     fused [bq/sqrt(hd) | bk | bv], fp32
    et_ref: (P, S)      E^T (Linformer key projection, transposed), compute dtype
    ft_ref: (P, S)      F^T (Linformer value projection, transposed), compute dtype
    o_ref : (Bt*S, D)   output rows
    """
    cd = compute_dtype
    Bt, S, H, hd = batch_tile, seq_len, num_head, head_dim
    D = H * hd
    P = et_ref.shape[0]

    # Single fused QKV matmul: (Bt*S, D) @ (D, 3D), fp32 MXU accumulation,
    # fp32 bias add. 1/sqrt(head_dim) is already folded into the Q columns.
    x = x_ref[...].astype(cd)
    qkv = jnp.dot(x, w_ref[...], preferred_element_type=jnp.float32) + b_ref[...]

    # Slice q/k/v and immediately downcast to the compute dtype (trim fp32
    # live ranges), then expose the (batch, seq) structure again.
    q = qkv[:, :D].astype(cd).reshape(Bt, S, D)
    k = qkv[:, D:2 * D].astype(cd).reshape(Bt, S, D)
    v = qkv[:, 2 * D:].astype(cd).reshape(Bt, S, D)

    # Linformer projections hoisted over ALL heads at once, batched over Bt:
    #   (Bt, P, S) @ (Bt, S, D) -> (Bt, P, D). One full-D-width matmul per
    # batch element instead of num_head narrow per-head matmuls.
    et_b = jnp.broadcast_to(et_ref[...], (Bt, P, S))
    ft_b = jnp.broadcast_to(ft_ref[...], (Bt, P, S))
    kp = jnp.einsum('bps,bsd->bpd', et_b, k,
                    preferred_element_type=jnp.float32).astype(cd)
    vp = jnp.einsum('bps,bsd->bpd', ft_b, v,
                    preferred_element_type=jnp.float32).astype(cd)

    # Per-head scores / softmax / context, each einsum batched over Bt.
    # Softmax stays in fp32 (v5e has no bf16 VPU/EUP path).
    head_outs = []
    for h in range(H):  # static unroll; num_head is compile-time small
        lo = h * hd
        qh = q[:, :, lo:lo + hd]     # (Bt, S, hd)
        kph = kp[:, :, lo:lo + hd]   # (Bt, P, hd)
        vph = vp[:, :, lo:lo + hd]   # (Bt, P, hd)

        s = jnp.einsum('bnd,bpd->bnp', qh, kph,
                       preferred_element_type=jnp.float32)   # (Bt, S, P) fp32
        s = s - jnp.max(s, axis=-1, keepdims=True)
        p = jnp.exp(s)
        denom = jnp.sum(p, axis=-1, keepdims=True)
        if approx_recip:
            p = p * pl.reciprocal(denom, approx=True)
        else:
            p = p / denom

        ctx = jnp.einsum('bnp,bpd->bnd', p.astype(cd), vph,
                         preferred_element_type=jnp.float32)  # (Bt, S, hd)
        head_outs.append(ctx.astype(o_ref.dtype))             # drop fp32 early

    out = jnp.concatenate(head_outs, axis=-1)   # (Bt, S, D)
    o_ref[...] = out.reshape(Bt * S, D)         # single lane-dense store


def _vmem_limit_bytes():
    """Generation-aware VMEM limit (~85% of per-core capacity), safe fallback."""
    try:
        cap = pltpu.get_tpu_info().vmem_capacity_bytes
        if cap:
            return int(cap * 0.85)   # ~54 MiB on v7x, ~109 MiB on v5e/v6e
    except Exception:
        pass
    return 64 * 1024 * 1024


def _pick_batch_tile(B, S, target_rows=256):
    """Largest divisor of B so that bt*S stays around `target_rows` rows."""
    bt = max(1, min(B, target_rows // max(S, 1)))
    while B % bt != 0:
        bt -= 1
    if S % 8 != 0:
        # Collapsing (bt, S) rows is only layout-free when S is a sublane
        # multiple; otherwise keep the whole batch in one full-array block.
        bt = B
    return bt


def linformer_mhsa(x, wq, bq, wk, bk, wv, bv, proj_e, proj_f, *, num_head,
                   compute_dtype=jnp.bfloat16, approx_recip=True):
    """x: (B, S, D). proj_e / proj_f: (S, P). Returns (B, S, D)."""
    B, S, D = x.shape
    P = proj_e.shape[1]
    head_dim = D // num_head
    cd = compute_dtype

    # ---- grid-invariant operand prep (done once, outside the kernel) -------
    # Fuse QKV into one (D, 3D) weight / (1, 3D) bias; fold 1/sqrt(head_dim)
    # into the Q columns; pre-cast weights / projections to the compute dtype.
    scale = 1.0 / math.sqrt(head_dim)
    w_fused = jnp.concatenate([wq * scale, wk, wv], axis=1).astype(cd)   # (D, 3D)
    b_fused = jnp.concatenate([bq * scale, bk, bv]).reshape(1, 3 * D)
    b_fused = b_fused.astype(jnp.float32)                                 # fp32 bias add
    et = proj_e.T.astype(cd)    # (P, S)
    ft = proj_f.T.astype(cd)    # (P, S)

    # ---- batch packing: amortize per-grid-step overhead ---------------------
    bt = _pick_batch_tile(B, S)
    grid_b = B // bt
    x2 = x.reshape(B * S, D)
    # TODO(synk): on v7x (2 TensorCores) grid_b should be >= 2 to feed both
    #             cores; with tiny B this keeps one core idle.

    kernel = functools.partial(
        _linformer_kernel, batch_tile=bt, seq_len=S, num_head=num_head,
        head_dim=head_dim, compute_dtype=cd, approx_recip=approx_recip)

    itemsize = jnp.dtype(x.dtype).itemsize
    cd_size = jnp.dtype(cd).itemsize
    cost = pl.CostEstimate(
        # fused QKV + (E proj, F proj, scores, context).
        flops=2 * B * S * D * (3 * D + 4 * P),
        transcendentals=B * num_head * S * P,
        bytes_accessed=(2 * B * S * D * itemsize          # x in, o out
                        + 3 * D * D * cd_size + 3 * D * 4  # fused W, fused b
                        + 2 * P * S * cd_size),            # E^T, F^T
    )

    def build(single_buffer_invariants):
        if single_buffer_invariants:
            # Constant index_map => the second pipeline buffer is dead VMEM.
            inv = lambda shape: pl.BlockSpec(shape, lambda i: (0, 0),
                                             pipeline_mode=pl.Buffered(1))
        else:
            inv = lambda shape: pl.BlockSpec(shape, lambda i: (0, 0))
        return pl.pallas_call(
            kernel,
            out_shape=jax.ShapeDtypeStruct((B * S, D), x.dtype),
            grid_spec=pltpu.PrefetchScalarGridSpec(
                num_scalar_prefetch=0,
                grid=(grid_b,),
                in_specs=[
                    pl.BlockSpec((bt * S, D), lambda i: (i, 0)),   # x rows
                    inv((D, 3 * D)),                               # fused W
                    inv((1, 3 * D)),                               # fused bias
                    inv((P, S)),                                   # E^T
                    inv((P, S)),                                   # F^T
                ],
                out_specs=pl.BlockSpec((bt * S, D), lambda i: (i, 0)),
            ),
            compiler_params=pltpu.CompilerParams(
                dimension_semantics=("parallel",),
                vmem_limit_bytes=_vmem_limit_bytes(),
            ),
            cost_estimate=cost,
        )

    try:
        out2 = jax.block_until_ready(build(True)(x2, w_fused, b_fused, et, ft))
    except Exception:
        # Fallback: default (double) buffering if Buffered(1) is unsupported.
        out2 = jax.block_until_ready(build(False)(x2, w_fused, b_fused, et, ft))
    return out2.reshape(B, S, D)


def _reference(x, wq, bq, wk, bk, wv, bv, proj_e, proj_f, *, num_head):
    """Pure-JAX fp32 reference mirroring the PyTorch forward (eval mode)."""
    B, S, D = x.shape
    hd = D // num_head
    q = x @ wq + bq
    k = x @ wk + bk
    v = x @ wv + bv
    split = lambda t: t.reshape(B, S, num_head, hd).transpose(0, 2, 1, 3)
    qm, km, vm = split(q), split(k), split(v)
    kp = jnp.einsum('bhnd,ne->bhed', km, proj_e)
    vp = jnp.einsum('bhnd,nf->bhfd', vm, proj_f)
    s = jnp.einsum('bhnd,bhed->bhne', qm, kp) / math.sqrt(hd)
    p = jax.nn.softmax(s, axis=-1)
    o = jnp.einsum('bhne,bhed->bhnd', p, vp)
    return o.transpose(0, 2, 1, 3).reshape(B, S, D)


if __name__ == "__main__":
    # Small shapes consistent with the module.
    batch = 2
    seq_len = 16
    feat_dim = 32
    num_head = 4
    proj_dim = 8
    # para_share_schema = 'head'  (E and F separate)

    key = jax.random.PRNGKey(0)
    kx, kq, kk, kv, ke, kf = jax.random.split(key, 6)

    # Deterministic parameter init matching reset_parameters():
    #   xavier_uniform for QKV weights, zero biases,
    #   normal(0, sqrt(1/seq_len)) for the Linformer projections.
    xavier_bound = math.sqrt(6.0 / (feat_dim + feat_dim))
    wq = jax.random.uniform(kq, (feat_dim, feat_dim), jnp.float32,
                            -xavier_bound, xavier_bound)
    wk = jax.random.uniform(kk, (feat_dim, feat_dim), jnp.float32,
                            -xavier_bound, xavier_bound)
    wv = jax.random.uniform(kv, (feat_dim, feat_dim), jnp.float32,
                            -xavier_bound, xavier_bound)
    bq = jnp.zeros((feat_dim,), jnp.float32)
    bk = jnp.zeros((feat_dim,), jnp.float32)
    bv = jnp.zeros((feat_dim,), jnp.float32)
    proj_e = jax.random.normal(ke, (seq_len, proj_dim), jnp.float32) * math.sqrt(1.0 / seq_len)
    proj_f = jax.random.normal(kf, (seq_len, proj_dim), jnp.float32) * math.sqrt(1.0 / seq_len)

    x = jax.random.normal(kx, (batch, seq_len, feat_dim), jnp.float32)

    ref = _reference(x, wq, bq, wk, bk, wv, bv, proj_e, proj_f,
                     num_head=num_head)

    # fp32 compute path: tight check of kernel structure (approx reciprocal is
    # the only approximation).
    out_f32 = linformer_mhsa(x, wq, bq, wk, bk, wv, bv, proj_e, proj_f,
                             num_head=num_head, compute_dtype=jnp.float32)
    out_f32 = jax.block_until_ready(out_f32)
    assert out_f32.shape == (batch, seq_len, feat_dim)
    assert jnp.allclose(out_f32, ref, atol=1e-2, rtol=1e-2), \
        "fp32 kernel mismatch vs reference"

    # bf16 compute path (default / fast): looser tolerance for bf16 rounding.
    out_bf16 = linformer_mhsa(x, wq, bq, wk, bk, wv, bv, proj_e, proj_f,
                              num_head=num_head, compute_dtype=jnp.bfloat16)
    out_bf16 = jax.block_until_ready(out_bf16)
    assert out_bf16.shape == (batch, seq_len, feat_dim)
    assert jnp.allclose(out_bf16, ref, atol=1e-1, rtol=1e-1), \
        "bf16 kernel mismatch vs reference"

    print("KERNEL_OK")
</pallas_src>

<mosaic_0001>
module attributes {stable_mosaic.version = 11 : i64} {
  func.func @_linformer_kernel(%arg0: i32, %arg1: memref<32x32xf32, #tpu.memory_space<vmem>>, %arg2: memref<32x96xf32, #tpu.memory_space<vmem>>, %arg3: memref<1x96xf32, #tpu.memory_space<vmem>>, %arg4: memref<8x16xf32, #tpu.memory_space<vmem>>, %arg5: memref<8x16xf32, #tpu.memory_space<vmem>>, %arg6: memref<32x32xf32, #tpu.memory_space<vmem>>) attributes {dimension_semantics = [#tpu.dimension_semantics<parallel>], iteration_bounds = array<i64: 1>, scalar_prefetch = 0 : i64, scratch_operands = 0 : i64, tpu.core_type = #tpu.core_type<tc>, window_params = [{transform_indices = @transform_0, window_bounds = array<i64: 32, 32>}, {pipeline_mode = #tpu.pipeline_mode<synchronous>, transform_indices = @transform_1, window_bounds = array<i64: 32, 96>}, {pipeline_mode = #tpu.pipeline_mode<synchronous>, transform_indices = @transform_2, window_bounds = array<i64: 1, 96>}, {pipeline_mode = #tpu.pipeline_mode<synchronous>, transform_indices = @transform_3, window_bounds = array<i64: 8, 16>}, {pipeline_mode = #tpu.pipeline_mode<synchronous>, transform_indices = @transform_4, window_bounds = array<i64: 8, 16>}, {transform_indices = @transform_5, window_bounds = array<i64: 32, 32>}]} {
    %c0 = arith.constant 0 : index
    %c0_0 = arith.constant 0 : index
    %0 = vector.load %arg1[%c0, %c0_0] : memref<32x32xf32, #tpu.memory_space<vmem>>, vector<32x32xf32>
    %c0_1 = arith.constant 0 : index
    %c0_2 = arith.constant 0 : index
    %1 = vector.load %arg2[%c0_1, %c0_2] : memref<32x96xf32, #tpu.memory_space<vmem>>, vector<32x96xf32>
    %cst = arith.constant dense<0.000000e+00> : vector<32x96xf32>
    %2 = tpu.matmul %0, %1, %cst {dimension_numbers = #tpu.dot_dimension_numbers<[1], [0], [0], [1], [0, 0, 1, 1], [], []>} : vector<32x32xf32>, vector<32x96xf32>, vector<32x96xf32> -> vector<32x96xf32>
    %c0_3 = arith.constant 0 : index
    %c0_4 = arith.constant 0 : index
    %3 = vector.load %arg3[%c0_3, %c0_4] : memref<1x96xf32, #tpu.memory_space<vmem>>, vector<1x96xf32>
    %4 = vector.broadcast %3 : vector<1x96xf32> to vector<32x96xf32>
    %5 = arith.addf %2, %4 : vector<32x96xf32>
    %6 = vector.extract_strided_slice %5 {offsets = [0, 0], sizes = [32, 32], strides = [1, 1]} : vector<32x96xf32> to vector<32x32xf32>
    %7 = vector.shape_cast %6 : vector<32x32xf32> to vector<2x16x32xf32>
    %8 = vector.extract_strided_slice %5 {offsets = [0, 32], sizes = [32, 32], strides = [1, 1]} : vector<32x96xf32> to vector<32x32xf32>
    %9 = vector.shape_cast %8 : vector<32x32xf32> to vector<2x16x32xf32>
    %10 = vector.extract_strided_slice %5 {offsets = [0, 64], sizes = [32, 32], strides = [1, 1]} : vector<32x96xf32> to vector<32x32xf32>
    %11 = vector.shape_cast %10 : vector<32x32xf32> to vector<2x16x32xf32>
    %c0_5 = arith.constant 0 : index
    %c0_6 = arith.constant 0 : index
    %12 = vector.load %arg4[%c0_5, %c0_6] : memref<8x16xf32, #tpu.memory_space<vmem>>, vector<8x16xf32>
    %13 = vector.shape_cast %12 : vector<8x16xf32> to vector<1x8x16xf32>
    %14 = vector.broadcast %13 : vector<1x8x16xf32> to vector<2x8x16xf32>
    %c0_7 = arith.constant 0 : index
    %c0_8 = arith.constant 0 : index
    %15 = vector.load %arg5[%c0_7, %c0_8] : memref<8x16xf32, #tpu.memory_space<vmem>>, vector<8x16xf32>
    %16 = vector.shape_cast %15 : vector<8x16xf32> to vector<1x8x16xf32>
    %17 = vector.broadcast %16 : vector<1x8x16xf32> to vector<2x8x16xf32>
    "tpu.trace_start"() <{level = 10 : i32, message = "bps,bsd->bpd"}> : () -> ()
    %cst_9 = arith.constant dense<0.000000e+00> : vector<2x8x32xf32>
    %18 = tpu.matmul %14, %9, %cst_9 {dimension_numbers = #tpu.dot_dimension_numbers<[2], [1], [1], [2], [0, 0, 0, 1, 1, 2], [0], [0]>} : vector<2x8x16xf32>, vector<2x16x32xf32>, vector<2x8x32xf32> -> vector<2x8x32xf32>
    %cst_10 = arith.constant dense<0.000000e+00> : vector<2x8x32xf32>
    %19 = tpu.matmul %17, %11, %cst_10 {dimension_numbers = #tpu.dot_dimension_numbers<[2], [1], [1], [2], [0, 0, 0, 1, 1, 2], [0], [0]>} : vector<2x8x16xf32>, vector<2x16x32xf32>, vector<2x8x32xf32> -> vector<2x8x32xf32>
    "tpu.trace_stop"() : () -> ()
    %20 = vector.extract_strided_slice %7 {offsets = [0, 0, 0], sizes = [2, 16, 8], strides = [1, 1, 1]} : vector<2x16x32xf32> to vector<2x16x8xf32>
    %21 = vector.extract_strided_slice %18 {offsets = [0, 0, 0], sizes = [2, 8, 8], strides = [1, 1, 1]} : vector<2x8x32xf32> to vector<2x8x8xf32>
    %22 = vector.extract_strided_slice %19 {offsets = [0, 0, 0], sizes = [2, 8, 8], strides = [1, 1, 1]} : vector<2x8x32xf32> to vector<2x8x8xf32>
    "tpu.trace_start"() <{level = 10 : i32, message = "bnd,bpd->bnp"}> : () -> ()
    %cst_11 = arith.constant dense<0.000000e+00> : vector<2x16x8xf32>
    %23 = tpu.matmul %20, %21, %cst_11 {dimension_numbers = #tpu.dot_dimension_numbers<[2], [2], [1], [1], [0, 0, 0, 1, 1, 1], [0], [0]>} : vector<2x16x8xf32>, vector<2x8x8xf32>, vector<2x16x8xf32> -> vector<2x16x8xf32>
    "tpu.trace_stop"() : () -> ()
    %cst_12 = arith.constant dense<0xFF800000> : vector<2x16xf32>
    %24 = vector.multi_reduction <maximumf>, %23, %cst_12 [2] : vector<2x16x8xf32> to vector<2x16xf32>
    %25 = vector.shape_cast %24 : vector<2x16xf32> to vector<2x16x1xf32>
    %26 = vector.broadcast %25 : vector<2x16x1xf32> to vector<2x16x8xf32>
    %27 = arith.subf %23, %26 : vector<2x16x8xf32>
    %28 = math.exp %27 : vector<2x16x8xf32>
    %cst_13 = arith.constant dense<0.000000e+00> : vector<2x16xf32>
    %29 = vector.multi_reduction <add>, %28, %cst_13 [2] : vector<2x16x8xf32> to vector<2x16xf32>
    %30 = vector.shape_cast %29 : vector<2x16xf32> to vector<2x16x1xf32>
    %31 = tpu.reciprocal %30 {approx = true} : vector<2x16x1xf32> -> vector<2x16x1xf32>
    %32 = vector.broadcast %31 : vector<2x16x1xf32> to vector<2x16x8xf32>
    %33 = arith.mulf %28, %32 : vector<2x16x8xf32>
    "tpu.trace_start"() <{level = 10 : i32, message = "bnp,bpd->bnd"}> : () -> ()
    %cst_14 = arith.constant dense<0.000000e+00> : vector<2x16x8xf32>
    %34 = tpu.matmul %33, %22, %cst_14 {dimension_numbers = #tpu.dot_dimension_numbers<[2], [1], [1], [2], [0, 0, 0, 1, 1, 2], [0], [0]>} : vector<2x16x8xf32>, vector<2x8x8xf32>, vector<2x16x8xf32> -> vector<2x16x8xf32>
    "tpu.trace_stop"() : () -> ()
    %35 = vector.extract_strided_slice %7 {offsets = [0, 0, 8], sizes = [2, 16, 8], strides = [1, 1, 1]} : vector<2x16x32xf32> to vector<2x16x8xf32>
    %36 = vector.extract_strided_slice %18 {offsets = [0, 0, 8], sizes = [2, 8, 8], strides = [1, 1, 1]} : vector<2x8x32xf32> to vector<2x8x8xf32>
    %37 = vector.extract_strided_slice %19 {offsets = [0, 0, 8], sizes = [2, 8, 8], strides = [1, 1, 1]} : vector<2x8x32xf32> to vector<2x8x8xf32>
    "tpu.trace_start"() <{level = 10 : i32, message = "bnd,bpd->bnp"}> : () -> ()
    %cst_15 = arith.constant dense<0.000000e+00> : vector<2x16x8xf32>
    %38 = tpu.matmul %35, %36, %cst_15 {dimension_numbers = #tpu.dot_dimension_numbers<[2], [2], [1], [1], [0, 0, 0, 1, 1, 1], [0], [0]>} : vector<2x16x8xf32>, vector<2x8x8xf32>, vector<2x16x8xf32> -> vector<2x16x8xf32>
    "tpu.trace_stop"() : () -> ()
    %cst_16 = arith.constant dense<0xFF800000> : vector<2x16xf32>
    %39 = vector.multi_reduction <maximumf>, %38, %cst_16 [2] : vector<2x16x8xf32> to vector<2x16xf32>
    %40 = vector.shape_cast %39 : vector<2x16xf32> to vector<2x16x1xf32>
    %41 = vector.broadcast %40 : vector<2x16x1xf32> to vector<2x16x8xf32>
    %42 = arith.subf %38, %41 : vector<2x16x8xf32>
    %43 = math.exp %42 : vector<2x16x8xf32>
    %cst_17 = arith.constant dense<0.000000e+00> : vector<2x16xf32>
    %44 = vector.multi_reduction <add>, %43, %cst_17 [2] : vector<2x16x8xf32> to vector<2x16xf32>
    %45 = vector.shape_cast %44 : vector<2x16xf32> to vector<2x16x1xf32>
    %46 = tpu.reciprocal %45 {approx = true} : vector<2x16x1xf32> -> vector<2x16x1xf32>
    %47 = vector.broadcast %46 : vector<2x16x1xf32> to vector<2x16x8xf32>
    %48 = arith.mulf %43, %47 : vector<2x16x8xf32>
    "tpu.trace_start"() <{level = 10 : i32, message = "bnp,bpd->bnd"}> : () -> ()
    %cst_18 = arith.constant dense<0.000000e+00> : vector<2x16x8xf32>
    %49 = tpu.matmul %48, %37, %cst_18 {dimension_numbers = #tpu.dot_dimension_numbers<[2], [1], [1], [2], [0, 0, 0, 1, 1, 2], [0], [0]>} : vector<2x16x8xf32>, vector<2x8x8xf32>, vector<2x16x8xf32> -> vector<2x16x8xf32>
    "tpu.trace_stop"() : () -> ()
    %50 = vector.extract_strided_slice %7 {offsets = [0, 0, 16], sizes = [2, 16, 8], strides = [1, 1, 1]} : vector<2x16x32xf32> to vector<2x16x8xf32>
    %51 = vector.extract_strided_slice %18 {offsets = [0, 0, 16], sizes = [2, 8, 8], strides = [1, 1, 1]} : vector<2x8x32xf32> to vector<2x8x8xf32>
    %52 = vector.extract_strided_slice %19 {offsets = [0, 0, 16], sizes = [2, 8, 8], strides = [1, 1, 1]} : vector<2x8x32xf32> to vector<2x8x8xf32>
    "tpu.trace_start"() <{level = 10 : i32, message = "bnd,bpd->bnp"}> : () -> ()
    %cst_19 = arith.constant dense<0.000000e+00> : vector<2x16x8xf32>
    %53 = tpu.matmul %50, %51, %cst_19 {dimension_numbers = #tpu.dot_dimension_numbers<[2], [2], [1], [1], [0, 0, 0, 1, 1, 1], [0], [0]>} : vector<2x16x8xf32>, vector<2x8x8xf32>, vector<2x16x8xf32> -> vector<2x16x8xf32>
    "tpu.trace_stop"() : () -> ()
    %cst_20 = arith.constant dense<0xFF800000> : vector<2x16xf32>
    %54 = vector.multi_reduction <maximumf>, %53, %cst_20 [2] : vector<2x16x8xf32> to vector<2x16xf32>
    %55 = vector.shape_cast %54 : vector<2x16xf32> to vector<2x16x1xf32>
    %56 = vector.broadcast %55 : vector<2x16x1xf32> to vector<2x16x8xf32>
    %57 = arith.subf %53, %56 : vector<2x16x8xf32>
    %58 = math.exp %57 : vector<2x16x8xf32>
    %cst_21 = arith.constant dense<0.000000e+00> : vector<2x16xf32>
    %59 = vector.multi_reduction <add>, %58, %cst_21 [2] : vector<2x16x8xf32> to vector<2x16xf32>
    %60 = vector.shape_cast %59 : vector<2x16xf32> to vector<2x16x1xf32>
    %61 = tpu.reciprocal %60 {approx = true} : vector<2x16x1xf32> -> vector<2x16x1xf32>
    %62 = vector.broadcast %61 : vector<2x16x1xf32> to vector<2x16x8xf32>
    %63 = arith.mulf %58, %62 : vector<2x16x8xf32>
    "tpu.trace_start"() <{level = 10 : i32, message = "bnp,bpd->bnd"}> : () -> ()
    %cst_22 = arith.constant dense<0.000000e+00> : vector<2x16x8xf32>
    %64 = tpu.matmul %63, %52, %cst_22 {dimension_numbers = #tpu.dot_dimension_numbers<[2], [1], [1], [2], [0, 0, 0, 1, 1, 2], [0], [0]>} : vector<2x16x8xf32>, vector<2x8x8xf32>, vector<2x16x8xf32> -> vector<2x16x8xf32>
    "tpu.trace_stop"() : () -> ()
    %65 = vector.extract_strided_slice %7 {offsets = [0, 0, 24], sizes = [2, 16, 8], strides = [1, 1, 1]} : vector<2x16x32xf32> to vector<2x16x8xf32>
    %66 = vector.extract_strided_slice %18 {offsets = [0, 0, 24], sizes = [2, 8, 8], strides = [1, 1, 1]} : vector<2x8x32xf32> to vector<2x8x8xf32>
    %67 = vector.extract_strided_slice %19 {offsets = [0, 0, 24], sizes = [2, 8, 8], strides = [1, 1, 1]} : vector<2x8x32xf32> to vector<2x8x8xf32>
    "tpu.trace_start"() <{level = 10 : i32, message = "bnd,bpd->bnp"}> : () -> ()
    %cst_23 = arith.constant dense<0.000000e+00> : vector<2x16x8xf32>
    %68 = tpu.matmul %65, %66, %cst_23 {dimension_numbers = #tpu.dot_dimension_numbers<[2], [2], [1], [1], [0, 0, 0, 1, 1, 1], [0], [0]>} : vector<2x16x8xf32>, vector<2x8x8xf32>, vector<2x16x8xf32> -> vector<2x16x8xf32>
    "tpu.trace_stop"() : () -> ()
    %cst_24 = arith.constant dense<0xFF800000> : vector<2x16xf32>
    %69 = vector.multi_reduction <maximumf>, %68, %cst_24 [2] : vector<2x16x8xf32> to vector<2x16xf32>
    %70 = vector.shape_cast %69 : vector<2x16xf32> to vector<2x16x1xf32>
    %71 = vector.broadcast %70 : vector<2x16x1xf32> to vector<2x16x8xf32>
    %72 = arith.subf %68, %71 : vector<2x16x8xf32>
    %73 = math.exp %72 : vector<2x16x8xf32>
    %cst_25 = arith.constant dense<0.000000e+00> : vector<2x16xf32>
    %74 = vector.multi_reduction <add>, %73, %cst_25 [2] : vector<2x16x8xf32> to vector<2x16xf32>
    %75 = vector.shape_cast %74 : vector<2x16xf32> to vector<2x16x1xf32>
    %76 = tpu.reciprocal %75 {approx = true} : vector<2x16x1xf32> -> vector<2x16x1xf32>
    %77 = vector.broadcast %76 : vector<2x16x1xf32> to vector<2x16x8xf32>
    %78 = arith.mulf %73, %77 : vector<2x16x8xf32>
    "tpu.trace_start"() <{level = 10 : i32, message = "bnp,bpd->bnd"}> : () -> ()
    %cst_26 = arith.constant dense<0.000000e+00> : vector<2x16x8xf32>
    %79 = tpu.matmul %78, %67, %cst_26 {dimension_numbers = #tpu.dot_dimension_numbers<[2], [1], [1], [2], [0, 0, 0, 1, 1, 2], [0], [0]>} : vector<2x16x8xf32>, vector<2x8x8xf32>, vector<2x16x8xf32> -> vector<2x16x8xf32>
    "tpu.trace_stop"() : () -> ()
    %80 = tpu.concatenate %34, %49, %64, %79 in 2 : vector<2x16x8xf32>, vector<2x16x8xf32>, vector<2x16x8xf32>, vector<2x16x8xf32> -> vector<2x16x32xf32>
    %81 = vector.shape_cast %80 : vector<2x16x32xf32> to vector<32x32xf32>
    %c0_27 = arith.constant 0 : index
    %c0_28 = arith.constant 0 : index
    %82 = vector.load %arg6[%c0_27, %c0_28] : memref<32x32xf32, #tpu.memory_space<vmem>>, vector<32x32xf32>
    tpu.vector_store %arg6[%c0_27, %c0_28], %81 {strides = array<i32>} : memref<32x32xf32, #tpu.memory_space<vmem>>, vector<32x32xf32>,
    return
  }
  func.func @transform_0(%arg0: i32) -> (i32, i32) {
    %c0_i32 = arith.constant 0 : i32
    %c0_i32_0 = arith.constant 0 : i32
    return %arg0, %c0_i32 : i32, i32
  }
  func.func @transform_1(%arg0: i32) -> (i32, i32) {
    %c0_i32 = arith.constant 0 : i32
    %c0_i32_0 = arith.constant 0 : i32
    %c0_i32_1 = arith.constant 0 : i32
    return %c0_i32, %c0_i32_0 : i32, i32
  }
  func.func @transform_2(%arg0: i32) -> (i32, i32) {
    %c0_i32 = arith.constant 0 : i32
    %c0_i32_0 = arith.constant 0 : i32
    %c0_i32_1 = arith.constant 0 : i32
    return %c0_i32, %c0_i32_0 : i32, i32
  }
  func.func @transform_3(%arg0: i32) -> (i32, i32) {
    %c0_i32 = arith.constant 0 : i32
    %c0_i32_0 = arith.constant 0 : i32
    %c0_i32_1 = arith.constant 0 : i32
    return %c0_i32, %c0_i32_0 : i32, i32
  }
  func.func @transform_4(%arg0: i32) -> (i32, i32) {
    %c0_i32 = arith.constant 0 : i32
    %c0_i32_0 = arith.constant 0 : i32
    %c0_i32_1 = arith.constant 0 : i32
    return %c0_i32, %c0_i32_0 : i32, i32
  }
  func.func @transform_5(%arg0: i32) -> (i32, i32) {
    %c0_i32 = arith.constant 0 : i32
    %c0_i32_0 = arith.constant 0 : i32
    return %arg0, %c0_i32 : i32, i32
  }
}

module attributes {stable_mosaic.version = 11 : i64} {
  func.func @_linformer_kernel(%arg0: i32, %arg1: memref<32x32xf32, #tpu.memory_space<vmem>>, %arg2: memref<32x96xf32, #tpu.memory_space<vmem>>, %arg3: memref<1x96xf32, #tpu.memory_space<vmem>>, %arg4: memref<8x16xf32, #tpu.memory_space<vmem>>, %arg5: memref<8x16xf32, #tpu.memory_space<vmem>>, %arg6: memref<32x32xf32, #tpu.memory_space<vmem>>) attributes {dimension_semantics = [#tpu.dimension_semantics<parallel>], iteration_bounds = array<i64: 1>, scalar_prefetch = 0 : i64, scratch_operands = 0 : i64, tpu.core_type = #tpu.core_type<tc>, window_params = [{transform_indices = @transform_0, window_bounds = array<i64: 32, 32>}, {pipeline_mode = #tpu.pipeline_mode<synchronous>, transform_indices = @transform_1, window_bounds = array<i64: 32, 96>}, {pipeline_mode = #tpu.pipeline_mode<synchronous>, transform_indices = @transform_2, window_bounds = array<i64: 1, 96>}, {pipeline_mode = #tpu.pipeline_mode<synchronous>, transform_indices = @transform_3, window_bounds = array<i64: 8, 16>}, {pipeline_mode = #tpu.pipeline_mode<synchronous>, transform_indices = @transform_4, window_bounds = array<i64: 8, 16>}, {transform_indices = @transform_5, window_bounds = array<i64: 32, 32>}]} {
    %c0 = arith.constant 0 : index
    %c0_0 = arith.constant 0 : index
    %0 = vector.load %arg1[%c0, %c0_0] : memref<32x32xf32, #tpu.memory_space<vmem>>, vector<32x32xf32>
    %c0_1 = arith.constant 0 : index
    %c0_2 = arith.constant 0 : index
    %1 = vector.load %arg2[%c0_1, %c0_2] : memref<32x96xf32, #tpu.memory_space<vmem>>, vector<32x96xf32>
    %cst = arith.constant dense<0.000000e+00> : vector<32x96xf32>
    %2 = tpu.matmul %0, %1, %cst {dimension_numbers = #tpu.dot_dimension_numbers<[1], [0], [0], [1], [0, 0, 1, 1], [], []>} : vector<32x32xf32>, vector<32x96xf32>, vector<32x96xf32> -> vector<32x96xf32>
    %c0_3 = arith.constant 0 : index
    %c0_4 = arith.constant 0 : index
    %3 = vector.load %arg3[%c0_3, %c0_4] : memref<1x96xf32, #tpu.memory_space<vmem>>, vector<1x96xf32>
    %4 = vector.broadcast %3 : vector<1x96xf32> to vector<32x96xf32>
    %5 = arith.addf %2, %4 : vector<32x96xf32>
    %6 = vector.extract_strided_slice %5 {offsets = [0, 0], sizes = [32, 32], strides = [1, 1]} : vector<32x96xf32> to vector<32x32xf32>
    %7 = vector.shape_cast %6 : vector<32x32xf32> to vector<2x16x32xf32>
    %8 = vector.extract_strided_slice %5 {offsets = [0, 32], sizes = [32, 32], strides = [1, 1]} : vector<32x96xf32> to vector<32x32xf32>
    %9 = vector.shape_cast %8 : vector<32x32xf32> to vector<2x16x32xf32>
    %10 = vector.extract_strided_slice %5 {offsets = [0, 64], sizes = [32, 32], strides = [1, 1]} : vector<32x96xf32> to vector<32x32xf32>
    %11 = vector.shape_cast %10 : vector<32x32xf32> to vector<2x16x32xf32>
    %c0_5 = arith.constant 0 : index
    %c0_6 = arith.constant 0 : index
    %12 = vector.load %arg4[%c0_5, %c0_6] : memref<8x16xf32, #tpu.memory_space<vmem>>, vector<8x16xf32>
    %13 = vector.shape_cast %12 : vector<8x16xf32> to vector<1x8x16xf32>
    %14 = vector.broadcast %13 : vector<1x8x16xf32> to vector<2x8x16xf32>
    %c0_7 = arith.constant 0 : index
    %c0_8 = arith.constant 0 : index
    %15 = vector.load %arg5[%c0_7, %c0_8] : memref<8x16xf32, #tpu.memory_space<vmem>>, vector<8x16xf32>
    %16 = vector.shape_cast %15 : vector<8x16xf32> to vector<1x8x16xf32>
    %17 = vector.broadcast %16 : vector<1x8x16xf32> to vector<2x8x16xf32>
    "tpu.trace_start"() <{level = 10 : i32, message = "bps,bsd->bpd"}> : () -> ()
    %cst_9 = arith.constant dense<0.000000e+00> : vector<2x8x32xf32>
    %18 = tpu.matmul %14, %9, %cst_9 {dimension_numbers = #tpu.dot_dimension_numbers<[2], [1], [1], [2], [0, 0, 0, 1, 1, 2], [0], [0]>} : vector<2x8x16xf32>, vector<2x16x32xf32>, vector<2x8x32xf32> -> vector<2x8x32xf32>
    %cst_10 = arith.constant dense<0.000000e+00> : vector<2x8x32xf32>
    %19 = tpu.matmul %17, %11, %cst_10 {dimension_numbers = #tpu.dot_dimension_numbers<[2], [1], [1], [2], [0, 0, 0, 1, 1, 2], [0], [0]>} : vector<2x8x16xf32>, vector<2x16x32xf32>, vector<2x8x32xf32> -> vector<2x8x32xf32>
    "tpu.trace_stop"() : () -> ()
    %20 = vector.extract_strided_slice %7 {offsets = [0, 0, 0], sizes = [2, 16, 8], strides = [1, 1, 1]} : vector<2x16x32xf32> to vector<2x16x8xf32>
    %21 = vector.extract_strided_slice %18 {offsets = [0, 0, 0], sizes = [2, 8, 8], strides = [1, 1, 1]} : vector<2x8x32xf32> to vector<2x8x8xf32>
    %22 = vector.extract_strided_slice %19 {offsets = [0, 0, 0], sizes = [2, 8, 8], strides = [1, 1, 1]} : vector<2x8x32xf32> to vector<2x8x8xf32>
    "tpu.trace_start"() <{level = 10 : i32, message = "bnd,bpd->bnp"}> : () -> ()
    %cst_11 = arith.constant dense<0.000000e+00> : vector<2x16x8xf32>
    %23 = tpu.matmul %20, %21, %cst_11 {dimension_numbers = #tpu.dot_dimension_numbers<[2], [2], [1], [1], [0, 0, 0, 1, 1, 1], [0], [0]>} : vector<2x16x8xf32>, vector<2x8x8xf32>, vector<2x16x8xf32> -> vector<2x16x8xf32>
    "tpu.trace_stop"() : () -> ()
    %cst_12 = arith.constant dense<0xFF800000> : vector<2x16xf32>
    %24 = vector.multi_reduction <maximumf>, %23, %cst_12 [2] : vector<2x16x8xf32> to vector<2x16xf32>
    %25 = vector.shape_cast %24 : vector<2x16xf32> to vector<2x16x1xf32>
    %26 = vector.broadcast %25 : vector<2x16x1xf32> to vector<2x16x8xf32>
    %27 = arith.subf %23, %26 : vector<2x16x8xf32>
    %28 = math.exp %27 : vector<2x16x8xf32>
    %cst_13 = arith.constant dense<0.000000e+00> : vector<2x16xf32>
    %29 = vector.multi_reduction <add>, %28, %cst_13 [2] : vector<2x16x8xf32> to vector<2x16xf32>
    %30 = vector.shape_cast %29 : vector<2x16xf32> to vector<2x16x1xf32>
    %31 = tpu.reciprocal %30 {approx = true} : vector<2x16x1xf32> -> vector<2x16x1xf32>
    %32 = vector.broadcast %31 : vector<2x16x1xf32> to vector<2x16x8xf32>
    %33 = arith.mulf %28, %32 : vector<2x16x8xf32>
    "tpu.trace_start"() <{level = 10 : i32, message = "bnp,bpd->bnd"}> : () -> ()
    %cst_14 = arith.constant dense<0.000000e+00> : vector<2x16x8xf32>
    %34 = tpu.matmul %33, %22, %cst_14 {dimension_numbers = #tpu.dot_dimension_numbers<[2], [1], [1], [2], [0, 0, 0, 1, 1, 2], [0], [0]>} : vector<2x16x8xf32>, vector<2x8x8xf32>, vector<2x16x8xf32> -> vector<2x16x8xf32>
    "tpu.trace_stop"() : () -> ()
    %35 = vector.extract_strided_slice %7 {offsets = [0, 0, 8], sizes = [2, 16, 8], strides = [1, 1, 1]} : vector<2x16x32xf32> to vector<2x16x8xf32>
    %36 = vector.extract_strided_slice %18 {offsets = [0, 0, 8], sizes = [2, 8, 8], strides = [1, 1, 1]} : vector<2x8x32xf32> to vector<2x8x8xf32>
    %37 = vector.extract_strided_slice %19 {offsets = [0, 0, 8], sizes = [2, 8, 8], strides = [1, 1, 1]} : vector<2x8x32xf32> to vector<2x8x8xf32>
    "tpu.trace_start"() <{level = 10 : i32, message = "bnd,bpd->bnp"}> : () -> ()
    %cst_15 = arith.constant dense<0.000000e+00> : vector<2x16x8xf32>
    %38 = tpu.matmul %35, %36, %cst_15 {dimension_numbers = #tpu.dot_dimension_numbers<[2], [2], [1], [1], [0, 0, 0, 1, 1, 1], [0], [0]>} : vector<2x16x8xf32>, vector<2x8x8xf32>, vector<2x16x8xf32> -> vector<2x16x8xf32>
    "tpu.trace_stop"() : () -> ()
    %cst_16 = arith.constant dense<0xFF800000> : vector<2x16xf32>
    %39 = vector.multi_reduction <maximumf>, %38, %cst_16 [2] : vector<2x16x8xf32> to vector<2x16xf32>
    %40 = vector.shape_cast %39 : vector<2x16xf32> to vector<2x16x1xf32>
    %41 = vector.broadcast %40 : vector<2x16x1xf32> to vector<2x16x8xf32>
    %42 = arith.subf %38, %41 : vector<2x16x8xf32>
    %43 = math.exp %42 : vector<2x16x8xf32>
    %cst_17 = arith.constant dense<0.000000e+00> : vector<2x16xf32>
    %44 = vector.multi_reduction <add>, %43, %cst_17 [2] : vector<2x16x8xf32> to vector<2x16xf32>
    %45 = vector.shape_cast %44 : vector<2x16xf32> to vector<2x16x1xf32>
    %46 = tpu.reciprocal %45 {approx = true} : vector<2x16x1xf32> -> vector<2x16x1xf32>
    %47 = vector.broadcast %46 : vector<2x16x1xf32> to vector<2x16x8xf32>
    %48 = arith.mulf %43, %47 : vector<2x16x8xf32>
    "tpu.trace_start"() <{level = 10 : i32, message = "bnp,bpd->bnd"}> : () -> ()
    %cst_18 = arith.constant dense<0.000000e+00> : vector<2x16x8xf32>
    %49 = tpu.matmul %48, %37, %cst_18 {dimension_numbers = #tpu.dot_dimension_numbers<[2], [1], [1], [2], [0, 0, 0, 1, 1, 2], [0], [0]>} : vector<2x16x8xf32>, vector<2x8x8xf32>, vector<2x16x8xf32> -> vector<2x16x8xf32>
    "tpu.trace_stop"() : () -> ()
    %50 = vector.extract_strided_slice %7 {offsets = [0, 0, 16], sizes = [2, 16, 8], strides = [1, 1, 1]} : vector<2x16x32xf32> to vector<2x16x8xf32>
    %51 = vector.extract_strided_slice %18 {offsets = [0, 0, 16], sizes = [2, 8, 8], strides = [1, 1, 1]} : vector<2x8x32xf32> to vector<2x8x8xf32>
    %52 = vector.extract_strided_slice %19 {offsets = [0, 0, 16], sizes = [2, 8, 8], strides = [1, 1, 1]} : vector<2x8x32xf32> to vector<2x8x8xf32>
    "tpu.trace_start"() <{level = 10 : i32, message = "bnd,bpd->bnp"}> : () -> ()
    %cst_19 = arith.constant dense<0.000000e+00> : vector<2x16x8xf32>
    %53 = tpu.matmul %50, %51, %cst_19 {dimension_numbers = #tpu.dot_dimension_numbers<[2], [2], [1], [1], [0, 0, 0, 1, 1, 1], [0], [0]>} : vector<2x16x8xf32>, vector<2x8x8xf32>, vector<2x16x8xf32> -> vector<2x16x8xf32>
    "tpu.trace_stop"() : () -> ()
    %cst_20 = arith.constant dense<0xFF800000> : vector<2x16xf32>
    %54 = vector.multi_reduction <maximumf>, %53, %cst_20 [2] : vector<2x16x8xf32> to vector<2x16xf32>
    %55 = vector.shape_cast %54 : vector<2x16xf32> to vector<2x16x1xf32>
    %56 = vector.broadcast %55 : vector<2x16x1xf32> to vector<2x16x8xf32>
    %57 = arith.subf %53, %56 : vector<2x16x8xf32>
    %58 = math.exp %57 : vector<2x16x8xf32>
    %cst_21 = arith.constant dense<0.000000e+00> : vector<2x16xf32>
    %59 = vector.multi_reduction <add>, %58, %cst_21 [2] : vector<2x16x8xf32> to vector<2x16xf32>
    %60 = vector.shape_cast %59 : vector<2x16xf32> to vector<2x16x1xf32>
    %61 = tpu.reciprocal %60 {approx = true} : vector<2x16x1xf32> -> vector<2x16x1xf32>
    %62 = vector.broadcast %61 : vector<2x16x1xf32> to vector<2x16x8xf32>
    %63 = arith.mulf %58, %62 : vector<2x16x8xf32>
    "tpu.trace_start"() <{level = 10 : i32, message = "bnp,bpd->bnd"}> : () -> ()
    %cst_22 = arith.constant dense<0.000000e+00> : vector<2x16x8xf32>
    %64 = tpu.matmul %63, %52, %cst_22 {dimension_numbers = #tpu.dot_dimension_numbers<[2], [1], [1], [2], [0, 0, 0, 1, 1, 2], [0], [0]>} : vector<2x16x8xf32>, vector<2x8x8xf32>, vector<2x16x8xf32> -> vector<2x16x8xf32>
    "tpu.trace_stop"() : () -> ()
    %65 = vector.extract_strided_slice %7 {offsets = [0, 0, 24], sizes = [2, 16, 8], strides = [1, 1, 1]} : vector<2x16x32xf32> to vector<2x16x8xf32>
    %66 = vector.extract_strided_slice %18 {offsets = [0, 0, 24], sizes = [2, 8, 8], strides = [1, 1, 1]} : vector<2x8x32xf32> to vector<2x8x8xf32>
    %67 = vector.extract_strided_slice %19 {offsets = [0, 0, 24], sizes = [2, 8, 8], strides = [1, 1, 1]} : vector<2x8x32xf32> to vector<2x8x8xf32>
    "tpu.trace_start"() <{level = 10 : i32, message = "bnd,bpd->bnp"}> : () -> ()
    %cst_23 = arith.constant dense<0.000000e+00> : vector<2x16x8xf32>
    %68 = tpu.matmul %65, %66, %cst_23 {dimension_numbers = #tpu.dot_dimension_numbers<[2], [2], [1], [1], [0, 0, 0, 1, 1, 1], [0], [0]>} : vector<2x16x8xf32>, vector<2x8x8xf32>, vector<2x16x8xf32> -> vector<2x16x8xf32>
    "tpu.trace_stop"() : () -> ()
    %cst_24 = arith.constant dense<0xFF800000> : vector<2x16xf32>
    %69 = vector.multi_reduction <maximumf>, %68, %cst_24 [2] : vector<2x16x8xf32> to vector<2x16xf32>
    %70 = vector.shape_cast %69 : vector<2x16xf32> to vector<2x16x1xf32>
    %71 = vector.broadcast %70 : vector<2x16x1xf32> to vector<2x16x8xf32>
    %72 = arith.subf %68, %71 : vector<2x16x8xf32>
    %73 = math.exp %72 : vector<2x16x8xf32>
    %cst_25 = arith.constant dense<0.000000e+00> : vector<2x16xf32>
    %74 = vector.multi_reduction <add>, %73, %cst_25 [2] : vector<2x16x8xf32> to vector<2x16xf32>
    %75 = vector.shape_cast %74 : vector<2x16xf32> to vector<2x16x1xf32>
    %76 = tpu.reciprocal %75 {approx = true} : vector<2x16x1xf32> -> vector<2x16x1xf32>
    %77 = vector.broadcast %76 : vector<2x16x1xf32> to vector<2x16x8xf32>
    %78 = arith.mulf %73, %77 : vector<2x16x8xf32>
    "tpu.trace_start"() <{level = 10 : i32, message = "bnp,bpd->bnd"}> : () -> ()
    %cst_26 = arith.constant dense<0.000000e+00> : vector<2x16x8xf32>
    %79 = tpu.matmul %78, %67, %cst_26 {dimension_numbers = #tpu.dot_dimension_numbers<[2], [1], [1], [2], [0, 0, 0, 1, 1, 2], [0], [0]>} : vector<2x16x8xf32>, vector<2x8x8xf32>, vector<2x16x8xf32> -> vector<2x16x8xf32>
    "tpu.trace_stop"() : () -> ()
    %80 = tpu.concatenate %34, %49, %64, %79 in 2 : vector<2x16x8xf32>, vector<2x16x8xf32>, vector<2x16x8xf32>, vector<2x16x8xf32> -> vector<2x16x32xf32>
    %81 = vector.shape_cast %80 : vector<2x16x32xf32> to vector<32x32xf32>
    %c0_27 = arith.constant 0 : index
    %c0_28 = arith.constant 0 : index
    %82 = vector.load %arg6[%c0_27, %c0_28] : memref<32x32xf32, #tpu.memory_space<vmem>>, vector<32x32xf32>
    tpu.vector_store %arg6[%c0_27, %c0_28], %81 {strides = array<i32>} : memref<32x32xf32, #tpu.memory_space<vmem>>, vector<32x32xf32>,
    return
  }
  func.func @transform_0(%arg0: i32) -> (i32, i32) {
    %c0_i32 = arith.constant 0 : i32
    %c0_i32_0 = arith.constant 0 : i32
    return %arg0, %c0_i32 : i32, i32
  }
  func.func @transform_1(%arg0: i32) -> (i32, i32) {
    %c0_i32 = arith.constant 0 : i32
    %c0_i32_0 = arith.constant 0 : i32
    %c0_i32_1 = arith.constant 0 : i32
    return %c0_i32, %c0_i32_0 : i32, i32
  }
  func.func @transform_2(%arg0: i32) -> (i32, i32) {
    %c0_i32 = arith.constant 0 : i32
    %c0_i32_0 = arith.constant 0 : i32
    %c0_i32_1 = arith.constant 0 : i32
    return %c0_i32, %c0_i32_0 : i32, i32
  }
  func.func @transform_3(%arg0: i32) -> (i32, i32) {
    %c0_i32 = arith.constant 0 : i32
    %c0_i32_0 = arith.constant 0 : i32
    %c0_i32_1 = arith.constant 0 : i32
    return %c0_i32, %c0_i32_0 : i32, i32
  }
  func.func @transform_4(%arg0: i32) -> (i32, i32) {
    %c0_i32 = arith.constant 0 : i32
    %c0_i32_0 = arith.constant 0 : i32
    %c0_i32_1 = arith.constant 0 : i32
    return %c0_i32, %c0_i32_0 : i32, i32
  }
  func.func @transform_5(%arg0: i32) -> (i32, i32) {
    %c0_i32 = arith.constant 0 : i32
    %c0_i32_0 = arith.constant 0 : i32
    return %arg0, %c0_i32 : i32, i32
  }
}

</mosaic_0001>

<llo_original>
// kernel: tpu_custom_call.1
$region0: #{tpu_custom_call.1}
  #allocation0 [shape = 'u32[]', space=smem, size = 0x4, offset = 0x4, fixed_abs, tag = 'smem constant byte address 0x4 - core index']
  #allocation1 [shape = 'u32[144,128]{1,0:T(1,128)}', space=vmem, size = 0x12000, scoped, tag = 'internal scratch']
  %s0 = inlined_call_operand.hbm [shape: f32[32,32], index: 0, kind: input, shape index: {}]
  %s1 = inlined_call_operand.hbm [shape: f32[32,96], index: 1, kind: input, shape index: {}]
  %s2 = inlined_call_operand.vmem [shape: f32[1,96], index: 2, kind: input, shape index: {}]
  %s3 = inlined_call_operand.hbm [shape: f32[8,16], index: 3, kind: input, shape index: {}]
  %s4 = inlined_call_operand.hbm [shape: f32[8,16], index: 4, kind: input, shape index: {}]
  %s5 = inlined_call_operand.hbm [shape: f32[32,32], index: 5, kind: output, shape index: {}]
  %s6 = sld [smem:[#allocation0]]
  $region46: #{tpu_custom_call.1} parent=0
    _
  %s8 = ssub.s32 1, %s6
  %s9 = scalar_select 0, %s8, %s6
  $region1: #{tpu_custom_call.1} parent=0
    #allocation2 [shape = 'u8[16384]{0}', space=vmem, size = 0x4000, scoped, tag = 'input window, operand 0, single buffered']
    #allocation3 [shape = 's32[1]{0}', space=sflag, size = 0x4, scoped, tag = 'scoped memory for tpu_custom_call.1']
    #allocation4 [shape = 's32[1]{0}', space=sflag, size = 0x4, scoped, tag = 'scoped memory for tpu_custom_call.1']
    #allocation5 [shape = 'u8[16384]{0}', space=vmem, size = 0x4000, scoped, tag = 'input window, operand 1, single buffered']
    #allocation6 [shape = 's32[1]{0}', space=sflag, size = 0x4, scoped, tag = 'scoped memory for tpu_custom_call.1']
    #allocation7 [shape = 'u8[4096]{0}', space=vmem, size = 0x1000, scoped, tag = 'input window, operand 3, single buffered']
    #allocation8 [shape = 'u8[4096]{0}', space=vmem, size = 0x1000, scoped, tag = 'input window, operand 4, single buffered']
    #allocation9 [shape = 's32[1]{0}', space=sflag, size = 0x4, scoped, tag = 'scoped memory for tpu_custom_call.1']
    #allocation10 [shape = 'u8[16384]{0}', space=vmem, size = 0x4000, scoped, tag = 'output window, operand 0, single buffered']
    %10 = vsyncpa [#allocation3], 0
    %11 = vsyncpa [#allocation6], 0
    %12 = vsyncpa [#allocation9], 0
    %13 = vsyncpa [#allocation4], 0
    // Predicated region
    $region2: #{tpu_custom_call.1} parent=1 // pred_check
      _
    $region3: #{tpu_custom_call.1} parent=1 // pred_check_branch
      %15 = sbr.rel (0) target = $region5
    $region4: #{tpu_custom_call.1} parent=1 // pred_region
      %s17 = ssub.s32 512, 512
      %18 = vsyncadd [#allocation3], %s17
      %s19 = sshll.u32 [#allocation2], 4
      %s20 = int_to_ptr.vmem [resolvable:$true] %s19
      %25 = dma.hbm_to_vmem [thread:$0]  %s0, 512, %s20, [#allocation3], 128, 128, 8
    $region5: #{tpu_custom_call.1} parent=1 // pred_fallthru
      _
    // Predicated region
    $region6: #{tpu_custom_call.1} parent=1 // pred_check
      _
    $region7: #{tpu_custom_call.1} parent=1 // pred_check_branch
      %27 = sbr.rel (0) target = $region9
    $region8: #{tpu_custom_call.1} parent=1 // pred_region
      %s29 = ssub.s32 512, 512
      %30 = vsyncadd [#allocation6], %s29
      %s31 = sshll.u32 [#allocation5], 4
      %s32 = int_to_ptr.vmem [resolvable:$true] %s31
      %37 = dma.hbm_to_vmem [thread:$0]  %s1, 512, %s32, [#allocation6], 128, 128, 8
    $region9: #{tpu_custom_call.1} parent=1 // pred_fallthru
      _
    // Predicated region
    $region10: #{tpu_custom_call.1} parent=1 // pred_check
      _
    $region11: #{tpu_custom_call.1} parent=1 // pred_check_branch
      %39 = sbr.rel (0) target = $region13
    $region12: #{tpu_custom_call.1} parent=1 // pred_region
      _
    $region13: #{tpu_custom_call.1} parent=1 // pred_fallthru
      _
    // Predicated region
    $region14: #{tpu_custom_call.1} parent=1 // pred_check
      _
    $region15: #{tpu_custom_call.1} parent=1 // pred_check_branch
      %41 = sbr.rel (0) target = $region17
    $region16: #{tpu_custom_call.1} parent=1 // pred_region
      %s43 = ssub.s32 128, 128
      %44 = vsyncadd [#allocation6], %s43
      %s46 = sshll.u32 [#allocation7], 4
      %s47 = int_to_ptr.vmem [resolvable:$true] %s46
      %49 = dma.hbm_to_vmem [thread:$0]  %s3, 128, %s47, [#allocation6]
    $region17: #{tpu_custom_call.1} parent=1 // pred_fallthru
      _
    // Predicated region
    $region18: #{tpu_custom_call.1} parent=1 // pred_check
      _
    $region19: #{tpu_custom_call.1} parent=1 // pred_check_branch
      %51 = sbr.rel (0) target = $region21
    $region20: #{tpu_custom_call.1} parent=1 // pred_region
      %s53 = ssub.s32 128, 128
      %54 = vsyncadd [#allocation9], %s53
      %s56 = sshll.u32 [#allocation8], 4
      %s57 = int_to_ptr.vmem [resolvable:$true] %s56
      %59 = dma.hbm_to_vmem [thread:$0]  %s4, 128, %s57, [#allocation9]
    $region21: #{tpu_custom_call.1} parent=1 // pred_fallthru
      _
    // Predicated region
    $region22: #{tpu_custom_call.1} parent=1 // pred_check
      _
    $region23: #{tpu_custom_call.1} parent=1 // pred_check_branch
      %61 = sbr.rel (0) target = $region25
    $region24: #{tpu_custom_call.1} parent=1 // pred_region
      %62 = dma.done [#allocation3], 512
    $region25: #{tpu_custom_call.1} parent=1 // pred_fallthru
      _
    // Predicated region
    $region26: #{tpu_custom_call.1} parent=1 // pred_check
      _
    $region27: #{tpu_custom_call.1} parent=1 // pred_check_branch
      %64 = sbr.rel (0) target = $region29
    $region28: #{tpu_custom_call.1} parent=1 // pred_region
      %65 = dma.done [#allocation6], 512
    $region29: #{tpu_custom_call.1} parent=1 // pred_fallthru
      _
    // Predicated region
    $region30: #{tpu_custom_call.1} parent=1 // pred_check
      _
    $region31: #{tpu_custom_call.1} parent=1 // pred_check_branch
      %67 = sbr.rel (0) target = $region33
    $region32: #{tpu_custom_call.1} parent=1 // pred_region
      %68 = dma.done [#allocation6], 128
    $region33: #{tpu_custom_call.1} parent=1 // pred_fallthru
      _
    // Predicated region
    $region34: #{tpu_custom_call.1} parent=1 // pred_check
      _
    $region35: #{tpu_custom_call.1} parent=1 // pred_check_branch
      %70 = sbr.rel (0) target = $region37
    $region36: #{tpu_custom_call.1} parent=1 // pred_region
      %71 = dma.done [#allocation9], 128
    $region37: #{tpu_custom_call.1} parent=1 // pred_fallthru
      _
    %v72 = vld [vmem:[#allocation2] sm:$0xff]
    %v73 = vld [vmem:[#allocation2 + $0x8] sm:$0xff]
    %v74 = vld [vmem:[#allocation2 + $0x10] sm:$0xff]
    %v75 = vld [vmem:[#allocation2 + $0x18] sm:$0xff]
    %v76 = vld [vmem:[#allocation5] sm:$0xff]
    %v77 = vld [vmem:[#allocation5 + $0x8] sm:$0xff]
    %v78 = vld [vmem:[#allocation5 + $0x10] sm:$0xff]
    %v79 = vld [vmem:[#allocation5 + $0x18] sm:$0xff]
    %v80 = vld [vmem:[%s2] sm:$0x1]
    %v82 = vlaneseq
    %v83 = vshrl.u32 %v82, 7
    %v84 = vsub.s32 0, %v83
    %v85 = vrot.slane %v80, %v84
    %vm87 = vcmask 261120
    %v89 = vsel %vm87, %v72, 0
    %v92 = vsel %vm87, %v73, 0
    %v95 = vsel %vm87, %v74, 0
    %v98 = vsel %vm87, %v75, 0
    %100 = vmatprep.subr.mxu0 0.0
    %101 = vmatpush1.msra.mxu0 0.0
    %102 = vmatprep.subr.mxu0 0.0
    %103 = vmatpush1.msra.mxu0 0.0
    %104 = vmatprep.subr.mxu0 0.0
    %105 = vmatpush1.msra.mxu0 0.0
    %106 = vmatprep.subr.mxu0 0.0
    %107 = vmatpush1.msra.mxu0 0.0
    %108 = vmatprep.subr.mxu0 0.0
    %109 = vmatpush1.msra.mxu0 0.0
    %110 = vmatprep.subr.mxu0 0.0
    %111 = vmatpush1.msra.mxu0 0.0
    %112 = vmatprep.subr.mxu0 0.0
    %113 = vmatpush1.msra.mxu0 0.0
    %114 = vmatprep.subr.mxu0 0.0
    %115 = vmatpush1.msra.mxu0 0.0
    %116 = vmatprep.subr.mxu0 0.0
    %117 = vmatpush1.msra.mxu0 0.0
    %118 = vmatprep.subr.mxu0 0.0
    %119 = vmatpush1.msra.mxu0 0.0
    %120 = vmatprep.subr.mxu0 0.0
    %121 = vmatpush1.msra.mxu0 0.0
    %122 = vmatprep.subr.mxu0 0.0
    %123 = vmatpush1.msra.mxu0 0.0
    %124 = vmatprep.subr.mxu0 0.0
    %125 = vmatpush1.msra.mxu0 %v79
    %126 = vmatprep.subr.mxu0 0.0
    %127 = vmatpush1.msra.mxu0 %v78
    %128 = vmatprep.subr.mxu0 0.0
    %129 = vmatpush1.msra.mxu0 %v77
    %130 = vmatprep.subr.mxu0 0.0
    %131 = vmatpush1.msra.mxu0 %v76
    %132 = vmatprep.subr.mxu0 0.0
    %133 = vmatpush2.msra.mxu0 0.0
    %134 = vmatprep.subr.mxu0 0.0
    %135 = vmatpush2.msra.mxu0 0.0
    %136 = vmatprep.subr.mxu0 0.0
    %137 = vmatpush2.msra.mxu0 0.0
    %138 = vmatprep.subr.mxu0 0.0
    %139 = vmatpush2.msra.mxu0 0.0
    %140 = vmatprep.subr.mxu0 0.0
    %141 = vmatpush2.msra.mxu0 0.0
    %142 = vmatprep.subr.mxu0 0.0
    %143 = vmatpush2.msra.mxu0 0.0
    %144 = vmatprep.subr.mxu0 0.0
    %145 = vmatpush2.msra.mxu0 0.0
    %146 = vmatprep.subr.mxu0 0.0
    %147 = vmatpush2.msra.mxu0 0.0
    %148 = vmatprep.subr.mxu0 0.0
    %149 = vmatpush2.msra.mxu0 0.0
    %150 = vmatprep.subr.mxu0 0.0
    %151 = vmatpush2.msra.mxu0 0.0
    %152 = vmatprep.subr.mxu0 0.0
    %153 = vmatpush2.msra.mxu0 0.0
    %154 = vmatprep.subr.mxu0 0.0
    %155 = vmatpush2.msra.mxu0 0.0
    %156 = vmatprep.subr.mxu0 0.0
    %157 = vmatpush2.msra.mxu0 0.0
    %158 = vmatprep.subr.mxu0 0.0
    %159 = vmatpush2.msra.mxu0 0.0
    %160 = vmatprep.subr.mxu0 0.0
    %161 = vmatpush2.msra.mxu0 0.0
    %162 = vmatprep.subr.mxu0 0.0
    %163 = vmatpush2.msra.mxu0 0.0
    %164 = vmatprep.mubr.f32.mxu0 0.0
    %165 = vmatmul.mubr.f32.gmra.mxu0 %v89
    %v166 = vpop.f32.mrf.mxu0
    %v167 = vadd.f32 %v85, %v166
    %v168 = vpop.f32.mrf.mxu0
    %169 = vmatprep.mubr.f32.mxu0 0.0
    %170 = vmatmul.mubr.f32.gmra.mxu0 %v92
    %v171 = vpop.f32.mrf.mxu0
    %v172 = vadd.f32 %v85, %v171
    %v173 = vpop.f32.mrf.mxu0
    %174 = vmatprep.mubr.f32.mxu0 0.0
    %175 = vmatmul.mubr.f32.gmra.mxu0 %v95
    %v176 = vpop.f32.mrf.mxu0
    %v177 = vadd.f32 %v85, %v176
    %v178 = vpop.f32.mrf.mxu0
    %179 = vmatprep.mubr.f32.mxu0 0.0
    %180 = vmatmul.mubr.f32.gmra.mxu0 %v98
    %v181 = vpop.f32.mrf.mxu0
    %v182 = vadd.f32 %v85, %v181
    %v183 = vpop.f32.mrf.mxu0
    %184 = vdwg.mxu0
    %v185 = vld [vmem:[#allocation7] sm:$0xff]
    %v186 = vld [vmem:[#allocation8] sm:$0xff]
    %189 = vrot.lane.b32.xlu0 %v167, 96
    %v190 = vpop.permute.xlu0 %189
    %191 = vrot.lane.b32.xlu0 %v172, 96
    %v192 = vpop.permute.xlu0 %191
    %vm195 = vcmask 130048
    %v197 = vsel %vm195, %v185, 0
    %199 = vmatprep.subr.mxu0 0.0
    %200 = vmatpush1.msra.mxu0 0.0
    %201 = vmatprep.subr.mxu0 0.0
    %202 = vmatpush1.msra.mxu0 0.0
    %203 = vmatprep.subr.mxu0 0.0
    %204 = vmatpush1.msra.mxu0 0.0
    %205 = vmatprep.subr.mxu0 0.0
    %206 = vmatpush1.msra.mxu0 0.0
    %207 = vmatprep.subr.mxu0 0.0
    %208 = vmatpush1.msra.mxu0 0.0
    %209 = vmatprep.subr.mxu0 0.0
    %210 = vmatpush1.msra.mxu0 0.0
    %211 = vmatprep.subr.mxu0 0.0
    %212 = vmatpush1.msra.mxu0 0.0
    %213 = vmatprep.subr.mxu0 0.0
    %214 = vmatpush1.msra.mxu0 0.0
    %215 = vmatprep.subr.mxu0 0.0
    %216 = vmatpush1.msra.mxu0 0.0
    %217 = vmatprep.subr.mxu0 0.0
    %218 = vmatpush1.msra.mxu0 0.0
    %219 = vmatprep.subr.mxu0 0.0
    %220 = vmatpush1.msra.mxu0 0.0
    %221 = vmatprep.subr.mxu0 0.0
    %222 = vmatpush1.msra.mxu0 0.0
    %223 = vmatprep.subr.mxu0 0.0
    %224 = vmatpush1.msra.mxu0 0.0
    %225 = vmatprep.subr.mxu0 0.0
    %226 = vmatpush1.msra.mxu0 0.0
    %227 = vmatprep.subr.mxu0 0.0
    %228 = vmatpush1.msra.mxu0 %v192
    %229 = vmatprep.subr.mxu0 0.0
    %230 = vmatpush1.msra.mxu0 %v190
    %231 = vmatprep.subr.mxu0 0.0
    %232 = vmatpush2.msra.mxu0 0.0
    %233 = vmatprep.subr.mxu0 0.0
    %234 = vmatpush2.msra.mxu0 0.0
    %235 = vmatprep.subr.mxu0 0.0
    %236 = vmatpush2.msra.mxu0 0.0
    %237 = vmatprep.subr.mxu0 0.0
    %238 = vmatpush2.msra.mxu0 0.0
    %239 = vmatprep.subr.mxu0 0.0
    %240 = vmatpush2.msra.mxu0 0.0
    %241 = vmatprep.subr.mxu0 0.0
    %242 = vmatpush2.msra.mxu0 0.0
    %243 = vmatprep.subr.mxu0 0.0
    %244 = vmatpush2.msra.mxu0 0.0
    %245 = vmatprep.subr.mxu0 0.0
    %246 = vmatpush2.msra.mxu0 0.0
    %247 = vmatprep.subr.mxu0 0.0
    %248 = vmatpush2.msra.mxu0 0.0
    %249 = vmatprep.subr.mxu0 0.0
    %250 = vmatpush2.msra.mxu0 0.0
    %251 = vmatprep.subr.mxu0 0.0
    %252 = vmatpush2.msra.mxu0 0.0
    %253 = vmatprep.subr.mxu0 0.0
    %254 = vmatpush2.msra.mxu0 0.0
    %255 = vmatprep.subr.mxu0 0.0
    %256 = vmatpush2.msra.mxu0 0.0
    %257 = vmatprep.subr.mxu0 0.0
    %258 = vmatpush2.msra.mxu0 0.0
    %259 = vmatprep.subr.mxu0 0.0
    %260 = vmatpush2.msra.mxu0 0.0
    %261 = vmatprep.subr.mxu0 0.0
    %262 = vmatpush2.msra.mxu0 0.0
    %263 = vmatprep.mubr.f32.mxu0 0.0
    %264 = vmatmul.mubr.f32.gmra.mxu0 %v197
    %v265 = vpop.f32.mrf.mxu0
    %v266 = vadd.f32 0.0, %v265
    %v267 = vpop.f32.mrf.mxu0
    %268 = vdwg.mxu0
    %271 = vrot.lane.b32.xlu0 %v177, 96
    %v272 = vpop.permute.xlu0 %271
    %273 = vrot.lane.b32.xlu0 %v182, 96
    %v274 = vpop.permute.xlu0 %273
    %277 = vmatprep.subr.mxu0 0.0
    %278 = vmatpush1.msra.mxu0 0.0
    %279 = vmatprep.subr.mxu0 0.0
    %280 = vmatpush1.msra.mxu0 0.0
    %281 = vmatprep.subr.mxu0 0.0
    %282 = vmatpush1.msra.mxu0 0.0
    %283 = vmatprep.subr.mxu0 0.0
    %284 = vmatpush1.msra.mxu0 0.0
    %285 = vmatprep.subr.mxu0 0.0
    %286 = vmatpush1.msra.mxu0 0.0
    %287 = vmatprep.subr.mxu0 0.0
    %288 = vmatpush1.msra.mxu0 0.0
    %289 = vmatprep.subr.mxu0 0.0
    %290 = vmatpush1.msra.mxu0 0.0
    %291 = vmatprep.subr.mxu0 0.0
    %292 = vmatpush1.msra.mxu0 0.0
    %293 = vmatprep.subr.mxu0 0.0
    %294 = vmatpush1.msra.mxu0 0.0
    %295 = vmatprep.subr.mxu0 0.0
    %296 = vmatpush1.msra.mxu0 0.0
    %297 = vmatprep.subr.mxu0 0.0
    %298 = vmatpush1.msra.mxu0 0.0
    %299 = vmatprep.subr.mxu0 0.0
    %300 = vmatpush1.msra.mxu0 0.0
    %301 = vmatprep.subr.mxu0 0.0
    %302 = vmatpush1.msra.mxu0 0.0
    %303 = vmatprep.subr.mxu0 0.0
    %304 = vmatpush1.msra.mxu0 0.0
    %305 = vmatprep.subr.mxu0 0.0
    %306 = vmatpush1.msra.mxu0 %v274
    %307 = vmatprep.subr.mxu0 0.0
    %308 = vmatpush1.msra.mxu0 %v272
    %309 = vmatprep.subr.mxu0 0.0
    %310 = vmatpush2.msra.mxu0 0.0
    %311 = vmatprep.subr.mxu0 0.0
    %312 = vmatpush2.msra.mxu0 0.0
    %313 = vmatprep.subr.mxu0 0.0
    %314 = vmatpush2.msra.mxu0 0.0
    %315 = vmatprep.subr.mxu0 0.0
    %316 = vmatpush2.msra.mxu0 0.0
    %317 = vmatprep.subr.mxu0 0.0
    %318 = vmatpush2.msra.mxu0 0.0
    %319 = vmatprep.subr.mxu0 0.0
    %320 = vmatpush2.msra.mxu0 0.0
    %321 = vmatprep.subr.mxu0 0.0
    %322 = vmatpush2.msra.mxu0 0.0
    %323 = vmatprep.subr.mxu0 0.0
    %324 = vmatpush2.msra.mxu0 0.0
    %325 = vmatprep.subr.mxu0 0.0
    %326 = vmatpush2.msra.mxu0 0.0
    %327 = vmatprep.subr.mxu0 0.0
    %328 = vmatpush2.msra.mxu0 0.0
    %329 = vmatprep.subr.mxu0 0.0
    %330 = vmatpush2.msra.mxu0 0.0
    %331 = vmatprep.subr.mxu0 0.0
    %332 = vmatpush2.msra.mxu0 0.0
    %333 = vmatprep.subr.mxu0 0.0
    %334 = vmatpush2.msra.mxu0 0.0
    %335 = vmatprep.subr.mxu0 0.0
    %336 = vmatpush2.msra.mxu0 0.0
    %337 = vmatprep.subr.mxu0 0.0
    %338 = vmatpush2.msra.mxu0 0.0
    %339 = vmatprep.subr.mxu0 0.0
    %340 = vmatpush2.msra.mxu0 0.0
    %341 = vmatprep.mubr.f32.mxu0 0.0
    %342 = vmatmul.mubr.f32.gmra.mxu0 %v197
    %v343 = vpop.f32.mrf.mxu0
    %v344 = vadd.f32 0.0, %v343
    %v345 = vpop.f32.mrf.mxu0
    %346 = vdwg.mxu0
    %347 = vrot.lane.b32.xlu0 %v167, 64
    %v348 = vpop.permute.xlu0 %347
    %349 = vrot.lane.b32.xlu0 %v172, 64
    %v350 = vpop.permute.xlu0 %349
    %v354 = vsel %vm195, %v186, 0
    %356 = vmatprep.subr.mxu0 0.0
    %357 = vmatpush1.msra.mxu0 0.0
    %358 = vmatprep.subr.mxu0 0.0
    %359 = vmatpush1.msra.mxu0 0.0
    %360 = vmatprep.subr.mxu0 0.0
    %361 = vmatpush1.msra.mxu0 0.0
    %362 = vmatprep.subr.mxu0 0.0
    %363 = vmatpush1.msra.mxu0 0.0
    %364 = vmatprep.subr.mxu0 0.0
    %365 = vmatpush1.msra.mxu0 0.0
    %366 = vmatprep.subr.mxu0 0.0
    %367 = vmatpush1.msra.mxu0 0.0
    %368 = vmatprep.subr.mxu0 0.0
    %369 = vmatpush1.msra.mxu0 0.0
    %370 = vmatprep.subr.mxu0 0.0
    %371 = vmatpush1.msra.mxu0 0.0
    %372 = vmatprep.subr.mxu0 0.0
    %373 = vmatpush1.msra.mxu0 0.0
    %374 = vmatprep.subr.mxu0 0.0
    %375 = vmatpush1.msra.mxu0 0.0
    %376 = vmatprep.subr.mxu0 0.0
    %377 = vmatpush1.msra.mxu0 0.0
    %378 = vmatprep.subr.mxu0 0.0
    %379 = vmatpush1.msra.mxu0 0.0
    %380 = vmatprep.subr.mxu0 0.0
    %381 = vmatpush1.msra.mxu0 0.0
    %382 = vmatprep.subr.mxu0 0.0
    %383 = vmatpush1.msra.mxu0 0.0
    %384 = vmatprep.subr.mxu0 0.0
    %385 = vmatpush1.msra.mxu0 %v350
    %386 = vmatprep.subr.mxu0 0.0
    %387 = vmatpush1.msra.mxu0 %v348
    %388 = vmatprep.subr.mxu0 0.0
    %389 = vmatpush2.msra.mxu0 0.0
    %390 = vmatprep.subr.mxu0 0.0
    %391 = vmatpush2.msra.mxu0 0.0
    %392 = vmatprep.subr.mxu0 0.0
    %393 = vmatpush2.msra.mxu0 0.0
    %394 = vmatprep.subr.mxu0 0.0
    %395 = vmatpush2.msra.mxu0 0.0
    %396 = vmatprep.subr.mxu0 0.0
    %397 = vmatpush2.msra.mxu0 0.0
    %398 = vmatprep.subr.mxu0 0.0
    %399 = vmatpush2.msra.mxu0 0.0
    %400 = vmatprep.subr.mxu0 0.0
    %401 = vmatpush2.msra.mxu0 0.0
    %402 = vmatprep.subr.mxu0 0.0
    %403 = vmatpush2.msra.mxu0 0.0
    %404 = vmatprep.subr.mxu0 0.0
    %405 = vmatpush2.msra.mxu0 0.0
    %406 = vmatprep.subr.mxu0 0.0
    %407 = vmatpush2.msra.mxu0 0.0
    %408 = vmatprep.subr.mxu0 0.0
    %409 = vmatpush2.msra.mxu0 0.0
    %410 = vmatprep.subr.mxu0 0.0
    %411 = vmatpush2.msra.mxu0 0.0
    %412 = vmatprep.subr.mxu0 0.0
    %413 = vmatpush2.msra.mxu0 0.0
    %414 = vmatprep.subr.mxu0 0.0
    %415 = vmatpush2.msra.mxu0 0.0
    %416 = vmatprep.subr.mxu0 0.0
    %417 = vmatpush2.msra.mxu0 0.0
    %418 = vmatprep.subr.mxu0 0.0
    %419 = vmatpush2.msra.mxu0 0.0
    %420 = vmatprep.mubr.f32.mxu0 0.0
    %421 = vmatmul.mubr.f32.gmra.mxu0 %v354
    %v422 = vpop.f32.mrf.mxu0
    %v423 = vadd.f32 0.0, %v422
    %v424 = vpop.f32.mrf.mxu0
    %425 = vdwg.mxu0
    %426 = vrot.lane.b32.xlu0 %v177, 64
    %v427 = vpop.permute.xlu0 %426
    %428 = vrot.lane.b32.xlu0 %v182, 64
    %v429 = vpop.permute.xlu0 %428
    %432 = vmatprep.subr.mxu0 0.0
    %433 = vmatpush1.msra.mxu0 0.0
    %434 = vmatprep.subr.mxu0 0.0
    %435 = vmatpush1.msra.mxu0 0.0
    %436 = vmatprep.subr.mxu0 0.0
    %437 = vmatpush1.msra.mxu0 0.0
    %438 = vmatprep.subr.mxu0 0.0
    %439 = vmatpush1.msra.mxu0 0.0
    %440 = vmatprep.subr.mxu0 0.0
    %441 = vmatpush1.msra.mxu0 0.0
    %442 = vmatprep.subr.mxu0 0.0
    %443 = vmatpush1.msra.mxu0 0.0
    %444 = vmatprep.subr.mxu0 0.0
    %445 = vmatpush1.msra.mxu0 0.0
    %446 = vmatprep.subr.mxu0 0.0
    %447 = vmatpush1.msra.mxu0 0.0
    %448 = vmatprep.subr.mxu0 0.0
    %449 = vmatpush1.msra.mxu0 0.0
    %450 = vmatprep.subr.mxu0 0.0
    %451 = vmatpush1.msra.mxu0 0.0
    %452 = vmatprep.subr.mxu0 0.0
    %453 = vmatpush1.msra.mxu0 0.0
    %454 = vmatprep.subr.mxu0 0.0
    %455 = vmatpush1.msra.mxu0 0.0
    %456 = vmatprep.subr.mxu0 0.0
    %457 = vmatpush1.msra.mxu0 0.0
    %458 = vmatprep.subr.mxu0 0.0
    %459 = vmatpush1.msra.mxu0 0.0
    %460 = vmatprep.subr.mxu0 0.0
    %461 = vmatpush1.msra.mxu0 %v429
    %462 = vmatprep.subr.mxu0 0.0
    %463 = vmatpush1.msra.mxu0 %v427
    %464 = vmatprep.subr.mxu0 0.0
    %465 = vmatpush2.msra.mxu0 0.0
    %466 = vmatprep.subr.mxu0 0.0
    %467 = vmatpush2.msra.mxu0 0.0
    %468 = vmatprep.subr.mxu0 0.0
    %469 = vmatpush2.msra.mxu0 0.0
    %470 = vmatprep.subr.mxu0 0.0
    %471 = vmatpush2.msra.mxu0 0.0
    %472 = vmatprep.subr.mxu0 0.0
    %473 = vmatpush2.msra.mxu0 0.0
    %474 = vmatprep.subr.mxu0 0.0
    %475 = vmatpush2.msra.mxu0 0.0
    %476 = vmatprep.subr.mxu0 0.0
    %477 = vmatpush2.msra.mxu0 0.0
    %478 = vmatprep.subr.mxu0 0.0
    %479 = vmatpush2.msra.mxu0 0.0
    %480 = vmatprep.subr.mxu0 0.0
    %481 = vmatpush2.msra.mxu0 0.0
    %482 = vmatprep.subr.mxu0 0.0
    %483 = vmatpush2.msra.mxu0 0.0
    %484 = vmatprep.subr.mxu0 0.0
    %485 = vmatpush2.msra.mxu0 0.0
    %486 = vmatprep.subr.mxu0 0.0
    %487 = vmatpush2.msra.mxu0 0.0
    %488 = vmatprep.subr.mxu0 0.0
    %489 = vmatpush2.msra.mxu0 0.0
    %490 = vmatprep.subr.mxu0 0.0
    %491 = vmatpush2.msra.mxu0 0.0
    %492 = vmatprep.subr.mxu0 0.0
    %493 = vmatpush2.msra.mxu0 0.0
    %494 = vmatprep.subr.mxu0 0.0
    %495 = vmatpush2.msra.mxu0 0.0
    %496 = vmatprep.mubr.f32.mxu0 0.0
    %497 = vmatmul.mubr.f32.gmra.mxu0 %v354
    %v498 = vpop.f32.mrf.mxu0
    %v499 = vadd.f32 0.0, %v498
    %v500 = vpop.f32.mrf.mxu0
    %501 = vdwg.mxu0
    %vm502 = vcmask 64512
    %v503 = vsel %vm502, %v167, 0
    %v505 = vsel %vm502, %v172, 0
    %v508 = vsel %vm502, %v266, 0
    %510 = vmatprep.subr.mxu0 0.0
    %511 = vmatpush1.xpose.msra.mxu0 0.0
    %512 = vmatprep.subr.mxu0 0.0
    %513 = vmatpush1.xpose.msra.mxu0 0.0
    %514 = vmatprep.subr.mxu0 0.0
    %515 = vmatpush1.xpose.msra.mxu0 0.0
    %516 = vmatprep.subr.mxu0 0.0
    %517 = vmatpush1.xpose.msra.mxu0 0.0
    %518 = vmatprep.subr.mxu0 0.0
    %519 = vmatpush1.xpose.msra.mxu0 0.0
    %520 = vmatprep.subr.mxu0 0.0
    %521 = vmatpush1.xpose.msra.mxu0 0.0
    %522 = vmatprep.subr.mxu0 0.0
    %523 = vmatpush1.xpose.msra.mxu0 0.0
    %524 = vmatprep.subr.mxu0 0.0
    %525 = vmatpush1.xpose.msra.mxu0 0.0
    %526 = vmatprep.subr.mxu0 0.0
    %527 = vmatpush1.xpose.msra.mxu0 0.0
    %528 = vmatprep.subr.mxu0 0.0
    %529 = vmatpush1.xpose.msra.mxu0 0.0
    %530 = vmatprep.subr.mxu0 0.0
    %531 = vmatpush1.xpose.msra.mxu0 0.0
    %532 = vmatprep.subr.mxu0 0.0
    %533 = vmatpush1.xpose.msra.mxu0 0.0
    %534 = vmatprep.subr.mxu0 0.0
    %535 = vmatpush1.xpose.msra.mxu0 0.0
    %536 = vmatprep.subr.mxu0 0.0
    %537 = vmatpush1.xpose.msra.mxu0 0.0
    %538 = vmatprep.subr.mxu0 0.0
    %539 = vmatpush1.xpose.msra.mxu0 0.0
    %540 = vmatprep.subr.mxu0 0.0
    %541 = vmatpush1.xpose.msra.mxu0 %v508
    %542 = vmatprep.subr.mxu0 0.0
    %543 = vmatpush2.xpose.msra.mxu0 0.0
    %544 = vmatprep.subr.mxu0 0.0
    %545 = vmatpush2.xpose.msra.mxu0 0.0
    %546 = vmatprep.subr.mxu0 0.0
    %547 = vmatpush2.xpose.msra.mxu0 0.0
    %548 = vmatprep.subr.mxu0 0.0
    %549 = vmatpush2.xpose.msra.mxu0 0.0
    %550 = vmatprep.subr.mxu0 0.0
    %551 = vmatpush2.xpose.msra.mxu0 0.0
    %552 = vmatprep.subr.mxu0 0.0
    %553 = vmatpush2.xpose.msra.mxu0 0.0
    %554 = vmatprep.subr.mxu0 0.0
    %555 = vmatpush2.xpose.msra.mxu0 0.0
    %556 = vmatprep.subr.mxu0 0.0
    %557 = vmatpush2.xpose.msra.mxu0 0.0
    %558 = vmatprep.subr.mxu0 0.0
    %559 = vmatpush2.xpose.msra.mxu0 0.0
    %560 = vmatprep.subr.mxu0 0.0
    %561 = vmatpush2.xpose.msra.mxu0 0.0
    %562 = vmatprep.subr.mxu0 0.0
    %563 = vmatpush2.xpose.msra.mxu0 0.0
    %564 = vmatprep.subr.mxu0 0.0
    %565 = vmatpush2.xpose.msra.mxu0 0.0
    %566 = vmatprep.subr.mxu0 0.0
    %567 = vmatpush2.xpose.msra.mxu0 0.0
    %568 = vmatprep.subr.mxu0 0.0
    %569 = vmatpush2.xpose.msra.mxu0 0.0
    %570 = vmatprep.subr.mxu0 0.0
    %571 = vmatpush2.xpose.msra.mxu0 0.0
    %572 = vmatprep.subr.mxu0 0.0
    %573 = vmatpush2.xpose.msra.mxu0 0.0
    %574 = vmatprep.mubr.f32.mxu0 0.0
    %575 = vmatmul.mubr.f32.gmra.mxu0 %v503
    %v576 = vpop.f32.mrf.mxu0
    %v577 = vadd.f32 0.0, %v576
    %v578 = vpop.f32.mrf.mxu0
    %579 = vmatprep.mubr.f32.mxu0 0.0
    %580 = vmatmul.mubr.f32.gmra.mxu0 %v505
    %v581 = vpop.f32.mrf.mxu0
    %v582 = vadd.f32 0.0, %v581
    %v583 = vpop.f32.mrf.mxu0
    %584 = vdwg.mxu0
    %v585 = vsel %vm502, %v177, 0
    %v587 = vsel %vm502, %v182, 0
    %v590 = vsel %vm502, %v344, 0
    %592 = vmatprep.subr.mxu0 0.0
    %593 = vmatpush1.xpose.msra.mxu0 0.0
    %594 = vmatprep.subr.mxu0 0.0
    %595 = vmatpush1.xpose.msra.mxu0 0.0
    %596 = vmatprep.subr.mxu0 0.0
    %597 = vmatpush1.xpose.msra.mxu0 0.0
    %598 = vmatprep.subr.mxu0 0.0
    %599 = vmatpush1.xpose.msra.mxu0 0.0
    %600 = vmatprep.subr.mxu0 0.0
    %601 = vmatpush1.xpose.msra.mxu0 0.0
    %602 = vmatprep.subr.mxu0 0.0
    %603 = vmatpush1.xpose.msra.mxu0 0.0
    %604 = vmatprep.subr.mxu0 0.0
    %605 = vmatpush1.xpose.msra.mxu0 0.0
    %606 = vmatprep.subr.mxu0 0.0
    %607 = vmatpush1.xpose.msra.mxu0 0.0
    %608 = vmatprep.subr.mxu0 0.0
    %609 = vmatpush1.xpose.msra.mxu0 0.0
    %610 = vmatprep.subr.mxu0 0.0
    %611 = vmatpush1.xpose.msra.mxu0 0.0
    %612 = vmatprep.subr.mxu0 0.0
    %613 = vmatpush1.xpose.msra.mxu0 0.0
    %614 = vmatprep.subr.mxu0 0.0
    %615 = vmatpush1.xpose.msra.mxu0 0.0
    %616 = vmatprep.subr.mxu0 0.0
    %617 = vmatpush1.xpose.msra.mxu0 0.0
    %618 = vmatprep.subr.mxu0 0.0
    %619 = vmatpush1.xpose.msra.mxu0 0.0
    %620 = vmatprep.subr.mxu0 0.0
    %621 = vmatpush1.xpose.msra.mxu0 0.0
    %622 = vmatprep.subr.mxu0 0.0
    %623 = vmatpush1.xpose.msra.mxu0 %v590
    %624 = vmatprep.subr.mxu0 0.0
    %625 = vmatpush2.xpose.msra.mxu0 0.0
    %626 = vmatprep.subr.mxu0 0.0
    %627 = vmatpush2.xpose.msra.mxu0 0.0
    %628 = vmatprep.subr.mxu0 0.0
    %629 = vmatpush2.xpose.msra.mxu0 0.0
    %630 = vmatprep.subr.mxu0 0.0
    %631 = vmatpush2.xpose.msra.mxu0 0.0
    %632 = vmatprep.subr.mxu0 0.0
    %633 = vmatpush2.xpose.msra.mxu0 0.0
    %634 = vmatprep.subr.mxu0 0.0
    %635 = vmatpush2.xpose.msra.mxu0 0.0
    %636 = vmatprep.subr.mxu0 0.0
    %637 = vmatpush2.xpose.msra.mxu0 0.0
    %638 = vmatprep.subr.mxu0 0.0
    %639 = vmatpush2.xpose.msra.mxu0 0.0
    %640 = vmatprep.subr.mxu0 0.0
    %641 = vmatpush2.xpose.msra.mxu0 0.0
    %642 = vmatprep.subr.mxu0 0.0
    %643 = vmatpush2.xpose.msra.mxu0 0.0
    %644 = vmatprep.subr.mxu0 0.0
    %645 = vmatpush2.xpose.msra.mxu0 0.0
    %646 = vmatprep.subr.mxu0 0.0
    %647 = vmatpush2.xpose.msra.mxu0 0.0
    %648 = vmatprep.subr.mxu0 0.0
    %649 = vmatpush2.xpose.msra.mxu0 0.0
    %650 = vmatprep.subr.mxu0 0.0
    %651 = vmatpush2.xpose.msra.mxu0 0.0
    %652 = vmatprep.subr.mxu0 0.0
    %653 = vmatpush2.xpose.msra.mxu0 0.0
    %654 = vmatprep.subr.mxu0 0.0
    %655 = vmatpush2.xpose.msra.mxu0 0.0
    %656 = vmatprep.mubr.f32.mxu0 0.0
    %657 = vmatmul.mubr.f32.gmra.mxu0 %v585
    %v658 = vpop.f32.mrf.mxu0
    %v659 = vadd.f32 0.0, %v658
    %v660 = vpop.f32.mrf.mxu0
    %661 = vmatprep.mubr.f32.mxu0 0.0
    %662 = vmatmul.mubr.f32.gmra.mxu0 %v587
    %v663 = vpop.f32.mrf.mxu0
    %v664 = vadd.f32 0.0, %v663
    %v665 = vpop.f32.mrf.mxu0
    %666 = vdwg.mxu0
    %v667 = vsel %vm502, %v577, -inf
    %668 = vmax.xlane.f32.xlu0 %v667
    %v669 = vpop.xlane.xlu0 %668
    %v670 = vsel %vm502, %v582, -inf
    %671 = vmax.xlane.f32.xlu0 %v670
    %v672 = vpop.xlane.xlu0 %671
    %v673 = vsel %vm502, %v659, -inf
    %674 = vmax.xlane.f32.xlu0 %v673
    %v675 = vpop.xlane.xlu0 %674
    %v676 = vsel %vm502, %v664, -inf
    %677 = vmax.xlane.f32.xlu0 %v676
    %v678 = vpop.xlane.xlu0 %677
    %v679 = vsub.f32 %v577, %v669
    %v680 = vsub.f32 %v582, %v672
    %v681 = vsub.f32 %v659, %v675
    %v682 = vsub.f32 %v664, %v678
    %v683 = vmul.f32 %v679, 1.442695
    %v684 = vpow.pop %v683
    %v685 = vmul.f32 %v680, 1.442695
    %v686 = vpow.pop %v685
    %v687 = vmul.f32 %v681, 1.442695
    %v688 = vpow.pop %v687
    %v689 = vmul.f32 %v682, 1.442695
    %v690 = vpow.pop %v689
    %v691 = vsel %vm502, %v684, 0.0
    %692 = vadd.xlane.f32.xlu0 %v691
    %v693 = vpop.xlane.xlu0 %692
    %v694 = vsel %vm502, %v686, 0.0
    %695 = vadd.xlane.f32.xlu0 %v694
    %v696 = vpop.xlane.xlu0 %695
    %v697 = vsel %vm502, %v688, 0.0
    %698 = vadd.xlane.f32.xlu0 %v697
    %v699 = vpop.xlane.xlu0 %698
    %v700 = vsel %vm502, %v690, 0.0
    %701 = vadd.xlane.f32.xlu0 %v700
    %v702 = vpop.xlane.xlu0 %701
    %v703 = vrcp.pop %v693
    %v704 = vrcp.pop %v696
    %v705 = vrcp.pop %v699
    %v706 = vrcp.pop %v702
    %v707 = vmul.f32 %v684, %v703
    %v708 = vmul.f32 %v686, %v704
    %v709 = vmul.f32 %v688, %v705
    %v710 = vmul.f32 %v690, %v706
    %v712 = vsel %vm502, %v707, 0
    %v715 = vsel %vm502, %v708, 0
    %717 = vmatprep.subr.mxu0 0.0
    %718 = vmatpush1.msra.mxu0 0.0
    %719 = vmatprep.subr.mxu0 0.0
    %720 = vmatpush1.msra.mxu0 0.0
    %721 = vmatprep.subr.mxu0 0.0
    %722 = vmatpush1.msra.mxu0 0.0
    %723 = vmatprep.subr.mxu0 0.0
    %724 = vmatpush1.msra.mxu0 0.0
    %725 = vmatprep.subr.mxu0 0.0
    %726 = vmatpush1.msra.mxu0 0.0
    %727 = vmatprep.subr.mxu0 0.0
    %728 = vmatpush1.msra.mxu0 0.0
    %729 = vmatprep.subr.mxu0 0.0
    %730 = vmatpush1.msra.mxu0 0.0
    %731 = vmatprep.subr.mxu0 0.0
    %732 = vmatpush1.msra.mxu0 0.0
    %733 = vmatprep.subr.mxu0 0.0
    %734 = vmatpush1.msra.mxu0 0.0
    %735 = vmatprep.subr.mxu0 0.0
    %736 = vmatpush1.msra.mxu0 0.0
    %737 = vmatprep.subr.mxu0 0.0
    %738 = vmatpush1.msra.mxu0 0.0
    %739 = vmatprep.subr.mxu0 0.0
    %740 = vmatpush1.msra.mxu0 0.0
    %741 = vmatprep.subr.mxu0 0.0
    %742 = vmatpush1.msra.mxu0 0.0
    %743 = vmatprep.subr.mxu0 0.0
    %744 = vmatpush1.msra.mxu0 0.0
    %745 = vmatprep.subr.mxu0 0.0
    %746 = vmatpush1.msra.mxu0 0.0
    %747 = vmatprep.subr.mxu0 0.0
    %748 = vmatpush1.msra.mxu0 %v423
    %749 = vmatprep.subr.mxu0 0.0
    %750 = vmatpush2.msra.mxu0 0.0
    %751 = vmatprep.subr.mxu0 0.0
    %752 = vmatpush2.msra.mxu0 0.0
    %753 = vmatprep.subr.mxu0 0.0
    %754 = vmatpush2.msra.mxu0 0.0
    %755 = vmatprep.subr.mxu0 0.0
    %756 = vmatpush2.msra.mxu0 0.0
    %757 = vmatprep.subr.mxu0 0.0
    %758 = vmatpush2.msra.mxu0 0.0
    %759 = vmatprep.subr.mxu0 0.0
    %760 = vmatpush2.msra.mxu0 0.0
    %761 = vmatprep.subr.mxu0 0.0
    %762 = vmatpush2.msra.mxu0 0.0
    %763 = vmatprep.subr.mxu0 0.0
    %764 = vmatpush2.msra.mxu0 0.0
    %765 = vmatprep.subr.mxu0 0.0
    %766 = vmatpush2.msra.mxu0 0.0
    %767 = vmatprep.subr.mxu0 0.0
    %768 = vmatpush2.msra.mxu0 0.0
    %769 = vmatprep.subr.mxu0 0.0
    %770 = vmatpush2.msra.mxu0 0.0
    %771 = vmatprep.subr.mxu0 0.0
    %772 = vmatpush2.msra.mxu0 0.0
    %773 = vmatprep.subr.mxu0 0.0
    %774 = vmatpush2.msra.mxu0 0.0
    %775 = vmatprep.subr.mxu0 0.0
    %776 = vmatpush2.msra.mxu0 0.0
    %777 = vmatprep.subr.mxu0 0.0
    %778 = vmatpush2.msra.mxu0 0.0
    %779 = vmatprep.subr.mxu0 0.0
    %780 = vmatpush2.msra.mxu0 0.0
    %781 = vmatprep.mubr.f32.mxu0 0.0
    %782 = vmatmul.mubr.f32.gmra.mxu0 %v712
    %v783 = vpop.f32.mrf.mxu0
    %v784 = vadd.f32 0.0, %v783
    %v785 = vpop.f32.mrf.mxu0
    %786 = vmatprep.mubr.f32.mxu0 0.0
    %787 = vmatmul.mubr.f32.gmra.mxu0 %v715
    %v788 = vpop.f32.mrf.mxu0
    %v789 = vadd.f32 0.0, %v788
    %v790 = vpop.f32.mrf.mxu0
    %791 = vdwg.mxu0
    %v793 = vsel %vm502, %v709, 0
    %v796 = vsel %vm502, %v710, 0
    %798 = vmatprep.subr.mxu0 0.0
    %799 = vmatpush1.msra.mxu0 0.0
    %800 = vmatprep.subr.mxu0 0.0
    %801 = vmatpush1.msra.mxu0 0.0
    %802 = vmatprep.subr.mxu0 0.0
    %803 = vmatpush1.msra.mxu0 0.0
    %804 = vmatprep.subr.mxu0 0.0
    %805 = vmatpush1.msra.mxu0 0.0
    %806 = vmatprep.subr.mxu0 0.0
    %807 = vmatpush1.msra.mxu0 0.0
    %808 = vmatprep.subr.mxu0 0.0
    %809 = vmatpush1.msra.mxu0 0.0
    %810 = vmatprep.subr.mxu0 0.0
    %811 = vmatpush1.msra.mxu0 0.0
    %812 = vmatprep.subr.mxu0 0.0
    %813 = vmatpush1.msra.mxu0 0.0
    %814 = vmatprep.subr.mxu0 0.0
    %815 = vmatpush1.msra.mxu0 0.0
    %816 = vmatprep.subr.mxu0 0.0
    %817 = vmatpush1.msra.mxu0 0.0
    %818 = vmatprep.subr.mxu0 0.0
    %819 = vmatpush1.msra.mxu0 0.0
    %820 = vmatprep.subr.mxu0 0.0
    %821 = vmatpush1.msra.mxu0 0.0
    %822 = vmatprep.subr.mxu0 0.0
    %823 = vmatpush1.msra.mxu0 0.0
    %824 = vmatprep.subr.mxu0 0.0
    %825 = vmatpush1.msra.mxu0 0.0
    %826 = vmatprep.subr.mxu0 0.0
    %827 = vmatpush1.msra.mxu0 0.0
    %828 = vmatprep.subr.mxu0 0.0
    %829 = vmatpush1.msra.mxu0 %v499
    %830 = vmatprep.subr.mxu0 0.0
    %831 = vmatpush2.msra.mxu0 0.0
    %832 = vmatprep.subr.mxu0 0.0
    %833 = vmatpush2.msra.mxu0 0.0
    %834 = vmatprep.subr.mxu0 0.0
    %835 = vmatpush2.msra.mxu0 0.0
    %836 = vmatprep.subr.mxu0 0.0
    %837 = vmatpush2.msra.mxu0 0.0
    %838 = vmatprep.subr.mxu0 0.0
    %839 = vmatpush2.msra.mxu0 0.0
    %840 = vmatprep.subr.mxu0 0.0
    %841 = vmatpush2.msra.mxu0 0.0
    %842 = vmatprep.subr.mxu0 0.0
    %843 = vmatpush2.msra.mxu0 0.0
    %844 = vmatprep.subr.mxu0 0.0
    %845 = vmatpush2.msra.mxu0 0.0
    %846 = vmatprep.subr.mxu0 0.0
    %847 = vmatpush2.msra.mxu0 0.0
    %848 = vmatprep.subr.mxu0 0.0
    %849 = vmatpush2.msra.mxu0 0.0
    %850 = vmatprep.subr.mxu0 0.0
    %851 = vmatpush2.msra.mxu0 0.0
    %852 = vmatprep.subr.mxu0 0.0
    %853 = vmatpush2.msra.mxu0 0.0
    %854 = vmatprep.subr.mxu0 0.0
    %855 = vmatpush2.msra.mxu0 0.0
    %856 = vmatprep.subr.mxu0 0.0
    %857 = vmatpush2.msra.mxu0 0.0
    %858 = vmatprep.subr.mxu0 0.0
    %859 = vmatpush2.msra.mxu0 0.0
    %860 = vmatprep.subr.mxu0 0.0
    %861 = vmatpush2.msra.mxu0 0.0
    %862 = vmatprep.mubr.f32.mxu0 0.0
    %863 = vmatmul.mubr.f32.gmra.mxu0 %v793
    %v864 = vpop.f32.mrf.mxu0
    %v865 = vadd.f32 0.0, %v864
    %v866 = vpop.f32.mrf.mxu0
    %867 = vmatprep.mubr.f32.mxu0 0.0
    %868 = vmatmul.mubr.f32.gmra.mxu0 %v796
    %v869 = vpop.f32.mrf.mxu0
    %v870 = vadd.f32 0.0, %v869
    %v871 = vpop.f32.mrf.mxu0
    %872 = vdwg.mxu0
    %873 = vrot.lane.b32.xlu0 %v167, 120
    %v874 = vpop.permute.xlu0 %873
    %875 = vrot.lane.b32.xlu0 %v172, 120
    %v876 = vpop.permute.xlu0 %875
    %877 = vrot.lane.b32.xlu0 %v266, 120
    %v878 = vpop.permute.xlu0 %877
    %v879 = vsel %vm502, %v874, 0
    %v881 = vsel %vm502, %v876, 0
    %v883 = vsel %vm502, %v878, 0
    %885 = vmatprep.subr.mxu0 0.0
    %886 = vmatpush1.xpose.msra.mxu0 0.0
    %887 = vmatprep.subr.mxu0 0.0
    %888 = vmatpush1.xpose.msra.mxu0 0.0
    %889 = vmatprep.subr.mxu0 0.0
    %890 = vmatpush1.xpose.msra.mxu0 0.0
    %891 = vmatprep.subr.mxu0 0.0
    %892 = vmatpush1.xpose.msra.mxu0 0.0
    %893 = vmatprep.subr.mxu0 0.0
    %894 = vmatpush1.xpose.msra.mxu0 0.0
    %895 = vmatprep.subr.mxu0 0.0
    %896 = vmatpush1.xpose.msra.mxu0 0.0
    %897 = vmatprep.subr.mxu0 0.0
    %898 = vmatpush1.xpose.msra.mxu0 0.0
    %899 = vmatprep.subr.mxu0 0.0
    %900 = vmatpush1.xpose.msra.mxu0 0.0
    %901 = vmatprep.subr.mxu0 0.0
    %902 = vmatpush1.xpose.msra.mxu0 0.0
    %903 = vmatprep.subr.mxu0 0.0
    %904 = vmatpush1.xpose.msra.mxu0 0.0
    %905 = vmatprep.subr.mxu0 0.0
    %906 = vmatpush1.xpose.msra.mxu0 0.0
    %907 = vmatprep.subr.mxu0 0.0
    %908 = vmatpush1.xpose.msra.mxu0 0.0
    %909 = vmatprep.subr.mxu0 0.0
    %910 = vmatpush1.xpose.msra.mxu0 0.0
    %911 = vmatprep.subr.mxu0 0.0
    %912 = vmatpush1.xpose.msra.mxu0 0.0
    %913 = vmatprep.subr.mxu0 0.0
    %914 = vmatpush1.xpose.msra.mxu0 0.0
    %915 = vmatprep.subr.mxu0 0.0
    %916 = vmatpush1.xpose.msra.mxu0 %v883
    %917 = vmatprep.subr.mxu0 0.0
    %918 = vmatpush2.xpose.msra.mxu0 0.0
    %919 = vmatprep.subr.mxu0 0.0
    %920 = vmatpush2.xpose.msra.mxu0 0.0
    %921 = vmatprep.subr.mxu0 0.0
    %922 = vmatpush2.xpose.msra.mxu0 0.0
    %923 = vmatprep.subr.mxu0 0.0
    %924 = vmatpush2.xpose.msra.mxu0 0.0
    %925 = vmatprep.subr.mxu0 0.0
    %926 = vmatpush2.xpose.msra.mxu0 0.0
    %927 = vmatprep.subr.mxu0 0.0
    %928 = vmatpush2.xpose.msra.mxu0 0.0
    %929 = vmatprep.subr.mxu0 0.0
    %930 = vmatpush2.xpose.msra.mxu0 0.0
    %931 = vmatprep.subr.mxu0 0.0
    %932 = vmatpush2.xpose.msra.mxu0 0.0
    %933 = vmatprep.subr.mxu0 0.0
    %934 = vmatpush2.xpose.msra.mxu0 0.0
    %935 = vmatprep.subr.mxu0 0.0
    %936 = vmatpush2.xpose.msra.mxu0 0.0
    %937 = vmatprep.subr.mxu0 0.0
    %938 = vmatpush2.xpose.msra.mxu0 0.0
    %939 = vmatprep.subr.mxu0 0.0
    %940 = vmatpush2.xpose.msra.mxu0 0.0
    %941 = vmatprep.subr.mxu0 0.0
    %942 = vmatpush2.xpose.msra.mxu0 0.0
    %943 = vmatprep.subr.mxu0 0.0
    %944 = vmatpush2.xpose.msra.mxu0 0.0
    %945 = vmatprep.subr.mxu0 0.0
    %946 = vmatpush2.xpose.msra.mxu0 0.0
    %947 = vmatprep.subr.mxu0 0.0
    %948 = vmatpush2.xpose.msra.mxu0 0.0
    %949 = vmatprep.mubr.f32.mxu0 0.0
    %950 = vmatmul.mubr.f32.gmra.mxu0 %v879
    %v951 = vpop.f32.mrf.mxu0
    %v952 = vadd.f32 0.0, %v951
    %v953 = vpop.f32.mrf.mxu0
    %954 = vmatprep.mubr.f32.mxu0 0.0
    %955 = vmatmul.mubr.f32.gmra.mxu0 %v881
    %v956 = vpop.f32.mrf.mxu0
    %v957 = vadd.f32 0.0, %v956
    %v958 = vpop.f32.mrf.mxu0
    %959 = vdwg.mxu0
    %960 = vrot.lane.b32.xlu0 %v177, 120
    %v961 = vpop.permute.xlu0 %960
    %962 = vrot.lane.b32.xlu0 %v182, 120
    %v963 = vpop.permute.xlu0 %962
    %964 = vrot.lane.b32.xlu0 %v344, 120
    %v965 = vpop.permute.xlu0 %964
    %v966 = vsel %vm502, %v961, 0
    %v968 = vsel %vm502, %v963, 0
    %v970 = vsel %vm502, %v965, 0
    %972 = vmatprep.subr.mxu0 0.0
    %973 = vmatpush1.xpose.msra.mxu0 0.0
    %974 = vmatprep.subr.mxu0 0.0
    %975 = vmatpush1.xpose.msra.mxu0 0.0
    %976 = vmatprep.subr.mxu0 0.0
    %977 = vmatpush1.xpose.msra.mxu0 0.0
    %978 = vmatprep.subr.mxu0 0.0
    %979 = vmatpush1.xpose.msra.mxu0 0.0
    %980 = vmatprep.subr.mxu0 0.0
    %981 = vmatpush1.xpose.msra.mxu0 0.0
    %982 = vmatprep.subr.mxu0 0.0
    %983 = vmatpush1.xpose.msra.mxu0 0.0
    %984 = vmatprep.subr.mxu0 0.0
    %985 = vmatpush1.xpose.msra.mxu0 0.0
    %986 = vmatprep.subr.mxu0 0.0
    %987 = vmatpush1.xpose.msra.mxu0 0.0
    %988 = vmatprep.subr.mxu0 0.0
    %989 = vmatpush1.xpose.msra.mxu0 0.0
    %990 = vmatprep.subr.mxu0 0.0
    %991 = vmatpush1.xpose.msra.mxu0 0.0
    %992 = vmatprep.subr.mxu0 0.0
    %993 = vmatpush1.xpose.msra.mxu0 0.0
    %994 = vmatprep.subr.mxu0 0.0
    %995 = vmatpush1.xpose.msra.mxu0 0.0
    %996 = vmatprep.subr.mxu0 0.0
    %997 = vmatpush1.xpose.msra.mxu0 0.0
    %998 = vmatprep.subr.mxu0 0.0
    %999 = vmatpush1.xpose.msra.mxu0 0.0
    %1000 = vmatprep.subr.mxu0 0.0
    %1001 = vmatpush1.xpose.msra.mxu0 0.0
    %1002 = vmatprep.subr.mxu0 0.0
    %1003 = vmatpush1.xpose.msra.mxu0 %v970
    %1004 = vmatprep.subr.mxu0 0.0
    %1005 = vmatpush2.xpose.msra.mxu0 0.0
    %1006 = vmatprep.subr.mxu0 0.0
    %1007 = vmatpush2.xpose.msra.mxu0 0.0
    %1008 = vmatprep.subr.mxu0 0.0
    %1009 = vmatpush2.xpose.msra.mxu0 0.0
    %1010 = vmatprep.subr.mxu0 0.0
    %1011 = vmatpush2.xpose.msra.mxu0 0.0
    %1012 = vmatprep.subr.mxu0 0.0
    %1013 = vmatpush2.xpose.msra.mxu0 0.0
    %1014 = vmatprep.subr.mxu0 0.0
    %1015 = vmatpush2.xpose.msra.mxu0 0.0
    %1016 = vmatprep.subr.mxu0 0.0
    %1017 = vmatpush2.xpose.msra.mxu0 0.0
    %1018 = vmatprep.subr.mxu0 0.0
    %1019 = vmatpush2.xpose.msra.mxu0 0.0
    %1020 = vmatprep.subr.mxu0 0.0
    %1021 = vmatpush2.xpose.msra.mxu0 0.0
    %1022 = vmatprep.subr.mxu0 0.0
    %1023 = vmatpush2.xpose.msra.mxu0 0.0
    %1024 = vmatprep.subr.mxu0 0.0
    %1025 = vmatpush2.xpose.msra.mxu0 0.0
    %1026 = vmatprep.subr.mxu0 0.0
    %1027 = vmatpush2.xpose.msra.mxu0 0.0
    %1028 = vmatprep.subr.mxu0 0.0
    %1029 = vmatpush2.xpose.msra.mxu0 0.0
    %1030 = vmatprep.subr.mxu0 0.0
    %1031 = vmatpush2.xpose.msra.mxu0 0.0
    %1032 = vmatprep.subr.mxu0 0.0
    %1033 = vmatpush2.xpose.msra.mxu0 0.0
    %1034 = vmatprep.subr.mxu0 0.0
    %1035 = vmatpush2.xpose.msra.mxu0 0.0
    %1036 = vmatprep.mubr.f32.mxu0 0.0
    %1037 = vmatmul.mubr.f32.gmra.mxu0 %v966
    %v1038 = vpop.f32.mrf.mxu0
    %v1039 = vadd.f32 0.0, %v1038
    %v1040 = vpop.f32.mrf.mxu0
    %1041 = vmatprep.mubr.f32.mxu0 0.0
    %1042 = vmatmul.mubr.f32.gmra.mxu0 %v968
    %v1043 = vpop.f32.mrf.mxu0
    %v1044 = vadd.f32 0.0, %v1043
    %v1045 = vpop.f32.mrf.mxu0
    %1046 = vdwg.mxu0
    %v1047 = vsel %vm502, %v952, -inf
    %1048 = vmax.xlane.f32.xlu0 %v1047
    %v1049 = vpop.xlane.xlu0 %1048
    %v1050 = vsel %vm502, %v957, -inf
    %1051 = vmax.xlane.f32.xlu0 %v1050
    %v1052 = vpop.xlane.xlu0 %1051
    %v1053 = vsel %vm502, %v1039, -inf
    %1054 = vmax.xlane.f32.xlu0 %v1053
    %v1055 = vpop.xlane.xlu0 %1054
    %v1056 = vsel %vm502, %v1044, -inf
    %1057 = vmax.xlane.f32.xlu0 %v1056
    %v1058 = vpop.xlane.xlu0 %1057
    %v1059 = vsub.f32 %v952, %v1049
    %v1060 = vsub.f32 %v957, %v1052
    %v1061 = vsub.f32 %v1039, %v1055
    %v1062 = vsub.f32 %v1044, %v1058
    %v1063 = vmul.f32 %v1059, 1.442695
    %v1064 = vpow.pop %v1063
    %v1065 = vmul.f32 %v1060, 1.442695
    %v1066 = vpow.pop %v1065
    %v1067 = vmul.f32 %v1061, 1.442695
    %v1068 = vpow.pop %v1067
    %v1069 = vmul.f32 %v1062, 1.442695
    %v1070 = vpow.pop %v1069
    %v1071 = vsel %vm502, %v1064, 0.0
    %1072 = vadd.xlane.f32.xlu0 %v1071
    %v1073 = vpop.xlane.xlu0 %1072
    %v1074 = vsel %vm502, %v1066, 0.0
    %1075 = vadd.xlane.f32.xlu0 %v1074
    %v1076 = vpop.xlane.xlu0 %1075
    %v1077 = vsel %vm502, %v1068, 0.0
    %1078 = vadd.xlane.f32.xlu0 %v1077
    %v1079 = vpop.xlane.xlu0 %1078
    %v1080 = vsel %vm502, %v1070, 0.0
    %1081 = vadd.xlane.f32.xlu0 %v1080
    %v1082 = vpop.xlane.xlu0 %1081
    %v1083 = vrcp.pop %v1073
    %v1084 = vrcp.pop %v1076
    %v1085 = vrcp.pop %v1079
    %v1086 = vrcp.pop %v1082
    %v1087 = vmul.f32 %v1064, %v1083
    %v1088 = vmul.f32 %v1066, %v1084
    %v1089 = vmul.f32 %v1068, %v1085
    %v1090 = vmul.f32 %v1070, %v1086
    %1092 = vrot.lane.b32.xlu0 %v423, 120
    %v1093 = vpop.permute.xlu0 %1092
    %v1096 = vsel %vm502, %v1087, 0
    %v1099 = vsel %vm502, %v1088, 0
    %1101 = vmatprep.subr.mxu0 0.0
    %1102 = vmatpush1.msra.mxu0 0.0
    %1103 = vmatprep.subr.mxu0 0.0
    %1104 = vmatpush1.msra.mxu0 0.0
    %1105 = vmatprep.subr.mxu0 0.0
    %1106 = vmatpush1.msra.mxu0 0.0
    %1107 = vmatprep.subr.mxu0 0.0
    %1108 = vmatpush1.msra.mxu0 0.0
    %1109 = vmatprep.subr.mxu0 0.0
    %1110 = vmatpush1.msra.mxu0 0.0
    %1111 = vmatprep.subr.mxu0 0.0
    %1112 = vmatpush1.msra.mxu0 0.0
    %1113 = vmatprep.subr.mxu0 0.0
    %1114 = vmatpush1.msra.mxu0 0.0
    %1115 = vmatprep.subr.mxu0 0.0
    %1116 = vmatpush1.msra.mxu0 0.0
    %1117 = vmatprep.subr.mxu0 0.0
    %1118 = vmatpush1.msra.mxu0 0.0
    %1119 = vmatprep.subr.mxu0 0.0
    %1120 = vmatpush1.msra.mxu0 0.0
    %1121 = vmatprep.subr.mxu0 0.0
    %1122 = vmatpush1.msra.mxu0 0.0
    %1123 = vmatprep.subr.mxu0 0.0
    %1124 = vmatpush1.msra.mxu0 0.0
    %1125 = vmatprep.subr.mxu0 0.0
    %1126 = vmatpush1.msra.mxu0 0.0
    %1127 = vmatprep.subr.mxu0 0.0
    %1128 = vmatpush1.msra.mxu0 0.0
    %1129 = vmatprep.subr.mxu0 0.0
    %1130 = vmatpush1.msra.mxu0 0.0
    %1131 = vmatprep.subr.mxu0 0.0
    %1132 = vmatpush1.msra.mxu0 %v1093
    %1133 = vmatprep.subr.mxu0 0.0
    %1134 = vmatpush2.msra.mxu0 0.0
    %1135 = vmatprep.subr.mxu0 0.0
    %1136 = vmatpush2.msra.mxu0 0.0
    %1137 = vmatprep.subr.mxu0 0.0
    %1138 = vmatpush2.msra.mxu0 0.0
    %1139 = vmatprep.subr.mxu0 0.0
    %1140 = vmatpush2.msra.mxu0 0.0
    %1141 = vmatprep.subr.mxu0 0.0
    %1142 = vmatpush2.msra.mxu0 0.0
    %1143 = vmatprep.subr.mxu0 0.0
    %1144 = vmatpush2.msra.mxu0 0.0
    %1145 = vmatprep.subr.mxu0 0.0
    %1146 = vmatpush2.msra.mxu0 0.0
    %1147 = vmatprep.subr.mxu0 0.0
    %1148 = vmatpush2.msra.mxu0 0.0
    %1149 = vmatprep.subr.mxu0 0.0
    %1150 = vmatpush2.msra.mxu0 0.0
    %1151 = vmatprep.subr.mxu0 0.0
    %1152 = vmatpush2.msra.mxu0 0.0
    %1153 = vmatprep.subr.mxu0 0.0
    %1154 = vmatpush2.msra.mxu0 0.0
    %1155 = vmatprep.subr.mxu0 0.0
    %1156 = vmatpush2.msra.mxu0 0.0
    %1157 = vmatprep.subr.mxu0 0.0
    %1158 = vmatpush2.msra.mxu0 0.0
    %1159 = vmatprep.subr.mxu0 0.0
    %1160 = vmatpush2.msra.mxu0 0.0
    %1161 = vmatprep.subr.mxu0 0.0
    %1162 = vmatpush2.msra.mxu0 0.0
    %1163 = vmatprep.subr.mxu0 0.0
    %1164 = vmatpush2.msra.mxu0 0.0
    %1165 = vmatprep.mubr.f32.mxu0 0.0
    %1166 = vmatmul.mubr.f32.gmra.mxu0 %v1096
    %v1167 = vpop.f32.mrf.mxu0
    %v1168 = vadd.f32 0.0, %v1167
    %v1169 = vpop.f32.mrf.mxu0
    %1170 = vmatprep.mubr.f32.mxu0 0.0
    %1171 = vmatmul.mubr.f32.gmra.mxu0 %v1099
    %v1172 = vpop.f32.mrf.mxu0
    %v1173 = vadd.f32 0.0, %v1172
    %v1174 = vpop.f32.mrf.mxu0
    %1175 = vdwg.mxu0
    %1177 = vrot.lane.b32.xlu0 %v499, 120
    %v1178 = vpop.permute.xlu0 %1177
    %v1181 = vsel %vm502, %v1089, 0
    %v1184 = vsel %vm502, %v1090, 0
    %1186 = vmatprep.subr.mxu0 0.0
    %1187 = vmatpush1.msra.mxu0 0.0
    %1188 = vmatprep.subr.mxu0 0.0
    %1189 = vmatpush1.msra.mxu0 0.0
    %1190 = vmatprep.subr.mxu0 0.0
    %1191 = vmatpush1.msra.mxu0 0.0
    %1192 = vmatprep.subr.mxu0 0.0
    %1193 = vmatpush1.msra.mxu0 0.0
    %1194 = vmatprep.subr.mxu0 0.0
    %1195 = vmatpush1.msra.mxu0 0.0
    %1196 = vmatprep.subr.mxu0 0.0
    %1197 = vmatpush1.msra.mxu0 0.0
    %1198 = vmatprep.subr.mxu0 0.0
    %1199 = vmatpush1.msra.mxu0 0.0
    %1200 = vmatprep.subr.mxu0 0.0
    %1201 = vmatpush1.msra.mxu0 0.0
    %1202 = vmatprep.subr.mxu0 0.0
    %1203 = vmatpush1.msra.mxu0 0.0
    %1204 = vmatprep.subr.mxu0 0.0
    %1205 = vmatpush1.msra.mxu0 0.0
    %1206 = vmatprep.subr.mxu0 0.0
    %1207 = vmatpush1.msra.mxu0 0.0
    %1208 = vmatprep.subr.mxu0 0.0
    %1209 = vmatpush1.msra.mxu0 0.0
    %1210 = vmatprep.subr.mxu0 0.0
    %1211 = vmatpush1.msra.mxu0 0.0
    %1212 = vmatprep.subr.mxu0 0.0
    %1213 = vmatpush1.msra.mxu0 0.0
    %1214 = vmatprep.subr.mxu0 0.0
    %1215 = vmatpush1.msra.mxu0 0.0
    %1216 = vmatprep.subr.mxu0 0.0
    %1217 = vmatpush1.msra.mxu0 %v1178
    %1218 = vmatprep.subr.mxu0 0.0
    %1219 = vmatpush2.msra.mxu0 0.0
    %1220 = vmatprep.subr.mxu0 0.0
    %1221 = vmatpush2.msra.mxu0 0.0
    %1222 = vmatprep.subr.mxu0 0.0
    %1223 = vmatpush2.msra.mxu0 0.0
    %1224 = vmatprep.subr.mxu0 0.0
    %1225 = vmatpush2.msra.mxu0 0.0
    %1226 = vmatprep.subr.mxu0 0.0
    %1227 = vmatpush2.msra.mxu0 0.0
    %1228 = vmatprep.subr.mxu0 0.0
    %1229 = vmatpush2.msra.mxu0 0.0
    %1230 = vmatprep.subr.mxu0 0.0
    %1231 = vmatpush2.msra.mxu0 0.0
    %1232 = vmatprep.subr.mxu0 0.0
    %1233 = vmatpush2.msra.mxu0 0.0
    %1234 = vmatprep.subr.mxu0 0.0
    %1235 = vmatpush2.msra.mxu0 0.0
    %1236 = vmatprep.subr.mxu0 0.0
    %1237 = vmatpush2.msra.mxu0 0.0
    %1238 = vmatprep.subr.mxu0 0.0
    %1239 = vmatpush2.msra.mxu0 0.0
    %1240 = vmatprep.subr.mxu0 0.0
    %1241 = vmatpush2.msra.mxu0 0.0
    %1242 = vmatprep.subr.mxu0 0.0
    %1243 = vmatpush2.msra.mxu0 0.0
    %1244 = vmatprep.subr.mxu0 0.0
    %1245 = vmatpush2.msra.mxu0 0.0
    %1246 = vmatprep.subr.mxu0 0.0
    %1247 = vmatpush2.msra.mxu0 0.0
    %1248 = vmatprep.subr.mxu0 0.0
    %1249 = vmatpush2.msra.mxu0 0.0
    %1250 = vmatprep.mubr.f32.mxu0 0.0
    %1251 = vmatmul.mubr.f32.gmra.mxu0 %v1181
    %v1252 = vpop.f32.mrf.mxu0
    %v1253 = vadd.f32 0.0, %v1252
    %v1254 = vpop.f32.mrf.mxu0
    %1255 = vmatprep.mubr.f32.mxu0 0.0
    %1256 = vmatmul.mubr.f32.gmra.mxu0 %v1184
    %v1257 = vpop.f32.mrf.mxu0
    %v1258 = vadd.f32 0.0, %v1257
    %v1259 = vpop.f32.mrf.mxu0
    %1260 = vdwg.mxu0
    %1261 = vrot.lane.b32.xlu0 %v167, 112
    %v1262 = vpop.permute.xlu0 %1261
    %1263 = vrot.lane.b32.xlu0 %v172, 112
    %v1264 = vpop.permute.xlu0 %1263
    %1265 = vrot.lane.b32.xlu0 %v266, 112
    %v1266 = vpop.permute.xlu0 %1265
    %v1267 = vsel %vm502, %v1262, 0
    %v1269 = vsel %vm502, %v1264, 0
    %v1271 = vsel %vm502, %v1266, 0
    %1273 = vmatprep.subr.mxu0 0.0
    %1274 = vmatpush1.xpose.msra.mxu0 0.0
    %1275 = vmatprep.subr.mxu0 0.0
    %1276 = vmatpush1.xpose.msra.mxu0 0.0
    %1277 = vmatprep.subr.mxu0 0.0
    %1278 = vmatpush1.xpose.msra.mxu0 0.0
    %1279 = vmatprep.subr.mxu0 0.0
    %1280 = vmatpush1.xpose.msra.mxu0 0.0
    %1281 = vmatprep.subr.mxu0 0.0
    %1282 = vmatpush1.xpose.msra.mxu0 0.0
    %1283 = vmatprep.subr.mxu0 0.0
    %1284 = vmatpush1.xpose.msra.mxu0 0.0
    %1285 = vmatprep.subr.mxu0 0.0
    %1286 = vmatpush1.xpose.msra.mxu0 0.0
    %1287 = vmatprep.subr.mxu0 0.0
    %1288 = vmatpush1.xpose.msra.mxu0 0.0
    %1289 = vmatprep.subr.mxu0 0.0
    %1290 = vmatpush1.xpose.msra.mxu0 0.0
    %1291 = vmatprep.subr.mxu0 0.0
    %1292 = vmatpush1.xpose.msra.mxu0 0.0
    %1293 = vmatprep.subr.mxu0 0.0
    %1294 = vmatpush1.xpose.msra.mxu0 0.0
    %1295 = vmatprep.subr.mxu0 0.0
    %1296 = vmatpush1.xpose.msra.mxu0 0.0
    %1297 = vmatprep.subr.mxu0 0.0
    %1298 = vmatpush1.xpose.msra.mxu0 0.0
    %1299 = vmatprep.subr.mxu0 0.0
    %1300 = vmatpush1.xpose.msra.mxu0 0.0
    %1301 = vmatprep.subr.mxu0 0.0
    %1302 = vmatpush1.xpose.msra.mxu0 0.0
    %1303 = vmatprep.subr.mxu0 0.0
    %1304 = vmatpush1.xpose.msra.mxu0 %v1271
    %1305 = vmatprep.subr.mxu0 0.0
    %1306 = vmatpush2.xpose.msra.mxu0 0.0
    %1307 = vmatprep.subr.mxu0 0.0
    %1308 = vmatpush2.xpose.msra.mxu0 0.0
    %1309 = vmatprep.subr.mxu0 0.0
    %1310 = vmatpush2.xpose.msra.mxu0 0.0
    %1311 = vmatprep.subr.mxu0 0.0
    %1312 = vmatpush2.xpose.msra.mxu0 0.0
    %1313 = vmatprep.subr.mxu0 0.0
    %1314 = vmatpush2.xpose.msra.mxu0 0.0
    %1315 = vmatprep.subr.mxu0 0.0
    %1316 = vmatpush2.xpose.msra.mxu0 0.0
    %1317 = vmatprep.subr.mxu0 0.0
    %1318 = vmatpush2.xpose.msra.mxu0 0.0
    %1319 = vmatprep.subr.mxu0 0.0
    %1320 = vmatpush2.xpose.msra.mxu0 0.0
    %1321 = vmatprep.subr.mxu0 0.0
    %1322 = vmatpush2.xpose.msra.mxu0 0.0
    %1323 = vmatprep.subr.mxu0 0.0
    %1324 = vmatpush2.xpose.msra.mxu0 0.0
    %1325 = vmatprep.subr.mxu0 0.0
    %1326 = vmatpush2.xpose.msra.mxu0 0.0
    %1327 = vmatprep.subr.mxu0 0.0
    %1328 = vmatpush2.xpose.msra.mxu0 0.0
    %1329 = vmatprep.subr.mxu0 0.0
    %1330 = vmatpush2.xpose.msra.mxu0 0.0
    %1331 = vmatprep.subr.mxu0 0.0
    %1332 = vmatpush2.xpose.msra.mxu0 0.0
    %1333 = vmatprep.subr.mxu0 0.0
    %1334 = vmatpush2.xpose.msra.mxu0 0.0
    %1335 = vmatprep.subr.mxu0 0.0
    %1336 = vmatpush2.xpose.msra.mxu0 0.0
    %1337 = vmatprep.mubr.f32.mxu0 0.0
    %1338 = vmatmul.mubr.f32.gmra.mxu0 %v1267
    %v1339 = vpop.f32.mrf.mxu0
    %v1340 = vadd.f32 0.0, %v1339
    %v1341 = vpop.f32.mrf.mxu0
    %1342 = vmatprep.mubr.f32.mxu0 0.0
    %1343 = vmatmul.mubr.f32.gmra.mxu0 %v1269
    %v1344 = vpop.f32.mrf.mxu0
    %v1345 = vadd.f32 0.0, %v1344
    %v1346 = vpop.f32.mrf.mxu0
    %1347 = vdwg.mxu0
    %1348 = vrot.lane.b32.xlu0 %v177, 112
    %v1349 = vpop.permute.xlu0 %1348
    %1350 = vrot.lane.b32.xlu0 %v182, 112
    %v1351 = vpop.permute.xlu0 %1350
    %1352 = vrot.lane.b32.xlu0 %v344, 112
    %v1353 = vpop.permute.xlu0 %1352
    %v1354 = vsel %vm502, %v1349, 0
    %v1356 = vsel %vm502, %v1351, 0
    %v1358 = vsel %vm502, %v1353, 0
    %1360 = vmatprep.subr.mxu0 0.0
    %1361 = vmatpush1.xpose.msra.mxu0 0.0
    %1362 = vmatprep.subr.mxu0 0.0
    %1363 = vmatpush1.xpose.msra.mxu0 0.0
    %1364 = vmatprep.subr.mxu0 0.0
    %1365 = vmatpush1.xpose.msra.mxu0 0.0
    %1366 = vmatprep.subr.mxu0 0.0
    %1367 = vmatpush1.xpose.msra.mxu0 0.0
    %1368 = vmatprep.subr.mxu0 0.0
    %1369 = vmatpush1.xpose.msra.mxu0 0.0
    %1370 = vmatprep.subr.mxu0 0.0
    %1371 = vmatpush1.xpose.msra.mxu0 0.0
    %1372 = vmatprep.subr.mxu0 0.0
    %1373 = vmatpush1.xpose.msra.mxu0 0.0
    %1374 = vmatprep.subr.mxu0 0.0
    %1375 = vmatpush1.xpose.msra.mxu0 0.0
    %1376 = vmatprep.subr.mxu0 0.0
    %1377 = vmatpush1.xpose.msra.mxu0 0.0
    %1378 = vmatprep.subr.mxu0 0.0
    %1379 = vmatpush1.xpose.msra.mxu0 0.0
    %1380 = vmatprep.subr.mxu0 0.0
    %1381 = vmatpush1.xpose.msra.mxu0 0.0
    %1382 = vmatprep.subr.mxu0 0.0
    %1383 = vmatpush1.xpose.msra.mxu0 0.0
    %1384 = vmatprep.subr.mxu0 0.0
    %1385 = vmatpush1.xpose.msra.mxu0 0.0
    %1386 = vmatprep.subr.mxu0 0.0
    %1387 = vmatpush1.xpose.msra.mxu0 0.0
    %1388 = vmatprep.subr.mxu0 0.0
    %1389 = vmatpush1.xpose.msra.mxu0 0.0
    %1390 = vmatprep.subr.mxu0 0.0
    %1391 = vmatpush1.xpose.msra.mxu0 %v1358
    %1392 = vmatprep.subr.mxu0 0.0
    %1393 = vmatpush2.xpose.msra.mxu0 0.0
    %1394 = vmatprep.subr.mxu0 0.0
    %1395 = vmatpush2.xpose.msra.mxu0 0.0
    %1396 = vmatprep.subr.mxu0 0.0
    %1397 = vmatpush2.xpose.msra.mxu0 0.0
    %1398 = vmatprep.subr.mxu0 0.0
    %1399 = vmatpush2.xpose.msra.mxu0 0.0
    %1400 = vmatprep.subr.mxu0 0.0
    %1401 = vmatpush2.xpose.msra.mxu0 0.0
    %1402 = vmatprep.subr.mxu0 0.0
    %1403 = vmatpush2.xpose.msra.mxu0 0.0
    %1404 = vmatprep.subr.mxu0 0.0
    %1405 = vmatpush2.xpose.msra.mxu0 0.0
    %1406 = vmatprep.subr.mxu0 0.0
    %1407 = vmatpush2.xpose.msra.mxu0 0.0
    %1408 = vmatprep.subr.mxu0 0.0
    %1409 = vmatpush2.xpose.msra.mxu0 0.0
    %1410 = vmatprep.subr.mxu0 0.0
    %1411 = vmatpush2.xpose.msra.mxu0 0.0
    %1412 = vmatprep.subr.mxu0 0.0
    %1413 = vmatpush2.xpose.msra.mxu0 0.0
    %1414 = vmatprep.subr.mxu0 0.0
    %1415 = vmatpush2.xpose.msra.mxu0 0.0
    %1416 = vmatprep.subr.mxu0 0.0
    %1417 = vmatpush2.xpose.msra.mxu0 0.0
    %1418 = vmatprep.subr.mxu0 0.0
    %1419 = vmatpush2.xpose.msra.mxu0 0.0
    %1420 = vmatprep.subr.mxu0 0.0
    %1421 = vmatpush2.xpose.msra.mxu0 0.0
    %1422 = vmatprep.subr.mxu0 0.0
    %1423 = vmatpush2.xpose.msra.mxu0 0.0
    %1424 = vmatprep.mubr.f32.mxu0 0.0
    %1425 = vmatmul.mubr.f32.gmra.mxu0 %v1354
    %v1426 = vpop.f32.mrf.mxu0
    %v1427 = vadd.f32 0.0, %v1426
    %v1428 = vpop.f32.mrf.mxu0
    %1429 = vmatprep.mubr.f32.mxu0 0.0
    %1430 = vmatmul.mubr.f32.gmra.mxu0 %v1356
    %v1431 = vpop.f32.mrf.mxu0
    %v1432 = vadd.f32 0.0, %v1431
    %v1433 = vpop.f32.mrf.mxu0
    %1434 = vdwg.mxu0
    %v1435 = vsel %vm502, %v1340, -inf
    %1436 = vmax.xlane.f32.xlu0 %v1435
    %v1437 = vpop.xlane.xlu0 %1436
    %v1438 = vsel %vm502, %v1345, -inf
    %1439 = vmax.xlane.f32.xlu0 %v1438
    %v1440 = vpop.xlane.xlu0 %1439
    %v1441 = vsel %vm502, %v1427, -inf
    %1442 = vmax.xlane.f32.xlu0 %v1441
    %v1443 = vpop.xlane.xlu0 %1442
    %v1444 = vsel %vm502, %v1432, -inf
    %1445 = vmax.xlane.f32.xlu0 %v1444
    %v1446 = vpop.xlane.xlu0 %1445
    %v1447 = vsub.f32 %v1340, %v1437
    %v1448 = vsub.f32 %v1345, %v1440
    %v1449 = vsub.f32 %v1427, %v1443
    %v1450 = vsub.f32 %v1432, %v1446
    %v1451 = vmul.f32 %v1447, 1.442695
    %v1452 = vpow.pop %v1451
    %v1453 = vmul.f32 %v1448, 1.442695
    %v1454 = vpow.pop %v1453
    %v1455 = vmul.f32 %v1449, 1.442695
    %v1456 = vpow.pop %v1455
    %v1457 = vmul.f32 %v1450, 1.442695
    %v1458 = vpow.pop %v1457
    %v1459 = vsel %vm502, %v1452, 0.0
    %1460 = vadd.xlane.f32.xlu0 %v1459
    %v1461 = vpop.xlane.xlu0 %1460
    %v1462 = vsel %vm502, %v1454, 0.0
    %1463 = vadd.xlane.f32.xlu0 %v1462
    %v1464 = vpop.xlane.xlu0 %1463
    %v1465 = vsel %vm502, %v1456, 0.0
    %1466 = vadd.xlane.f32.xlu0 %v1465
    %v1467 = vpop.xlane.xlu0 %1466
    %v1468 = vsel %vm502, %v1458, 0.0
    %1469 = vadd.xlane.f32.xlu0 %v1468
    %v1470 = vpop.xlane.xlu0 %1469
    %v1471 = vrcp.pop %v1461
    %v1472 = vrcp.pop %v1464
    %v1473 = vrcp.pop %v1467
    %v1474 = vrcp.pop %v1470
    %v1475 = vmul.f32 %v1452, %v1471
    %v1476 = vmul.f32 %v1454, %v1472
    %v1477 = vmul.f32 %v1456, %v1473
    %v1478 = vmul.f32 %v1458, %v1474
    %1479 = vrot.lane.b32.xlu0 %v423, 112
    %v1480 = vpop.permute.xlu0 %1479
    %v1483 = vsel %vm502, %v1475, 0
    %v1486 = vsel %vm502, %v1476, 0
    %1488 = vmatprep.subr.mxu0 0.0
    %1489 = vmatpush1.msra.mxu0 0.0
    %1490 = vmatprep.subr.mxu0 0.0
    %1491 = vmatpush1.msra.mxu0 0.0
    %1492 = vmatprep.subr.mxu0 0.0
    %1493 = vmatpush1.msra.mxu0 0.0
    %1494 = vmatprep.subr.mxu0 0.0
    %1495 = vmatpush1.msra.mxu0 0.0
    %1496 = vmatprep.subr.mxu0 0.0
    %1497 = vmatpush1.msra.mxu0 0.0
    %1498 = vmatprep.subr.mxu0 0.0
    %1499 = vmatpush1.msra.mxu0 0.0
    %1500 = vmatprep.subr.mxu0 0.0
    %1501 = vmatpush1.msra.mxu0 0.0
    %1502 = vmatprep.subr.mxu0 0.0
    %1503 = vmatpush1.msra.mxu0 0.0
    %1504 = vmatprep.subr.mxu0 0.0
    %1505 = vmatpush1.msra.mxu0 0.0
    %1506 = vmatprep.subr.mxu0 0.0
    %1507 = vmatpush1.msra.mxu0 0.0
    %1508 = vmatprep.subr.mxu0 0.0
    %1509 = vmatpush1.msra.mxu0 0.0
    %1510 = vmatprep.subr.mxu0 0.0
    %1511 = vmatpush1.msra.mxu0 0.0
    %1512 = vmatprep.subr.mxu0 0.0
    %1513 = vmatpush1.msra.mxu0 0.0
    %1514 = vmatprep.subr.mxu0 0.0
    %1515 = vmatpush1.msra.mxu0 0.0
    %1516 = vmatprep.subr.mxu0 0.0
    %1517 = vmatpush1.msra.mxu0 0.0
    %1518 = vmatprep.subr.mxu0 0.0
    %1519 = vmatpush1.msra.mxu0 %v1480
    %1520 = vmatprep.subr.mxu0 0.0
    %1521 = vmatpush2.msra.mxu0 0.0
    %1522 = vmatprep.subr.mxu0 0.0
    %1523 = vmatpush2.msra.mxu0 0.0
    %1524 = vmatprep.subr.mxu0 0.0
    %1525 = vmatpush2.msra.mxu0 0.0
    %1526 = vmatprep.subr.mxu0 0.0
    %1527 = vmatpush2.msra.mxu0 0.0
    %1528 = vmatprep.subr.mxu0 0.0
    %1529 = vmatpush2.msra.mxu0 0.0
    %1530 = vmatprep.subr.mxu0 0.0
    %1531 = vmatpush2.msra.mxu0 0.0
    %1532 = vmatprep.subr.mxu0 0.0
    %1533 = vmatpush2.msra.mxu0 0.0
    %1534 = vmatprep.subr.mxu0 0.0
    %1535 = vmatpush2.msra.mxu0 0.0
    %1536 = vmatprep.subr.mxu0 0.0
    %1537 = vmatpush2.msra.mxu0 0.0
    %1538 = vmatprep.subr.mxu0 0.0
    %1539 = vmatpush2.msra.mxu0 0.0
    %1540 = vmatprep.subr.mxu0 0.0
    %1541 = vmatpush2.msra.mxu0 0.0
    %1542 = vmatprep.subr.mxu0 0.0
    %1543 = vmatpush2.msra.mxu0 0.0
    %1544 = vmatprep.subr.mxu0 0.0
    %1545 = vmatpush2.msra.mxu0 0.0
    %1546 = vmatprep.subr.mxu0 0.0
    %1547 = vmatpush2.msra.mxu0 0.0
    %1548 = vmatprep.subr.mxu0 0.0
    %1549 = vmatpush2.msra.mxu0 0.0
    %1550 = vmatprep.subr.mxu0 0.0
    %1551 = vmatpush2.msra.mxu0 0.0
    %1552 = vmatprep.mubr.f32.mxu0 0.0
    %1553 = vmatmul.mubr.f32.gmra.mxu0 %v1483
    %v1554 = vpop.f32.mrf.mxu0
    %v1555 = vadd.f32 0.0, %v1554
    %v1556 = vpop.f32.mrf.mxu0
    %1557 = vmatprep.mubr.f32.mxu0 0.0
    %1558 = vmatmul.mubr.f32.gmra.mxu0 %v1486
    %v1559 = vpop.f32.mrf.mxu0
    %v1560 = vadd.f32 0.0, %v1559
    %v1561 = vpop.f32.mrf.mxu0
    %1562 = vdwg.mxu0
    %1563 = vrot.lane.b32.xlu0 %v499, 112
    %v1564 = vpop.permute.xlu0 %1563
    %v1567 = vsel %vm502, %v1477, 0
    %v1570 = vsel %vm502, %v1478, 0
    %1572 = vmatprep.subr.mxu0 0.0
    %1573 = vmatpush1.msra.mxu0 0.0
    %1574 = vmatprep.subr.mxu0 0.0
    %1575 = vmatpush1.msra.mxu0 0.0
    %1576 = vmatprep.subr.mxu0 0.0
    %1577 = vmatpush1.msra.mxu0 0.0
    %1578 = vmatprep.subr.mxu0 0.0
    %1579 = vmatpush1.msra.mxu0 0.0
    %1580 = vmatprep.subr.mxu0 0.0
    %1581 = vmatpush1.msra.mxu0 0.0
    %1582 = vmatprep.subr.mxu0 0.0
    %1583 = vmatpush1.msra.mxu0 0.0
    %1584 = vmatprep.subr.mxu0 0.0
    %1585 = vmatpush1.msra.mxu0 0.0
    %1586 = vmatprep.subr.mxu0 0.0
    %1587 = vmatpush1.msra.mxu0 0.0
    %1588 = vmatprep.subr.mxu0 0.0
    %1589 = vmatpush1.msra.mxu0 0.0
    %1590 = vmatprep.subr.mxu0 0.0
    %1591 = vmatpush1.msra.mxu0 0.0
    %1592 = vmatprep.subr.mxu0 0.0
    %1593 = vmatpush1.msra.mxu0 0.0
    %1594 = vmatprep.subr.mxu0 0.0
    %1595 = vmatpush1.msra.mxu0 0.0
    %1596 = vmatprep.subr.mxu0 0.0
    %1597 = vmatpush1.msra.mxu0 0.0
    %1598 = vmatprep.subr.mxu0 0.0
    %1599 = vmatpush1.msra.mxu0 0.0
    %1600 = vmatprep.subr.mxu0 0.0
    %1601 = vmatpush1.msra.mxu0 0.0
    %1602 = vmatprep.subr.mxu0 0.0
    %1603 = vmatpush1.msra.mxu0 %v1564
    %1604 = vmatprep.subr.mxu0 0.0
    %1605 = vmatpush2.msra.mxu0 0.0
    %1606 = vmatprep.subr.mxu0 0.0
    %1607 = vmatpush2.msra.mxu0 0.0
    %1608 = vmatprep.subr.mxu0 0.0
    %1609 = vmatpush2.msra.mxu0 0.0
    %1610 = vmatprep.subr.mxu0 0.0
    %1611 = vmatpush2.msra.mxu0 0.0
    %1612 = vmatprep.subr.mxu0 0.0
    %1613 = vmatpush2.msra.mxu0 0.0
    %1614 = vmatprep.subr.mxu0 0.0
    %1615 = vmatpush2.msra.mxu0 0.0
    %1616 = vmatprep.subr.mxu0 0.0
    %1617 = vmatpush2.msra.mxu0 0.0
    %1618 = vmatprep.subr.mxu0 0.0
    %1619 = vmatpush2.msra.mxu0 0.0
    %1620 = vmatprep.subr.mxu0 0.0
    %1621 = vmatpush2.msra.mxu0 0.0
    %1622 = vmatprep.subr.mxu0 0.0
    %1623 = vmatpush2.msra.mxu0 0.0
    %1624 = vmatprep.subr.mxu0 0.0
    %1625 = vmatpush2.msra.mxu0 0.0
    %1626 = vmatprep.subr.mxu0 0.0
    %1627 = vmatpush2.msra.mxu0 0.0
    %1628 = vmatprep.subr.mxu0 0.0
    %1629 = vmatpush2.msra.mxu0 0.0
    %1630 = vmatprep.subr.mxu0 0.0
    %1631 = vmatpush2.msra.mxu0 0.0
    %1632 = vmatprep.subr.mxu0 0.0
    %1633 = vmatpush2.msra.mxu0 0.0
    %1634 = vmatprep.subr.mxu0 0.0
    %1635 = vmatpush2.msra.mxu0 0.0
    %1636 = vmatprep.mubr.f32.mxu0 0.0
    %1637 = vmatmul.mubr.f32.gmra.mxu0 %v1567
    %v1638 = vpop.f32.mrf.mxu0
    %v1639 = vadd.f32 0.0, %v1638
    %v1640 = vpop.f32.mrf.mxu0
    %1641 = vmatprep.mubr.f32.mxu0 0.0
    %1642 = vmatmul.mubr.f32.gmra.mxu0 %v1570
    %v1643 = vpop.f32.mrf.mxu0
    %v1644 = vadd.f32 0.0, %v1643
    %v1645 = vpop.f32.mrf.mxu0
    %1646 = vdwg.mxu0
    %1647 = vrot.lane.b32.xlu0 %v167, 104
    %v1648 = vpop.permute.xlu0 %1647
    %1649 = vrot.lane.b32.xlu0 %v172, 104
    %v1650 = vpop.permute.xlu0 %1649
    %1651 = vrot.lane.b32.xlu0 %v266, 104
    %v1652 = vpop.permute.xlu0 %1651
    %v1653 = vsel %vm502, %v1648, 0
    %v1655 = vsel %vm502, %v1650, 0
    %v1657 = vsel %vm502, %v1652, 0
    %1659 = vmatprep.subr.mxu0 0.0
    %1660 = vmatpush1.xpose.msra.mxu0 0.0
    %1661 = vmatprep.subr.mxu0 0.0
    %1662 = vmatpush1.xpose.msra.mxu0 0.0
    %1663 = vmatprep.subr.mxu0 0.0
    %1664 = vmatpush1.xpose.msra.mxu0 0.0
    %1665 = vmatprep.subr.mxu0 0.0
    %1666 = vmatpush1.xpose.msra.mxu0 0.0
    %1667 = vmatprep.subr.mxu0 0.0
    %1668 = vmatpush1.xpose.msra.mxu0 0.0
    %1669 = vmatprep.subr.mxu0 0.0
    %1670 = vmatpush1.xpose.msra.mxu0 0.0
    %1671 = vmatprep.subr.mxu0 0.0
    %1672 = vmatpush1.xpose.msra.mxu0 0.0
    %1673 = vmatprep.subr.mxu0 0.0
    %1674 = vmatpush1.xpose.msra.mxu0 0.0
    %1675 = vmatprep.subr.mxu0 0.0
    %1676 = vmatpush1.xpose.msra.mxu0 0.0
    %1677 = vmatprep.subr.mxu0 0.0
    %1678 = vmatpush1.xpose.msra.mxu0 0.0
    %1679 = vmatprep.subr.mxu0 0.0
    %1680 = vmatpush1.xpose.msra.mxu0 0.0
    %1681 = vmatprep.subr.mxu0 0.0
    %1682 = vmatpush1.xpose.msra.mxu0 0.0
    %1683 = vmatprep.subr.mxu0 0.0
    %1684 = vmatpush1.xpose.msra.mxu0 0.0
    %1685 = vmatprep.subr.mxu0 0.0
    %1686 = vmatpush1.xpose.msra.mxu0 0.0
    %1687 = vmatprep.subr.mxu0 0.0
    %1688 = vmatpush1.xpose.msra.mxu0 0.0
    %1689 = vmatprep.subr.mxu0 0.0
    %1690 = vmatpush1.xpose.msra.mxu0 %v1657
    %1691 = vmatprep.subr.mxu0 0.0
    %1692 = vmatpush2.xpose.msra.mxu0 0.0
    %1693 = vmatprep.subr.mxu0 0.0
    %1694 = vmatpush2.xpose.msra.mxu0 0.0
    %1695 = vmatprep.subr.mxu0 0.0
    %1696 = vmatpush2.xpose.msra.mxu0 0.0
    %1697 = vmatprep.subr.mxu0 0.0
    %1698 = vmatpush2.xpose.msra.mxu0 0.0
    %1699 = vmatprep.subr.mxu0 0.0
    %1700 = vmatpush2.xpose.msra.mxu0 0.0
    %1701 = vmatprep.subr.mxu0 0.0
    %1702 = vmatpush2.xpose.msra.mxu0 0.0
    %1703 = vmatprep.subr.mxu0 0.0
    %1704 = vmatpush2.xpose.msra.mxu0 0.0
    %1705 = vmatprep.subr.mxu0 0.0
    %1706 = vmatpush2.xpose.msra.mxu0 0.0
    %1707 = vmatprep.subr.mxu0 0.0
    %1708 = vmatpush2.xpose.msra.mxu0 0.0
    %1709 = vmatprep.subr.mxu0 0.0
    %1710 = vmatpush2.xpose.msra.mxu0 0.0
    %1711 = vmatprep.subr.mxu0 0.0
    %1712 = vmatpush2.xpose.msra.mxu0 0.0
    %1713 = vmatprep.subr.mxu0 0.0
    %1714 = vmatpush2.xpose.msra.mxu0 0.0
    %1715 = vmatprep.subr.mxu0 0.0
    %1716 = vmatpush2.xpose.msra.mxu0 0.0
    %1717 = vmatprep.subr.mxu0 0.0
    %1718 = vmatpush2.xpose.msra.mxu0 0.0
    %1719 = vmatprep.subr.mxu0 0.0
    %1720 = vmatpush2.xpose.msra.mxu0 0.0
    %1721 = vmatprep.subr.mxu0 0.0
    %1722 = vmatpush2.xpose.msra.mxu0 0.0
    %1723 = vmatprep.mubr.f32.mxu0 0.0
    %1724 = vmatmul.mubr.f32.gmra.mxu0 %v1653
    %v1725 = vpop.f32.mrf.mxu0
    %v1726 = vadd.f32 0.0, %v1725
    %v1727 = vpop.f32.mrf.mxu0
    %1728 = vmatprep.mubr.f32.mxu0 0.0
    %1729 = vmatmul.mubr.f32.gmra.mxu0 %v1655
    %v1730 = vpop.f32.mrf.mxu0
    %v1731 = vadd.f32 0.0, %v1730
    %v1732 = vpop.f32.mrf.mxu0
    %1733 = vdwg.mxu0
    %1734 = vrot.lane.b32.xlu0 %v177, 104
    %v1735 = vpop.permute.xlu0 %1734
    %1736 = vrot.lane.b32.xlu0 %v182, 104
    %v1737 = vpop.permute.xlu0 %1736
    %1738 = vrot.lane.b32.xlu0 %v344, 104
    %v1739 = vpop.permute.xlu0 %1738
    %v1740 = vsel %vm502, %v1735, 0
    %v1742 = vsel %vm502, %v1737, 0
    %v1744 = vsel %vm502, %v1739, 0
    %1746 = vmatprep.subr.mxu0 0.0
    %1747 = vmatpush1.xpose.msra.mxu0 0.0
    %1748 = vmatprep.subr.mxu0 0.0
    %1749 = vmatpush1.xpose.msra.mxu0 0.0
    %1750 = vmatprep.subr.mxu0 0.0
    %1751 = vmatpush1.xpose.msra.mxu0 0.0
    %1752 = vmatprep.subr.mxu0 0.0
    %1753 = vmatpush1.xpose.msra.mxu0 0.0
    %1754 = vmatprep.subr.mxu0 0.0
    %1755 = vmatpush1.xpose.msra.mxu0 0.0
    %1756 = vmatprep.subr.mxu0 0.0
    %1757 = vmatpush1.xpose.msra.mxu0 0.0
    %1758 = vmatprep.subr.mxu0 0.0
    %1759 = vmatpush1.xpose.msra.mxu0 0.0
    %1760 = vmatprep.subr.mxu0 0.0
    %1761 = vmatpush1.xpose.msra.mxu0 0.0
    %1762 = vmatprep.subr.mxu0 0.0
    %1763 = vmatpush1.xpose.msra.mxu0 0.0
    %1764 = vmatprep.subr.mxu0 0.0
    %1765 = vmatpush1.xpose.msra.mxu0 0.0
    %1766 = vmatprep.subr.mxu0 0.0
    %1767 = vmatpush1.xpose.msra.mxu0 0.0
    %1768 = vmatprep.subr.mxu0 0.0
    %1769 = vmatpush1.xpose.msra.mxu0 0.0
    %1770 = vmatprep.subr.mxu0 0.0
    %1771 = vmatpush1.xpose.msra.mxu0 0.0
    %1772 = vmatprep.subr.mxu0 0.0
    %1773 = vmatpush1.xpose.msra.mxu0 0.0
    %1774 = vmatprep.subr.mxu0 0.0
    %1775 = vmatpush1.xpose.msra.mxu0 0.0
    %1776 = vmatprep.subr.mxu0 0.0
    %1777 = vmatpush1.xpose.msra.mxu0 %v1744
    %1778 = vmatprep.subr.mxu0 0.0
    %1779 = vmatpush2.xpose.msra.mxu0 0.0
    %1780 = vmatprep.subr.mxu0 0.0
    %1781 = vmatpush2.xpose.msra.mxu0 0.0
    %1782 = vmatprep.subr.mxu0 0.0
    %1783 = vmatpush2.xpose.msra.mxu0 0.0
    %1784 = vmatprep.subr.mxu0 0.0
    %1785 = vmatpush2.xpose.msra.mxu0 0.0
    %1786 = vmatprep.subr.mxu0 0.0
    %1787 = vmatpush2.xpose.msra.mxu0 0.0
    %1788 = vmatprep.subr.mxu0 0.0
    %1789 = vmatpush2.xpose.msra.mxu0 0.0
    %1790 = vmatprep.subr.mxu0 0.0
    %1791 = vmatpush2.xpose.msra.mxu0 0.0
    %1792 = vmatprep.subr.mxu0 0.0
    %1793 = vmatpush2.xpose.msra.mxu0 0.0
    %1794 = vmatprep.subr.mxu0 0.0
    %1795 = vmatpush2.xpose.msra.mxu0 0.0
    %1796 = vmatprep.subr.mxu0 0.0
    %1797 = vmatpush2.xpose.msra.mxu0 0.0
    %1798 = vmatprep.subr.mxu0 0.0
    %1799 = vmatpush2.xpose.msra.mxu0 0.0
    %1800 = vmatprep.subr.mxu0 0.0
    %1801 = vmatpush2.xpose.msra.mxu0 0.0
    %1802 = vmatprep.subr.mxu0 0.0
    %1803 = vmatpush2.xpose.msra.mxu0 0.0
    %1804 = vmatprep.subr.mxu0 0.0
    %1805 = vmatpush2.xpose.msra.mxu0 0.0
    %1806 = vmatprep.subr.mxu0 0.0
    %1807 = vmatpush2.xpose.msra.mxu0 0.0
    %1808 = vmatprep.subr.mxu0 0.0
    %1809 = vmatpush2.xpose.msra.mxu0 0.0
    %1810 = vmatprep.mubr.f32.mxu0 0.0
    %1811 = vmatmul.mubr.f32.gmra.mxu0 %v1740
    %v1812 = vpop.f32.mrf.mxu0
    %v1813 = vadd.f32 0.0, %v1812
    %v1814 = vpop.f32.mrf.mxu0
    %1815 = vmatprep.mubr.f32.mxu0 0.0
    %1816 = vmatmul.mubr.f32.gmra.mxu0 %v1742
    %v1817 = vpop.f32.mrf.mxu0
    %v1818 = vadd.f32 0.0, %v1817
    %v1819 = vpop.f32.mrf.mxu0
    %1820 = vdwg.mxu0
    %v1821 = vsel %vm502, %v1726, -inf
    %1822 = vmax.xlane.f32.xlu0 %v1821
    %v1823 = vpop.xlane.xlu0 %1822
    %v1824 = vsel %vm502, %v1731, -inf
    %1825 = vmax.xlane.f32.xlu0 %v1824
    %v1826 = vpop.xlane.xlu0 %1825
    %v1827 = vsel %vm502, %v1813, -inf
    %1828 = vmax.xlane.f32.xlu0 %v1827
    %v1829 = vpop.xlane.xlu0 %1828
    %v1830 = vsel %vm502, %v1818, -inf
    %1831 = vmax.xlane.f32.xlu0 %v1830
    %v1832 = vpop.xlane.xlu0 %1831
    %v1833 = vsub.f32 %v1726, %v1823
    %v1834 = vsub.f32 %v1731, %v1826
    %v1835 = vsub.f32 %v1813, %v1829
    %v1836 = vsub.f32 %v1818, %v1832
    %v1837 = vmul.f32 %v1833, 1.442695
    %v1838 = vpow.pop %v1837
    %v1839 = vmul.f32 %v1834, 1.442695
    %v1840 = vpow.pop %v1839
    %v1841 = vmul.f32 %v1835, 1.442695
    %v1842 = vpow.pop %v1841
    %v1843 = vmul.f32 %v1836, 1.442695
    %v1844 = vpow.pop %v1843
    %v1845 = vsel %vm502, %v1838, 0.0
    %1846 = vadd.xlane.f32.xlu0 %v1845
    %v1847 = vpop.xlane.xlu0 %1846
    %v1848 = vsel %vm502, %v1840, 0.0
    %1849 = vadd.xlane.f32.xlu0 %v1848
    %v1850 = vpop.xlane.xlu0 %1849
    %v1851 = vsel %vm502, %v1842, 0.0
    %1852 = vadd.xlane.f32.xlu0 %v1851
    %v1853 = vpop.xlane.xlu0 %1852
    %v1854 = vsel %vm502, %v1844, 0.0
    %1855 = vadd.xlane.f32.xlu0 %v1854
    %v1856 = vpop.xlane.xlu0 %1855
    %v1857 = vrcp.pop %v1847
    %v1858 = vrcp.pop %v1850
    %v1859 = vrcp.pop %v1853
    %v1860 = vrcp.pop %v1856
    %v1861 = vmul.f32 %v1838, %v1857
    %v1862 = vmul.f32 %v1840, %v1858
    %v1863 = vmul.f32 %v1842, %v1859
    %v1864 = vmul.f32 %v1844, %v1860
    %1865 = vrot.lane.b32.xlu0 %v423, 104
    %v1866 = vpop.permute.xlu0 %1865
    %v1869 = vsel %vm502, %v1861, 0
    %v1872 = vsel %vm502, %v1862, 0
    %1874 = vmatprep.subr.mxu0 0.0
    %1875 = vmatpush1.msra.mxu0 0.0
    %1876 = vmatprep.subr.mxu0 0.0
    %1877 = vmatpush1.msra.mxu0 0.0
    %1878 = vmatprep.subr.mxu0 0.0
    %1879 = vmatpush1.msra.mxu0 0.0
    %1880 = vmatprep.subr.mxu0 0.0
    %1881 = vmatpush1.msra.mxu0 0.0
    %1882 = vmatprep.subr.mxu0 0.0
    %1883 = vmatpush1.msra.mxu0 0.0
    %1884 = vmatprep.subr.mxu0 0.0
    %1885 = vmatpush1.msra.mxu0 0.0
    %1886 = vmatprep.subr.mxu0 0.0
    %1887 = vmatpush1.msra.mxu0 0.0
    %1888 = vmatprep.subr.mxu0 0.0
    %1889 = vmatpush1.msra.mxu0 0.0
    %1890 = vmatprep.subr.mxu0 0.0
    %1891 = vmatpush1.msra.mxu0 0.0
    %1892 = vmatprep.subr.mxu0 0.0
    %1893 = vmatpush1.msra.mxu0 0.0
    %1894 = vmatprep.subr.mxu0 0.0
    %1895 = vmatpush1.msra.mxu0 0.0
    %1896 = vmatprep.subr.mxu0 0.0
    %1897 = vmatpush1.msra.mxu0 0.0
    %1898 = vmatprep.subr.mxu0 0.0
    %1899 = vmatpush1.msra.mxu0 0.0
    %1900 = vmatprep.subr.mxu0 0.0
    %1901 = vmatpush1.msra.mxu0 0.0
    %1902 = vmatprep.subr.mxu0 0.0
    %1903 = vmatpush1.msra.mxu0 0.0
    %1904 = vmatprep.subr.mxu0 0.0
    %1905 = vmatpush1.msra.mxu0 %v1866
    %1906 = vmatprep.subr.mxu0 0.0
    %1907 = vmatpush2.msra.mxu0 0.0
    %1908 = vmatprep.subr.mxu0 0.0
    %1909 = vmatpush2.msra.mxu0 0.0
    %1910 = vmatprep.subr.mxu0 0.0
    %1911 = vmatpush2.msra.mxu0 0.0
    %1912 = vmatprep.subr.mxu0 0.0
    %1913 = vmatpush2.msra.mxu0 0.0
    %1914 = vmatprep.subr.mxu0 0.0
    %1915 = vmatpush2.msra.mxu0 0.0
    %1916 = vmatprep.subr.mxu0 0.0
    %1917 = vmatpush2.msra.mxu0 0.0
    %1918 = vmatprep.subr.mxu0 0.0
    %1919 = vmatpush2.msra.mxu0 0.0
    %1920 = vmatprep.subr.mxu0 0.0
    %1921 = vmatpush2.msra.mxu0 0.0
    %1922 = vmatprep.subr.mxu0 0.0
    %1923 = vmatpush2.msra.mxu0 0.0
    %1924 = vmatprep.subr.mxu0 0.0
    %1925 = vmatpush2.msra.mxu0 0.0
    %1926 = vmatprep.subr.mxu0 0.0
    %1927 = vmatpush2.msra.mxu0 0.0
    %1928 = vmatprep.subr.mxu0 0.0
    %1929 = vmatpush2.msra.mxu0 0.0
    %1930 = vmatprep.subr.mxu0 0.0
    %1931 = vmatpush2.msra.mxu0 0.0
    %1932 = vmatprep.subr.mxu0 0.0
    %1933 = vmatpush2.msra.mxu0 0.0
    %1934 = vmatprep.subr.mxu0 0.0
    %1935 = vmatpush2.msra.mxu0 0.0
    %1936 = vmatprep.subr.mxu0 0.0
    %1937 = vmatpush2.msra.mxu0 0.0
    %1938 = vmatprep.mubr.f32.mxu0 0.0
    %1939 = vmatmul.mubr.f32.gmra.mxu0 %v1869
    %v1940 = vpop.f32.mrf.mxu0
    %v1941 = vadd.f32 0.0, %v1940
    %v1942 = vpop.f32.mrf.mxu0
    %1943 = vmatprep.mubr.f32.mxu0 0.0
    %1944 = vmatmul.mubr.f32.gmra.mxu0 %v1872
    %v1945 = vpop.f32.mrf.mxu0
    %v1946 = vadd.f32 0.0, %v1945
    %v1947 = vpop.f32.mrf.mxu0
    %1948 = vdwg.mxu0
    %1949 = vrot.lane.b32.xlu0 %v499, 104
    %v1950 = vpop.permute.xlu0 %1949
    %v1953 = vsel %vm502, %v1863, 0
    %v1956 = vsel %vm502, %v1864, 0
    %1958 = vmatprep.subr.mxu0 0.0
    %1959 = vmatpush1.msra.mxu0 0.0
    %1960 = vmatprep.subr.mxu0 0.0
    %1961 = vmatpush1.msra.mxu0 0.0
    %1962 = vmatprep.subr.mxu0 0.0
    %1963 = vmatpush1.msra.mxu0 0.0
    %1964 = vmatprep.subr.mxu0 0.0
    %1965 = vmatpush1.msra.mxu0 0.0
    %1966 = vmatprep.subr.mxu0 0.0
    %1967 = vmatpush1.msra.mxu0 0.0
    %1968 = vmatprep.subr.mxu0 0.0
    %1969 = vmatpush1.msra.mxu0 0.0
    %1970 = vmatprep.subr.mxu0 0.0
    %1971 = vmatpush1.msra.mxu0 0.0
    %1972 = vmatprep.subr.mxu0 0.0
    %1973 = vmatpush1.msra.mxu0 0.0
    %1974 = vmatprep.subr.mxu0 0.0
    %1975 = vmatpush1.msra.mxu0 0.0
    %1976 = vmatprep.subr.mxu0 0.0
    %1977 = vmatpush1.msra.mxu0 0.0
    %1978 = vmatprep.subr.mxu0 0.0
    %1979 = vmatpush1.msra.mxu0 0.0
    %1980 = vmatprep.subr.mxu0 0.0
    %1981 = vmatpush1.msra.mxu0 0.0
    %1982 = vmatprep.subr.mxu0 0.0
    %1983 = vmatpush1.msra.mxu0 0.0
    %1984 = vmatprep.subr.mxu0 0.0
    %1985 = vmatpush1.msra.mxu0 0.0
    %1986 = vmatprep.subr.mxu0 0.0
    %1987 = vmatpush1.msra.mxu0 0.0
    %1988 = vmatprep.subr.mxu0 0.0
    %1989 = vmatpush1.msra.mxu0 %v1950
    %1990 = vmatprep.subr.mxu0 0.0
    %1991 = vmatpush2.msra.mxu0 0.0
    %1992 = vmatprep.subr.mxu0 0.0
    %1993 = vmatpush2.msra.mxu0 0.0
    %1994 = vmatprep.subr.mxu0 0.0
    %1995 = vmatpush2.msra.mxu0 0.0
    %1996 = vmatprep.subr.mxu0 0.0
    %1997 = vmatpush2.msra.mxu0 0.0
    %1998 = vmatprep.subr.mxu0 0.0
    %1999 = vmatpush2.msra.mxu0 0.0
    %2000 = vmatprep.subr.mxu0 0.0
    %2001 = vmatpush2.msra.mxu0 0.0
    %2002 = vmatprep.subr.mxu0 0.0
    %2003 = vmatpush2.msra.mxu0 0.0
    %2004 = vmatprep.subr.mxu0 0.0
    %2005 = vmatpush2.msra.mxu0 0.0
    %2006 = vmatprep.subr.mxu0 0.0
    %2007 = vmatpush2.msra.mxu0 0.0
    %2008 = vmatprep.subr.mxu0 0.0
    %2009 = vmatpush2.msra.mxu0 0.0
    %2010 = vmatprep.subr.mxu0 0.0
    %2011 = vmatpush2.msra.mxu0 0.0
    %2012 = vmatprep.subr.mxu0 0.0
    %2013 = vmatpush2.msra.mxu0 0.0
    %2014 = vmatprep.subr.mxu0 0.0
    %2015 = vmatpush2.msra.mxu0 0.0
    %2016 = vmatprep.subr.mxu0 0.0
    %2017 = vmatpush2.msra.mxu0 0.0
    %2018 = vmatprep.subr.mxu0 0.0
    %2019 = vmatpush2.msra.mxu0 0.0
    %2020 = vmatprep.subr.mxu0 0.0
    %2021 = vmatpush2.msra.mxu0 0.0
    %2022 = vmatprep.mubr.f32.mxu0 0.0
    %2023 = vmatmul.mubr.f32.gmra.mxu0 %v1953
    %v2024 = vpop.f32.mrf.mxu0
    %v2025 = vadd.f32 0.0, %v2024
    %v2026 = vpop.f32.mrf.mxu0
    %2027 = vmatprep.mubr.f32.mxu0 0.0
    %2028 = vmatmul.mubr.f32.gmra.mxu0 %v1956
    %v2029 = vpop.f32.mrf.mxu0
    %v2030 = vadd.f32 0.0, %v2029
    %v2031 = vpop.f32.mrf.mxu0
    %2032 = vdwg.mxu0
    %2037 = vrot.lane.b32.xlu0 %v1168, 8
    %v2038 = vpop.permute.xlu0 %2037
    %2039 = vrot.lane.b32.xlu0 %v1173, 8
    %v2040 = vpop.permute.xlu0 %2039
    %2041 = vrot.lane.b32.xlu0 %v1253, 8
    %v2042 = vpop.permute.xlu0 %2041
    %2043 = vrot.lane.b32.xlu0 %v1258, 8
    %v2044 = vpop.permute.xlu0 %2043
    %2053 = vrot.lane.b32.xlu0 %v1555, 16
    %v2054 = vpop.permute.xlu0 %2053
    %2055 = vrot.lane.b32.xlu0 %v1560, 16
    %v2056 = vpop.permute.xlu0 %2055
    %2057 = vrot.lane.b32.xlu0 %v1639, 16
    %v2058 = vpop.permute.xlu0 %2057
    %2059 = vrot.lane.b32.xlu0 %v1644, 16
    %v2060 = vpop.permute.xlu0 %2059
    %2069 = vrot.lane.b32.xlu0 %v1941, 24
    %v2070 = vpop.permute.xlu0 %2069
    %2071 = vrot.lane.b32.xlu0 %v1946, 24
    %v2072 = vpop.permute.xlu0 %2071
    %2073 = vrot.lane.b32.xlu0 %v2025, 24
    %v2074 = vpop.permute.xlu0 %2073
    %2075 = vrot.lane.b32.xlu0 %v2030, 24
    %v2076 = vpop.permute.xlu0 %2075
    %v2081 = vsel %vm502, %v784, %v2038
    %v2082 = vsel %vm502, %v789, %v2040
    %v2083 = vsel %vm502, %v865, %v2042
    %v2084 = vsel %vm502, %v870, %v2044
    %v2085 = vsel %vm195, %v2081, %v2054
    %v2086 = vsel %vm195, %v2082, %v2056
    %v2087 = vsel %vm195, %v2083, %v2058
    %v2088 = vsel %vm195, %v2084, %v2060
    %vm2089 = vcmask 195584
    %v2090 = vsel %vm2089, %v2085, %v2070
    %v2091 = vsel %vm2089, %v2086, %v2072
    %v2092 = vsel %vm2089, %v2087, %v2074
    %v2093 = vsel %vm2089, %v2088, %v2076
    %2094 = vst.msk [vmem:[#allocation10] sm:$0xff] %vm87, %v2090
    %2095 = vst.msk [vmem:[#allocation10 + $0x8] sm:$0xff] %vm87, %v2091
    %2096 = vst.msk [vmem:[#allocation10 + $0x10] sm:$0xff] %vm87, %v2092
    %2097 = vst.msk [vmem:[#allocation10 + $0x18] sm:$0xff] %vm87, %v2093
    // Predicated region
    $region38: #{tpu_custom_call.1} parent=1 // pred_check
      _
    $region39: #{tpu_custom_call.1} parent=1 // pred_check_branch
      %2099 = sbr.rel (0) target = $region41
    $region40: #{tpu_custom_call.1} parent=1 // pred_region
      %s2101 = ssub.s32 512, 512
      %2102 = vsyncadd [#allocation4], %s2101
      %s2103 = sshll.u32 [#allocation10], 4
      %s2104 = int_to_ptr.vmem [resolvable:$true] %s2103
      %2109 = dma.vmem_to_hbm [thread:$0]  %s2104, 512, %s5, [#allocation4], 128, 128, 8
    $region41: #{tpu_custom_call.1} parent=1 // pred_fallthru
      _
    // Predicated region
    $region42: #{tpu_custom_call.1} parent=1 // pred_check
      _
    $region43: #{tpu_custom_call.1} parent=1 // pred_check_branch
      %2111 = sbr.rel (0) target = $region45
    $region44: #{tpu_custom_call.1} parent=1 // pred_region
      %2112 = dma.done [#allocation4], 512
    $region45: #{tpu_custom_call.1} parent=1 // pred_fallthru
      _
    %2113 = vsyncpa [#allocation3], 1
    %2114 = vsyncpa [#allocation6], 1
    %2115 = vsyncpa [#allocation9], 1
    %2116 = vsyncpa [#allocation4], 1

// kernel: tpu_custom_call.1
$region0: #{tpu_custom_call.1}
  #allocation0 [shape = 'u32[]', space=smem, size = 0x4, offset = 0x4, fixed_abs, tag = 'smem constant byte address 0x4 - core index']
  #allocation1 [shape = 'u32[144,128]{1,0:T(1,128)}', space=vmem, size = 0x12000, scoped, tag = 'internal scratch']
  %s0 = inlined_call_operand.hbm [shape: f32[32,32], index: 0, kind: input, shape index: {}]
  %s1 = inlined_call_operand.hbm [shape: f32[32,96], index: 1, kind: input, shape index: {}]
  %s2 = inlined_call_operand.vmem [shape: f32[1,96], index: 2, kind: input, shape index: {}]
  %s3 = inlined_call_operand.hbm [shape: f32[8,16], index: 3, kind: input, shape index: {}]
  %s4 = inlined_call_operand.hbm [shape: f32[8,16], index: 4, kind: input, shape index: {}]
  %s5 = inlined_call_operand.hbm [shape: f32[32,32], index: 5, kind: output, shape index: {}]
  %s6 = sld [smem:[#allocation0]]
  $region46: #{tpu_custom_call.1} parent=0
    _
  %s8 = ssub.s32 1, %s6
  %s9 = scalar_select 0, %s8, %s6
  $region1: #{tpu_custom_call.1} parent=0
    #allocation2 [shape = 'u8[16384]{0}', space=vmem, size = 0x4000, scoped, tag = 'input window, operand 0, single buffered']
    #allocation3 [shape = 's32[1]{0}', space=sflag, size = 0x4, scoped, tag = 'scoped memory for tpu_custom_call.1']
    #allocation4 [shape = 's32[1]{0}', space=sflag, size = 0x4, scoped, tag = 'scoped memory for tpu_custom_call.1']
    #allocation5 [shape = 'u8[16384]{0}', space=vmem, size = 0x4000, scoped, tag = 'input window, operand 1, single buffered']
    #allocation6 [shape = 's32[1]{0}', space=sflag, size = 0x4, scoped, tag = 'scoped memory for tpu_custom_call.1']
    #allocation7 [shape = 'u8[4096]{0}', space=vmem, size = 0x1000, scoped, tag = 'input window, operand 3, single buffered']
    #allocation8 [shape = 'u8[4096]{0}', space=vmem, size = 0x1000, scoped, tag = 'input window, operand 4, single buffered']
    #allocation9 [shape = 's32[1]{0}', space=sflag, size = 0x4, scoped, tag = 'scoped memory for tpu_custom_call.1']
    #allocation10 [shape = 'u8[16384]{0}', space=vmem, size = 0x4000, scoped, tag = 'output window, operand 0, single buffered']
    %10 = vsyncpa [#allocation3], 0
    %11 = vsyncpa [#allocation6], 0
    %12 = vsyncpa [#allocation9], 0
    %13 = vsyncpa [#allocation4], 0
    // Predicated region
    $region2: #{tpu_custom_call.1} parent=1 // pred_check
      _
    $region3: #{tpu_custom_call.1} parent=1 // pred_check_branch
      %15 = sbr.rel (0) target = $region5
    $region4: #{tpu_custom_call.1} parent=1 // pred_region
      %s17 = ssub.s32 512, 512
      %18 = vsyncadd [#allocation3], %s17
      %s19 = sshll.u32 [#allocation2], 4
      %s20 = int_to_ptr.vmem [resolvable:$true] %s19
      %25 = dma.hbm_to_vmem [thread:$0]  %s0, 512, %s20, [#allocation3], 128, 128, 8
    $region5: #{tpu_custom_call.1} parent=1 // pred_fallthru
      _
    // Predicated region
    $region6: #{tpu_custom_call.1} parent=1 // pred_check
      _
    $region7: #{tpu_custom_call.1} parent=1 // pred_check_branch
      %27 = sbr.rel (0) target = $region9
    $region8: #{tpu_custom_call.1} parent=1 // pred_region
      %s29 = ssub.s32 512, 512
      %30 = vsyncadd [#allocation6], %s29
      %s31 = sshll.u32 [#allocation5], 4
      %s32 = int_to_ptr.vmem [resolvable:$true] %s31
      %37 = dma.hbm_to_vmem [thread:$0]  %s1, 512, %s32, [#allocation6], 128, 128, 8
    $region9: #{tpu_custom_call.1} parent=1 // pred_fallthru
      _
    // Predicated region
    $region10: #{tpu_custom_call.1} parent=1 // pred_check
      _
    $region11: #{tpu_custom_call.1} parent=1 // pred_check_branch
      %39 = sbr.rel (0) target = $region13
    $region12: #{tpu_custom_call.1} parent=1 // pred_region
      _
    $region13: #{tpu_custom_call.1} parent=1 // pred_fallthru
      _
    // Predicated region
    $region14: #{tpu_custom_call.1} parent=1 // pred_check
      _
    $region15: #{tpu_custom_call.1} parent=1 // pred_check_branch
      %41 = sbr.rel (0) target = $region17
    $region16: #{tpu_custom_call.1} parent=1 // pred_region
      %s43 = ssub.s32 128, 128
      %44 = vsyncadd [#allocation6], %s43
      %s46 = sshll.u32 [#allocation7], 4
      %s47 = int_to_ptr.vmem [resolvable:$true] %s46
      %49 = dma.hbm_to_vmem [thread:$0]  %s3, 128, %s47, [#allocation6]
    $region17: #{tpu_custom_call.1} parent=1 // pred_fallthru
      _
    // Predicated region
    $region18: #{tpu_custom_call.1} parent=1 // pred_check
      _
    $region19: #{tpu_custom_call.1} parent=1 // pred_check_branch
      %51 = sbr.rel (0) target = $region21
    $region20: #{tpu_custom_call.1} parent=1 // pred_region
      %s53 = ssub.s32 128, 128
      %54 = vsyncadd [#allocation9], %s53
      %s56 = sshll.u32 [#allocation8], 4
      %s57 = int_to_ptr.vmem [resolvable:$true] %s56
      %59 = dma.hbm_to_vmem [thread:$0]  %s4, 128, %s57, [#allocation9]
    $region21: #{tpu_custom_call.1} parent=1 // pred_fallthru
      _
    // Predicated region
    $region22: #{tpu_custom_call.1} parent=1 // pred_check
      _
    $region23: #{tpu_custom_call.1} parent=1 // pred_check_branch
      %61 = sbr.rel (0) target = $region25
    $region24: #{tpu_custom_call.1} parent=1 // pred_region
      %62 = dma.done [#allocation3], 512
    $region25: #{tpu_custom_call.1} parent=1 // pred_fallthru
      _
    // Predicated region
    $region26: #{tpu_custom_call.1} parent=1 // pred_check
      _
    $region27: #{tpu_custom_call.1} parent=1 // pred_check_branch
      %64 = sbr.rel (0) target = $region29
    $region28: #{tpu_custom_call.1} parent=1 // pred_region
      %65 = dma.done [#allocation6], 512
    $region29: #{tpu_custom_call.1} parent=1 // pred_fallthru
      _
    // Predicated region
    $region30: #{tpu_custom_call.1} parent=1 // pred_check
      _
    $region31: #{tpu_custom_call.1} parent=1 // pred_check_branch
      %67 = sbr.rel (0) target = $region33
    $region32: #{tpu_custom_call.1} parent=1 // pred_region
      %68 = dma.done [#allocation6], 128
    $region33: #{tpu_custom_call.1} parent=1 // pred_fallthru
      _
    // Predicated region
    $region34: #{tpu_custom_call.1} parent=1 // pred_check
      _
    $region35: #{tpu_custom_call.1} parent=1 // pred_check_branch
      %70 = sbr.rel (0) target = $region37
    $region36: #{tpu_custom_call.1} parent=1 // pred_region
      %71 = dma.done [#allocation9], 128
    $region37: #{tpu_custom_call.1} parent=1 // pred_fallthru
      _
    %v72 = vld [vmem:[#allocation2] sm:$0xff]
    %v73 = vld [vmem:[#allocation2 + $0x8] sm:$0xff]
    %v74 = vld [vmem:[#allocation2 + $0x10] sm:$0xff]
    %v75 = vld [vmem:[#allocation2 + $0x18] sm:$0xff]
    %v76 = vld [vmem:[#allocation5] sm:$0xff]
    %v77 = vld [vmem:[#allocation5 + $0x8] sm:$0xff]
    %v78 = vld [vmem:[#allocation5 + $0x10] sm:$0xff]
    %v79 = vld [vmem:[#allocation5 + $0x18] sm:$0xff]
    %v80 = vld [vmem:[%s2] sm:$0x1]
    %v82 = vlaneseq
    %v83 = vshrl.u32 %v82, 7
    %v84 = vsub.s32 0, %v83
    %v85 = vrot.slane %v80, %v84
    %vm87 = vcmask 261120
    %v89 = vsel %vm87, %v72, 0
    %v92 = vsel %vm87, %v73, 0
    %v95 = vsel %vm87, %v74, 0
    %v98 = vsel %vm87, %v75, 0
    %100 = vmatprep.subr.mxu0 0.0
    %101 = vmatpush1.msra.mxu0 0.0
    %102 = vmatprep.subr.mxu0 0.0
    %103 = vmatpush1.msra.mxu0 0.0
    %104 = vmatprep.subr.mxu0 0.0
    %105 = vmatpush1.msra.mxu0 0.0
    %106 = vmatprep.subr.mxu0 0.0
    %107 = vmatpush1.msra.mxu0 0.0
    %108 = vmatprep.subr.mxu0 0.0
    %109 = vmatpush1.msra.mxu0 0.0
    %110 = vmatprep.subr.mxu0 0.0
    %111 = vmatpush1.msra.mxu0 0.0
    %112 = vmatprep.subr.mxu0 0.0
    %113 = vmatpush1.msra.mxu0 0.0
    %114 = vmatprep.subr.mxu0 0.0
    %115 = vmatpush1.msra.mxu0 0.0
    %116 = vmatprep.subr.mxu0 0.0
    %117 = vmatpush1.msra.mxu0 0.0
    %118 = vmatprep.subr.mxu0 0.0
    %119 = vmatpush1.msra.mxu0 0.0
    %120 = vmatprep.subr.mxu0 0.0
    %121 = vmatpush1.msra.mxu0 0.0
    %122 = vmatprep.subr.mxu0 0.0
    %123 = vmatpush1.msra.mxu0 0.0
    %124 = vmatprep.subr.mxu0 0.0
    %125 = vmatpush1.msra.mxu0 %v79
    %126 = vmatprep.subr.mxu0 0.0
    %127 = vmatpush1.msra.mxu0 %v78
    %128 = vmatprep.subr.mxu0 0.0
    %129 = vmatpush1.msra.mxu0 %v77
    %130 = vmatprep.subr.mxu0 0.0
    %131 = vmatpush1.msra.mxu0 %v76
    %132 = vmatprep.subr.mxu0 0.0
    %133 = vmatpush2.msra.mxu0 0.0
    %134 = vmatprep.subr.mxu0 0.0
    %135 = vmatpush2.msra.mxu0 0.0
    %136 = vmatprep.subr.mxu0 0.0
    %137 = vmatpush2.msra.mxu0 0.0
    %138 = vmatprep.subr.mxu0 0.0
    %139 = vmatpush2.msra.mxu0 0.0
    %140 = vmatprep.subr.mxu0 0.0
    %141 = vmatpush2.msra.mxu0 0.0
    %142 = vmatprep.subr.mxu0 0.0
    %143 = vmatpush2.msra.mxu0 0.0
    %144 = vmatprep.subr.mxu0 0.0
    %145 = vmatpush2.msra.mxu0 0.0
    %146 = vmatprep.subr.mxu0 0.0
    %147 = vmatpush2.msra.mxu0 0.0
    %148 = vmatprep.subr.mxu0 0.0
    %149 = vmatpush2.msra.mxu0 0.0
    %150 = vmatprep.subr.mxu0 0.0
    %151 = vmatpush2.msra.mxu0 0.0
    %152 = vmatprep.subr.mxu0 0.0
    %153 = vmatpush2.msra.mxu0 0.0
    %154 = vmatprep.subr.mxu0 0.0
    %155 = vmatpush2.msra.mxu0 0.0
    %156 = vmatprep.subr.mxu0 0.0
    %157 = vmatpush2.msra.mxu0 0.0
    %158 = vmatprep.subr.mxu0 0.0
    %159 = vmatpush2.msra.mxu0 0.0
    %160 = vmatprep.subr.mxu0 0.0
    %161 = vmatpush2.msra.mxu0 0.0
    %162 = vmatprep.subr.mxu0 0.0
    %163 = vmatpush2.msra.mxu0 0.0
    %164 = vmatprep.mubr.f32.mxu0 0.0
    %165 = vmatmul.mubr.f32.gmra.mxu0 %v89
    %v166 = vpop.f32.mrf.mxu0
    %v167 = vadd.f32 %v85, %v166
    %v168 = vpop.f32.mrf.mxu0
    %169 = vmatprep.mubr.f32.mxu0 0.0
    %170 = vmatmul.mubr.f32.gmra.mxu0 %v92
    %v171 = vpop.f32.mrf.mxu0
    %v172 = vadd.f32 %v85, %v171
    %v173 = vpop.f32.mrf.mxu0
    %174 = vmatprep.mubr.f32.mxu0 0.0
    %175 = vmatmul.mubr.f32.gmra.mxu0 %v95
    %v176 = vpop.f32.mrf.mxu0
    %v177 = vadd.f32 %v85, %v176
    %v178 = vpop.f32.mrf.mxu0
    %179 = vmatprep.mubr.f32.mxu0 0.0
    %180 = vmatmul.mubr.f32.gmra.mxu0 %v98
    %v181 = vpop.f32.mrf.mxu0
    %v182 = vadd.f32 %v85, %v181
    %v183 = vpop.f32.mrf.mxu0
    %184 = vdwg.mxu0
    %v185 = vld [vmem:[#allocation7] sm:$0xff]
    %v186 = vld [vmem:[#allocation8] sm:$0xff]
    %189 = vrot.lane.b32.xlu0 %v167, 96
    %v190 = vpop.permute.xlu0 %189
    %191 = vrot.lane.b32.xlu0 %v172, 96
    %v192 = vpop.permute.xlu0 %191
    %vm195 = vcmask 130048
    %v197 = vsel %vm195, %v185, 0
    %199 = vmatprep.subr.mxu0 0.0
    %200 = vmatpush1.msra.mxu0 0.0
    %201 = vmatprep.subr.mxu0 0.0
    %202 = vmatpush1.msra.mxu0 0.0
    %203 = vmatprep.subr.mxu0 0.0
    %204 = vmatpush1.msra.mxu0 0.0
    %205 = vmatprep.subr.mxu0 0.0
    %206 = vmatpush1.msra.mxu0 0.0
    %207 = vmatprep.subr.mxu0 0.0
    %208 = vmatpush1.msra.mxu0 0.0
    %209 = vmatprep.subr.mxu0 0.0
    %210 = vmatpush1.msra.mxu0 0.0
    %211 = vmatprep.subr.mxu0 0.0
    %212 = vmatpush1.msra.mxu0 0.0
    %213 = vmatprep.subr.mxu0 0.0
    %214 = vmatpush1.msra.mxu0 0.0
    %215 = vmatprep.subr.mxu0 0.0
    %216 = vmatpush1.msra.mxu0 0.0
    %217 = vmatprep.subr.mxu0 0.0
    %218 = vmatpush1.msra.mxu0 0.0
    %219 = vmatprep.subr.mxu0 0.0
    %220 = vmatpush1.msra.mxu0 0.0
    %221 = vmatprep.subr.mxu0 0.0
    %222 = vmatpush1.msra.mxu0 0.0
    %223 = vmatprep.subr.mxu0 0.0
    %224 = vmatpush1.msra.mxu0 0.0
    %225 = vmatprep.subr.mxu0 0.0
    %226 = vmatpush1.msra.mxu0 0.0
    %227 = vmatprep.subr.mxu0 0.0
    %228 = vmatpush1.msra.mxu0 %v192
    %229 = vmatprep.subr.mxu0 0.0
    %230 = vmatpush1.msra.mxu0 %v190
    %231 = vmatprep.subr.mxu0 0.0
    %232 = vmatpush2.msra.mxu0 0.0
    %233 = vmatprep.subr.mxu0 0.0
    %234 = vmatpush2.msra.mxu0 0.0
    %235 = vmatprep.subr.mxu0 0.0
    %236 = vmatpush2.msra.mxu0 0.0
    %237 = vmatprep.subr.mxu0 0.0
    %238 = vmatpush2.msra.mxu0 0.0
    %239 = vmatprep.subr.mxu0 0.0
    %240 = vmatpush2.msra.mxu0 0.0
    %241 = vmatprep.subr.mxu0 0.0
    %242 = vmatpush2.msra.mxu0 0.0
    %243 = vmatprep.subr.mxu0 0.0
    %244 = vmatpush2.msra.mxu0 0.0
    %245 = vmatprep.subr.mxu0 0.0
    %246 = vmatpush2.msra.mxu0 0.0
    %247 = vmatprep.subr.mxu0 0.0
    %248 = vmatpush2.msra.mxu0 0.0
    %249 = vmatprep.subr.mxu0 0.0
    %250 = vmatpush2.msra.mxu0 0.0
    %251 = vmatprep.subr.mxu0 0.0
    %252 = vmatpush2.msra.mxu0 0.0
    %253 = vmatprep.subr.mxu0 0.0
    %254 = vmatpush2.msra.mxu0 0.0
    %255 = vmatprep.subr.mxu0 0.0
    %256 = vmatpush2.msra.mxu0 0.0
    %257 = vmatprep.subr.mxu0 0.0
    %258 = vmatpush2.msra.mxu0 0.0
    %259 = vmatprep.subr.mxu0 0.0
    %260 = vmatpush2.msra.mxu0 0.0
    %261 = vmatprep.subr.mxu0 0.0
    %262 = vmatpush2.msra.mxu0 0.0
    %263 = vmatprep.mubr.f32.mxu0 0.0
    %264 = vmatmul.mubr.f32.gmra.mxu0 %v197
    %v265 = vpop.f32.mrf.mxu0
    %v266 = vadd.f32 0.0, %v265
    %v267 = vpop.f32.mrf.mxu0
    %268 = vdwg.mxu0
    %271 = vrot.lane.b32.xlu0 %v177, 96
    %v272 = vpop.permute.xlu0 %271
    %273 = vrot.lane.b32.xlu0 %v182, 96
    %v274 = vpop.permute.xlu0 %273
    %277 = vmatprep.subr.mxu0 0.0
    %278 = vmatpush1.msra.mxu0 0.0
    %279 = vmatprep.subr.mxu0 0.0
    %280 = vmatpush1.msra.mxu0 0.0
    %281 = vmatprep.subr.mxu0 0.0
    %282 = vmatpush1.msra.mxu0 0.0
    %283 = vmatprep.subr.mxu0 0.0
    %284 = vmatpush1.msra.mxu0 0.0
    %285 = vmatprep.subr.mxu0 0.0
    %286 = vmatpush1.msra.mxu0 0.0
    %287 = vmatprep.subr.mxu0 0.0
    %288 = vmatpush1.msra.mxu0 0.0
    %289 = vmatprep.subr.mxu0 0.0
    %290 = vmatpush1.msra.mxu0 0.0
    %291 = vmatprep.subr.mxu0 0.0
    %292 = vmatpush1.msra.mxu0 0.0
    %293 = vmatprep.subr.mxu0 0.0
    %294 = vmatpush1.msra.mxu0 0.0
    %295 = vmatprep.subr.mxu0 0.0
    %296 = vmatpush1.msra.mxu0 0.0
    %297 = vmatprep.subr.mxu0 0.0
    %298 = vmatpush1.msra.mxu0 0.0
    %299 = vmatprep.subr.mxu0 0.0
    %300 = vmatpush1.msra.mxu0 0.0
    %301 = vmatprep.subr.mxu0 0.0
    %302 = vmatpush1.msra.mxu0 0.0
    %303 = vmatprep.subr.mxu0 0.0
    %304 = vmatpush1.msra.mxu0 0.0
    %305 = vmatprep.subr.mxu0 0.0
    %306 = vmatpush1.msra.mxu0 %v274
    %307 = vmatprep.subr.mxu0 0.0
    %308 = vmatpush1.msra.mxu0 %v272
    %309 = vmatprep.subr.mxu0 0.0
    %310 = vmatpush2.msra.mxu0 0.0
    %311 = vmatprep.subr.mxu0 0.0
    %312 = vmatpush2.msra.mxu0 0.0
    %313 = vmatprep.subr.mxu0 0.0
    %314 = vmatpush2.msra.mxu0 0.0
    %315 = vmatprep.subr.mxu0 0.0
    %316 = vmatpush2.msra.mxu0 0.0
    %317 = vmatprep.subr.mxu0 0.0
    %318 = vmatpush2.msra.mxu0 0.0
    %319 = vmatprep.subr.mxu0 0.0
    %320 = vmatpush2.msra.mxu0 0.0
    %321 = vmatprep.subr.mxu0 0.0
    %322 = vmatpush2.msra.mxu0 0.0
    %323 = vmatprep.subr.mxu0 0.0
    %324 = vmatpush2.msra.mxu0 0.0
    %325 = vmatprep.subr.mxu0 0.0
    %326 = vmatpush2.msra.mxu0 0.0
    %327 = vmatprep.subr.mxu0 0.0
    %328 = vmatpush2.msra.mxu0 0.0
    %329 = vmatprep.subr.mxu0 0.0
    %330 = vmatpush2.msra.mxu0 0.0
    %331 = vmatprep.subr.mxu0 0.0
    %332 = vmatpush2.msra.mxu0 0.0
    %333 = vmatprep.subr.mxu0 0.0
    %334 = vmatpush2.msra.mxu0 0.0
    %335 = vmatprep.subr.mxu0 0.0
    %336 = vmatpush2.msra.mxu0 0.0
    %337 = vmatprep.subr.mxu0 0.0
    %338 = vmatpush2.msra.mxu0 0.0
    %339 = vmatprep.subr.mxu0 0.0
    %340 = vmatpush2.msra.mxu0 0.0
    %341 = vmatprep.mubr.f32.mxu0 0.0
    %342 = vmatmul.mubr.f32.gmra.mxu0 %v197
    %v343 = vpop.f32.mrf.mxu0
    %v344 = vadd.f32 0.0, %v343
    %v345 = vpop.f32.mrf.mxu0
    %346 = vdwg.mxu0
    %347 = vrot.lane.b32.xlu0 %v167, 64
    %v348 = vpop.permute.xlu0 %347
    %349 = vrot.lane.b32.xlu0 %v172, 64
    %v350 = vpop.permute.xlu0 %349
    %v354 = vsel %vm195, %v186, 0
    %356 = vmatprep.subr.mxu0 0.0
    %357 = vmatpush1.msra.mxu0 0.0
    %358 = vmatprep.subr.mxu0 0.0
    %359 = vmatpush1.msra.mxu0 0.0
    %360 = vmatprep.subr.mxu0 0.0
    %361 = vmatpush1.msra.mxu0 0.0
    %362 = vmatprep.subr.mxu0 0.0
    %363 = vmatpush1.msra.mxu0 0.0
    %364 = vmatprep.subr.mxu0 0.0
    %365 = vmatpush1.msra.mxu0 0.0
    %366 = vmatprep.subr.mxu0 0.0
    %367 = vmatpush1.msra.mxu0 0.0
    %368 = vmatprep.subr.mxu0 0.0
    %369 = vmatpush1.msra.mxu0 0.0
    %370 = vmatprep.subr.mxu0 0.0
    %371 = vmatpush1.msra.mxu0 0.0
    %372 = vmatprep.subr.mxu0 0.0
    %373 = vmatpush1.msra.mxu0 0.0
    %374 = vmatprep.subr.mxu0 0.0
    %375 = vmatpush1.msra.mxu0 0.0
    %376 = vmatprep.subr.mxu0 0.0
    %377 = vmatpush1.msra.mxu0 0.0
    %378 = vmatprep.subr.mxu0 0.0
    %379 = vmatpush1.msra.mxu0 0.0
    %380 = vmatprep.subr.mxu0 0.0
    %381 = vmatpush1.msra.mxu0 0.0
    %382 = vmatprep.subr.mxu0 0.0
    %383 = vmatpush1.msra.mxu0 0.0
    %384 = vmatprep.subr.mxu0 0.0
    %385 = vmatpush1.msra.mxu0 %v350
    %386 = vmatprep.subr.mxu0 0.0
    %387 = vmatpush1.msra.mxu0 %v348
    %388 = vmatprep.subr.mxu0 0.0
    %389 = vmatpush2.msra.mxu0 0.0
    %390 = vmatprep.subr.mxu0 0.0
    %391 = vmatpush2.msra.mxu0 0.0
    %392 = vmatprep.subr.mxu0 0.0
    %393 = vmatpush2.msra.mxu0 0.0
    %394 = vmatprep.subr.mxu0 0.0
    %395 = vmatpush2.msra.mxu0 0.0
    %396 = vmatprep.subr.mxu0 0.0
    %397 = vmatpush2.msra.mxu0 0.0
    %398 = vmatprep.subr.mxu0 0.0
    %399 = vmatpush2.msra.mxu0 0.0
    %400 = vmatprep.subr.mxu0 0.0
    %401 = vmatpush2.msra.mxu0 0.0
    %402 = vmatprep.subr.mxu0 0.0
    %403 = vmatpush2.msra.mxu0 0.0
    %404 = vmatprep.subr.mxu0 0.0
    %405 = vmatpush2.msra.mxu0 0.0
    %406 = vmatprep.subr.mxu0 0.0
    %407 = vmatpush2.msra.mxu0 0.0
    %408 = vmatprep.subr.mxu0 0.0
    %409 = vmatpush2.msra.mxu0 0.0
    %410 = vmatprep.subr.mxu0 0.0
    %411 = vmatpush2.msra.mxu0 0.0
    %412 = vmatprep.subr.mxu0 0.0
    %413 = vmatpush2.msra.mxu0 0.0
    %414 = vmatprep.subr.mxu0 0.0
    %415 = vmatpush2.msra.mxu0 0.0
    %416 = vmatprep.subr.mxu0 0.0
    %417 = vmatpush2.msra.mxu0 0.0
    %418 = vmatprep.subr.mxu0 0.0
    %419 = vmatpush2.msra.mxu0 0.0
    %420 = vmatprep.mubr.f32.mxu0 0.0
    %421 = vmatmul.mubr.f32.gmra.mxu0 %v354
    %v422 = vpop.f32.mrf.mxu0
    %v423 = vadd.f32 0.0, %v422
    %v424 = vpop.f32.mrf.mxu0
    %425 = vdwg.mxu0
    %426 = vrot.lane.b32.xlu0 %v177, 64
    %v427 = vpop.permute.xlu0 %426
    %428 = vrot.lane.b32.xlu0 %v182, 64
    %v429 = vpop.permute.xlu0 %428
    %432 = vmatprep.subr.mxu0 0.0
    %433 = vmatpush1.msra.mxu0 0.0
    %434 = vmatprep.subr.mxu0 0.0
    %435 = vmatpush1.msra.mxu0 0.0
    %436 = vmatprep.subr.mxu0 0.0
    %437 = vmatpush1.msra.mxu0 0.0
    %438 = vmatprep.subr.mxu0 0.0
    %439 = vmatpush1.msra.mxu0 0.0
    %440 = vmatprep.subr.mxu0 0.0
    %441 = vmatpush1.msra.mxu0 0.0
    %442 = vmatprep.subr.mxu0 0.0
    %443 = vmatpush1.msra.mxu0 0.0
    %444 = vmatprep.subr.mxu0 0.0
    %445 = vmatpush1.msra.mxu0 0.0
    %446 = vmatprep.subr.mxu0 0.0
    %447 = vmatpush1.msra.mxu0 0.0
    %448 = vmatprep.subr.mxu0 0.0
    %449 = vmatpush1.msra.mxu0 0.0
    %450 = vmatprep.subr.mxu0 0.0
    %451 = vmatpush1.msra.mxu0 0.0
    %452 = vmatprep.subr.mxu0 0.0
    %453 = vmatpush1.msra.mxu0 0.0
    %454 = vmatprep.subr.mxu0 0.0
    %455 = vmatpush1.msra.mxu0 0.0
    %456 = vmatprep.subr.mxu0 0.0
    %457 = vmatpush1.msra.mxu0 0.0
    %458 = vmatprep.subr.mxu0 0.0
    %459 = vmatpush1.msra.mxu0 0.0
    %460 = vmatprep.subr.mxu0 0.0
    %461 = vmatpush1.msra.mxu0 %v429
    %462 = vmatprep.subr.mxu0 0.0
    %463 = vmatpush1.msra.mxu0 %v427
    %464 = vmatprep.subr.mxu0 0.0
    %465 = vmatpush2.msra.mxu0 0.0
    %466 = vmatprep.subr.mxu0 0.0
    %467 = vmatpush2.msra.mxu0 0.0
    %468 = vmatprep.subr.mxu0 0.0
    %469 = vmatpush2.msra.mxu0 0.0
    %470 = vmatprep.subr.mxu0 0.0
    %471 = vmatpush2.msra.mxu0 0.0
    %472 = vmatprep.subr.mxu0 0.0
    %473 = vmatpush2.msra.mxu0 0.0
    %474 = vmatprep.subr.mxu0 0.0
    %475 = vmatpush2.msra.mxu0 0.0
    %476 = vmatprep.subr.mxu0 0.0
    %477 = vmatpush2.msra.mxu0 0.0
    %478 = vmatprep.subr.mxu0 0.0
    %479 = vmatpush2.msra.mxu0 0.0
    %480 = vmatprep.subr.mxu0 0.0
    %481 = vmatpush2.msra.mxu0 0.0
    %482 = vmatprep.subr.mxu0 0.0
    %483 = vmatpush2.msra.mxu0 0.0
    %484 = vmatprep.subr.mxu0 0.0
    %485 = vmatpush2.msra.mxu0 0.0
    %486 = vmatprep.subr.mxu0 0.0
    %487 = vmatpush2.msra.mxu0 0.0
    %488 = vmatprep.subr.mxu0 0.0
    %489 = vmatpush2.msra.mxu0 0.0
    %490 = vmatprep.subr.mxu0 0.0
    %491 = vmatpush2.msra.mxu0 0.0
    %492 = vmatprep.subr.mxu0 0.0
    %493 = vmatpush2.msra.mxu0 0.0
    %494 = vmatprep.subr.mxu0 0.0
    %495 = vmatpush2.msra.mxu0 0.0
    %496 = vmatprep.mubr.f32.mxu0 0.0
    %497 = vmatmul.mubr.f32.gmra.mxu0 %v354
    %v498 = vpop.f32.mrf.mxu0
    %v499 = vadd.f32 0.0, %v498
    %v500 = vpop.f32.mrf.mxu0
    %501 = vdwg.mxu0
    %vm502 = vcmask 64512
    %v503 = vsel %vm502, %v167, 0
    %v505 = vsel %vm502, %v172, 0
    %v508 = vsel %vm502, %v266, 0
    %510 = vmatprep.subr.mxu0 0.0
    %511 = vmatpush1.xpose.msra.mxu0 0.0
    %512 = vmatprep.subr.mxu0 0.0
    %513 = vmatpush1.xpose.msra.mxu0 0.0
    %514 = vmatprep.subr.mxu0 0.0
    %515 = vmatpush1.xpose.msra.mxu0 0.0
    %516 = vmatprep.subr.mxu0 0.0
    %517 = vmatpush1.xpose.msra.mxu0 0.0
    %518 = vmatprep.subr.mxu0 0.0
    %519 = vmatpush1.xpose.msra.mxu0 0.0
    %520 = vmatprep.subr.mxu0 0.0
    %521 = vmatpush1.xpose.msra.mxu0 0.0
    %522 = vmatprep.subr.mxu0 0.0
    %523 = vmatpush1.xpose.msra.mxu0 0.0
    %524 = vmatprep.subr.mxu0 0.0
    %525 = vmatpush1.xpose.msra.mxu0 0.0
    %526 = vmatprep.subr.mxu0 0.0
    %527 = vmatpush1.xpose.msra.mxu0 0.0
    %528 = vmatprep.subr.mxu0 0.0
    %529 = vmatpush1.xpose.msra.mxu0 0.0
    %530 = vmatprep.subr.mxu0 0.0
    %531 = vmatpush1.xpose.msra.mxu0 0.0
    %532 = vmatprep.subr.mxu0 0.0
    %533 = vmatpush1.xpose.msra.mxu0 0.0
    %534 = vmatprep.subr.mxu0 0.0
    %535 = vmatpush1.xpose.msra.mxu0 0.0
    %536 = vmatprep.subr.mxu0 0.0
    %537 = vmatpush1.xpose.msra.mxu0 0.0
    %538 = vmatprep.subr.mxu0 0.0
    %539 = vmatpush1.xpose.msra.mxu0 0.0
    %540 = vmatprep.subr.mxu0 0.0
    %541 = vmatpush1.xpose.msra.mxu0 %v508
    %542 = vmatprep.subr.mxu0 0.0
    %543 = vmatpush2.xpose.msra.mxu0 0.0
    %544 = vmatprep.subr.mxu0 0.0
    %545 = vmatpush2.xpose.msra.mxu0 0.0
    %546 = vmatprep.subr.mxu0 0.0
    %547 = vmatpush2.xpose.msra.mxu0 0.0
    %548 = vmatprep.subr.mxu0 0.0
    %549 = vmatpush2.xpose.msra.mxu0 0.0
    %550 = vmatprep.subr.mxu0 0.0
    %551 = vmatpush2.xpose.msra.mxu0 0.0
    %552 = vmatprep.subr.mxu0 0.0
    %553 = vmatpush2.xpose.msra.mxu0 0.0
    %554 = vmatprep.subr.mxu0 0.0
    %555 = vmatpush2.xpose.msra.mxu0 0.0
    %556 = vmatprep.subr.mxu0 0.0
    %557 = vmatpush2.xpose.msra.mxu0 0.0
    %558 = vmatprep.subr.mxu0 0.0
    %559 = vmatpush2.xpose.msra.mxu0 0.0
    %560 = vmatprep.subr.mxu0 0.0
    %561 = vmatpush2.xpose.msra.mxu0 0.0
    %562 = vmatprep.subr.mxu0 0.0
    %563 = vmatpush2.xpose.msra.mxu0 0.0
    %564 = vmatprep.subr.mxu0 0.0
    %565 = vmatpush2.xpose.msra.mxu0 0.0
    %566 = vmatprep.subr.mxu0 0.0
    %567 = vmatpush2.xpose.msra.mxu0 0.0
    %568 = vmatprep.subr.mxu0 0.0
    %569 = vmatpush2.xpose.msra.mxu0 0.0
    %570 = vmatprep.subr.mxu0 0.0
    %571 = vmatpush2.xpose.msra.mxu0 0.0
    %572 = vmatprep.subr.mxu0 0.0
    %573 = vmatpush2.xpose.msra.mxu0 0.0
    %574 = vmatprep.mubr.f32.mxu0 0.0
    %575 = vmatmul.mubr.f32.gmra.mxu0 %v503
    %v576 = vpop.f32.mrf.mxu0
    %v577 = vadd.f32 0.0, %v576
    %v578 = vpop.f32.mrf.mxu0
    %579 = vmatprep.mubr.f32.mxu0 0.0
    %580 = vmatmul.mubr.f32.gmra.mxu0 %v505
    %v581 = vpop.f32.mrf.mxu0
    %v582 = vadd.f32 0.0, %v581
    %v583 = vpop.f32.mrf.mxu0
    %584 = vdwg.mxu0
    %v585 = vsel %vm502, %v177, 0
    %v587 = vsel %vm502, %v182, 0
    %v590 = vsel %vm502, %v344, 0
    %592 = vmatprep.subr.mxu0 0.0
    %593 = vmatpush1.xpose.msra.mxu0 0.0
    %594 = vmatprep.subr.mxu0 0.0
    %595 = vmatpush1.xpose.msra.mxu0 0.0
    %596 = vmatprep.subr.mxu0 0.0
    %597 = vmatpush1.xpose.msra.mxu0 0.0
    %598 = vmatprep.subr.mxu0 0.0
    %599 = vmatpush1.xpose.msra.mxu0 0.0
    %600 = vmatprep.subr.mxu0 0.0
    %601 = vmatpush1.xpose.msra.mxu0 0.0
    %602 = vmatprep.subr.mxu0 0.0
    %603 = vmatpush1.xpose.msra.mxu0 0.0
    %604 = vmatprep.subr.mxu0 0.0
    %605 = vmatpush1.xpose.msra.mxu0 0.0
    %606 = vmatprep.subr.mxu0 0.0
    %607 = vmatpush1.xpose.msra.mxu0 0.0
    %608 = vmatprep.subr.mxu0 0.0
    %609 = vmatpush1.xpose.msra.mxu0 0.0
    %610 = vmatprep.subr.mxu0 0.0
    %611 = vmatpush1.xpose.msra.mxu0 0.0
    %612 = vmatprep.subr.mxu0 0.0
    %613 = vmatpush1.xpose.msra.mxu0 0.0
    %614 = vmatprep.subr.mxu0 0.0
    %615 = vmatpush1.xpose.msra.mxu0 0.0
    %616 = vmatprep.subr.mxu0 0.0
    %617 = vmatpush1.xpose.msra.mxu0 0.0
    %618 = vmatprep.subr.mxu0 0.0
    %619 = vmatpush1.xpose.msra.mxu0 0.0
    %620 = vmatprep.subr.mxu0 0.0
    %621 = vmatpush1.xpose.msra.mxu0 0.0
    %622 = vmatprep.subr.mxu0 0.0
    %623 = vmatpush1.xpose.msra.mxu0 %v590
    %624 = vmatprep.subr.mxu0 0.0
    %625 = vmatpush2.xpose.msra.mxu0 0.0
    %626 = vmatprep.subr.mxu0 0.0
    %627 = vmatpush2.xpose.msra.mxu0 0.0
    %628 = vmatprep.subr.mxu0 0.0
    %629 = vmatpush2.xpose.msra.mxu0 0.0
    %630 = vmatprep.subr.mxu0 0.0
    %631 = vmatpush2.xpose.msra.mxu0 0.0
    %632 = vmatprep.subr.mxu0 0.0
    %633 = vmatpush2.xpose.msra.mxu0 0.0
    %634 = vmatprep.subr.mxu0 0.0
    %635 = vmatpush2.xpose.msra.mxu0 0.0
    %636 = vmatprep.subr.mxu0 0.0
    %637 = vmatpush2.xpose.msra.mxu0 0.0
    %638 = vmatprep.subr.mxu0 0.0
    %639 = vmatpush2.xpose.msra.mxu0 0.0
    %640 = vmatprep.subr.mxu0 0.0
    %641 = vmatpush2.xpose.msra.mxu0 0.0
    %642 = vmatprep.subr.mxu0 0.0
    %643 = vmatpush2.xpose.msra.mxu0 0.0
    %644 = vmatprep.subr.mxu0 0.0
    %645 = vmatpush2.xpose.msra.mxu0 0.0
    %646 = vmatprep.subr.mxu0 0.0
    %647 = vmatpush2.xpose.msra.mxu0 0.0
    %648 = vmatprep.subr.mxu0 0.0
    %649 = vmatpush2.xpose.msra.mxu0 0.0
    %650 = vmatprep.subr.mxu0 0.0
    %651 = vmatpush2.xpose.msra.mxu0 0.0
    %652 = vmatprep.subr.mxu0 0.0
    %653 = vmatpush2.xpose.msra.mxu0 0.0
    %654 = vmatprep.subr.mxu0 0.0
    %655 = vmatpush2.xpose.msra.mxu0 0.0
    %656 = vmatprep.mubr.f32.mxu0 0.0
    %657 = vmatmul.mubr.f32.gmra.mxu0 %v585
    %v658 = vpop.f32.mrf.mxu0
    %v659 = vadd.f32 0.0, %v658
    %v660 = vpop.f32.mrf.mxu0
    %661 = vmatprep.mubr.f32.mxu0 0.0
    %662 = vmatmul.mubr.f32.gmra.mxu0 %v587
    %v663 = vpop.f32.mrf.mxu0
    %v664 = vadd.f32 0.0, %v663
    %v665 = vpop.f32.mrf.mxu0
    %666 = vdwg.mxu0
    %v667 = vsel %vm502, %v577, -inf
    %668 = vmax.xlane.f32.xlu0 %v667
    %v669 = vpop.xlane.xlu0 %668
    %v670 = vsel %vm502, %v582, -inf
    %671 = vmax.xlane.f32.xlu0 %v670
    %v672 = vpop.xlane.xlu0 %671
    %v673 = vsel %vm502, %v659, -inf
    %674 = vmax.xlane.f32.xlu0 %v673
    %v675 = vpop.xlane.xlu0 %674
    %v676 = vsel %vm502, %v664, -inf
    %677 = vmax.xlane.f32.xlu0 %v676
    %v678 = vpop.xlane.xlu0 %677
    %v679 = vsub.f32 %v577, %v669
    %v680 = vsub.f32 %v582, %v672
    %v681 = vsub.f32 %v659, %v675
    %v682 = vsub.f32 %v664, %v678
    %v683 = vmul.f32 %v679, 1.442695
    %v684 = vpow.pop %v683
    %v685 = vmul.f32 %v680, 1.442695
    %v686 = vpow.pop %v685
    %v687 = vmul.f32 %v681, 1.442695
    %v688 = vpow.pop %v687
    %v689 = vmul.f32 %v682, 1.442695
    %v690 = vpow.pop %v689
    %v691 = vsel %vm502, %v684, 0.0
    %692 = vadd.xlane.f32.xlu0 %v691
    %v693 = vpop.xlane.xlu0 %692
    %v694 = vsel %vm502, %v686, 0.0
    %695 = vadd.xlane.f32.xlu0 %v694
    %v696 = vpop.xlane.xlu0 %695
    %v697 = vsel %vm502, %v688, 0.0
    %698 = vadd.xlane.f32.xlu0 %v697
    %v699 = vpop.xlane.xlu0 %698
    %v700 = vsel %vm502, %v690, 0.0
    %701 = vadd.xlane.f32.xlu0 %v700
    %v702 = vpop.xlane.xlu0 %701
    %v703 = vrcp.pop %v693
    %v704 = vrcp.pop %v696
    %v705 = vrcp.pop %v699
    %v706 = vrcp.pop %v702
    %v707 = vmul.f32 %v684, %v703
    %v708 = vmul.f32 %v686, %v704
    %v709 = vmul.f32 %v688, %v705
    %v710 = vmul.f32 %v690, %v706
    %v712 = vsel %vm502, %v707, 0
    %v715 = vsel %vm502, %v708, 0
    %717 = vmatprep.subr.mxu0 0.0
    %718 = vmatpush1.msra.mxu0 0.0
    %719 = vmatprep.subr.mxu0 0.0
    %720 = vmatpush1.msra.mxu0 0.0
    %721 = vmatprep.subr.mxu0 0.0
    %722 = vmatpush1.msra.mxu0 0.0
    %723 = vmatprep.subr.mxu0 0.0
    %724 = vmatpush1.msra.mxu0 0.0
    %725 = vmatprep.subr.mxu0 0.0
    %726 = vmatpush1.msra.mxu0 0.0
    %727 = vmatprep.subr.mxu0 0.0
    %728 = vmatpush1.msra.mxu0 0.0
    %729 = vmatprep.subr.mxu0 0.0
    %730 = vmatpush1.msra.mxu0 0.0
    %731 = vmatprep.subr.mxu0 0.0
    %732 = vmatpush1.msra.mxu0 0.0
    %733 = vmatprep.subr.mxu0 0.0
    %734 = vmatpush1.msra.mxu0 0.0
    %735 = vmatprep.subr.mxu0 0.0
    %736 = vmatpush1.msra.mxu0 0.0
    %737 = vmatprep.subr.mxu0 0.0
    %738 = vmatpush1.msra.mxu0 0.0
    %739 = vmatprep.subr.mxu0 0.0
    %740 = vmatpush1.msra.mxu0 0.0
    %741 = vmatprep.subr.mxu0 0.0
    %742 = vmatpush1.msra.mxu0 0.0
    %743 = vmatprep.subr.mxu0 0.0
    %744 = vmatpush1.msra.mxu0 0.0
    %745 = vmatprep.subr.mxu0 0.0
    %746 = vmatpush1.msra.mxu0 0.0
    %747 = vmatprep.subr.mxu0 0.0
    %748 = vmatpush1.msra.mxu0 %v423
    %749 = vmatprep.subr.mxu0 0.0
    %750 = vmatpush2.msra.mxu0 0.0
    %751 = vmatprep.subr.mxu0 0.0
    %752 = vmatpush2.msra.mxu0 0.0
    %753 = vmatprep.subr.mxu0 0.0
    %754 = vmatpush2.msra.mxu0 0.0
    %755 = vmatprep.subr.mxu0 0.0
    %756 = vmatpush2.msra.mxu0 0.0
    %757 = vmatprep.subr.mxu0 0.0
    %758 = vmatpush2.msra.mxu0 0.0
    %759 = vmatprep.subr.mxu0 0.0
    %760 = vmatpush2.msra.mxu0 0.0
    %761 = vmatprep.subr.mxu0 0.0
    %762 = vmatpush2.msra.mxu0 0.0
    %763 = vmatprep.subr.mxu0 0.0
    %764 = vmatpush2.msra.mxu0 0.0
    %765 = vmatprep.subr.mxu0 0.0
    %766 = vmatpush2.msra.mxu0 0.0
    %767 = vmatprep.subr.mxu0 0.0
    %768 = vmatpush2.msra.mxu0 0.0
    %769 = vmatprep.subr.mxu0 0.0
    %770 = vmatpush2.msra.mxu0 0.0
    %771 = vmatprep.subr.mxu0 0.0
    %772 = vmatpush2.msra.mxu0 0.0
    %773 = vmatprep.subr.mxu0 0.0
    %774 = vmatpush2.msra.mxu0 0.0
    %775 = vmatprep.subr.mxu0 0.0
    %776 = vmatpush2.msra.mxu0 0.0
    %777 = vmatprep.subr.mxu0 0.0
    %778 = vmatpush2.msra.mxu0 0.0
    %779 = vmatprep.subr.mxu0 0.0
    %780 = vmatpush2.msra.mxu0 0.0
    %781 = vmatprep.mubr.f32.mxu0 0.0
    %782 = vmatmul.mubr.f32.gmra.mxu0 %v712
    %v783 = vpop.f32.mrf.mxu0
    %v784 = vadd.f32 0.0, %v783
    %v785 = vpop.f32.mrf.mxu0
    %786 = vmatprep.mubr.f32.mxu0 0.0
    %787 = vmatmul.mubr.f32.gmra.mxu0 %v715
    %v788 = vpop.f32.mrf.mxu0
    %v789 = vadd.f32 0.0, %v788
    %v790 = vpop.f32.mrf.mxu0
    %791 = vdwg.mxu0
    %v793 = vsel %vm502, %v709, 0
    %v796 = vsel %vm502, %v710, 0
    %798 = vmatprep.subr.mxu0 0.0
    %799 = vmatpush1.msra.mxu0 0.0
    %800 = vmatprep.subr.mxu0 0.0
    %801 = vmatpush1.msra.mxu0 0.0
    %802 = vmatprep.subr.mxu0 0.0
    %803 = vmatpush1.msra.mxu0 0.0
    %804 = vmatprep.subr.mxu0 0.0
    %805 = vmatpush1.msra.mxu0 0.0
    %806 = vmatprep.subr.mxu0 0.0
    %807 = vmatpush1.msra.mxu0 0.0
    %808 = vmatprep.subr.mxu0 0.0
    %809 = vmatpush1.msra.mxu0 0.0
    %810 = vmatprep.subr.mxu0 0.0
    %811 = vmatpush1.msra.mxu0 0.0
    %812 = vmatprep.subr.mxu0 0.0
    %813 = vmatpush1.msra.mxu0 0.0
    %814 = vmatprep.subr.mxu0 0.0
    %815 = vmatpush1.msra.mxu0 0.0
    %816 = vmatprep.subr.mxu0 0.0
    %817 = vmatpush1.msra.mxu0 0.0
    %818 = vmatprep.subr.mxu0 0.0
    %819 = vmatpush1.msra.mxu0 0.0
    %820 = vmatprep.subr.mxu0 0.0
    %821 = vmatpush1.msra.mxu0 0.0
    %822 = vmatprep.subr.mxu0 0.0
    %823 = vmatpush1.msra.mxu0 0.0
    %824 = vmatprep.subr.mxu0 0.0
    %825 = vmatpush1.msra.mxu0 0.0
    %826 = vmatprep.subr.mxu0 0.0
    %827 = vmatpush1.msra.mxu0 0.0
    %828 = vmatprep.subr.mxu0 0.0
    %829 = vmatpush1.msra.mxu0 %v499
    %830 = vmatprep.subr.mxu0 0.0
    %831 = vmatpush2.msra.mxu0 0.0
    %832 = vmatprep.subr.mxu0 0.0
    %833 = vmatpush2.msra.mxu0 0.0
    %834 = vmatprep.subr.mxu0 0.0
    %835 = vmatpush2.msra.mxu0 0.0
    %836 = vmatprep.subr.mxu0 0.0
    %837 = vmatpush2.msra.mxu0 0.0
    %838 = vmatprep.subr.mxu0 0.0
    %839 = vmatpush2.msra.mxu0 0.0
    %840 = vmatprep.subr.mxu0 0.0
    %841 = vmatpush2.msra.mxu0 0.0
    %842 = vmatprep.subr.mxu0 0.0
    %843 = vmatpush2.msra.mxu0 0.0
    %844 = vmatprep.subr.mxu0 0.0
    %845 = vmatpush2.msra.mxu0 0.0
    %846 = vmatprep.subr.mxu0 0.0
    %847 = vmatpush2.msra.mxu0 0.0
    %848 = vmatprep.subr.mxu0 0.0
    %849 = vmatpush2.msra.mxu0 0.0
    %850 = vmatprep.subr.mxu0 0.0
    %851 = vmatpush2.msra.mxu0 0.0
    %852 = vmatprep.subr.mxu0 0.0
    %853 = vmatpush2.msra.mxu0 0.0
    %854 = vmatprep.subr.mxu0 0.0
    %855 = vmatpush2.msra.mxu0 0.0
    %856 = vmatprep.subr.mxu0 0.0
    %857 = vmatpush2.msra.mxu0 0.0
    %858 = vmatprep.subr.mxu0 0.0
    %859 = vmatpush2.msra.mxu0 0.0
    %860 = vmatprep.subr.mxu0 0.0
    %861 = vmatpush2.msra.mxu0 0.0
    %862 = vmatprep.mubr.f32.mxu0 0.0
    %863 = vmatmul.mubr.f32.gmra.mxu0 %v793
    %v864 = vpop.f32.mrf.mxu0
    %v865 = vadd.f32 0.0, %v864
    %v866 = vpop.f32.mrf.mxu0
    %867 = vmatprep.mubr.f32.mxu0 0.0
    %868 = vmatmul.mubr.f32.gmra.mxu0 %v796
    %v869 = vpop.f32.mrf.mxu0
    %v870 = vadd.f32 0.0, %v869
    %v871 = vpop.f32.mrf.mxu0
    %872 = vdwg.mxu0
    %873 = vrot.lane.b32.xlu0 %v167, 120
    %v874 = vpop.permute.xlu0 %873
    %875 = vrot.lane.b32.xlu0 %v172, 120
    %v876 = vpop.permute.xlu0 %875
    %877 = vrot.lane.b32.xlu0 %v266, 120
    %v878 = vpop.permute.xlu0 %877
    %v879 = vsel %vm502, %v874, 0
    %v881 = vsel %vm502, %v876, 0
    %v883 = vsel %vm502, %v878, 0
    %885 = vmatprep.subr.mxu0 0.0
    %886 = vmatpush1.xpose.msra.mxu0 0.0
    %887 = vmatprep.subr.mxu0 0.0
    %888 = vmatpush1.xpose.msra.mxu0 0.0
    %889 = vmatprep.subr.mxu0 0.0
    %890 = vmatpush1.xpose.msra.mxu0 0.0
    %891 = vmatprep.subr.mxu0 0.0
    %892 = vmatpush1.xpose.msra.mxu0 0.0
    %893 = vmatprep.subr.mxu0 0.0
    %894 = vmatpush1.xpose.msra.mxu0 0.0
    %895 = vmatprep.subr.mxu0 0.0
    %896 = vmatpush1.xpose.msra.mxu0 0.0
    %897 = vmatprep.subr.mxu0 0.0
    %898 = vmatpush1.xpose.msra.mxu0 0.0
    %899 = vmatprep.subr.mxu0 0.0
    %900 = vmatpush1.xpose.msra.mxu0 0.0
    %901 = vmatprep.subr.mxu0 0.0
    %902 = vmatpush1.xpose.msra.mxu0 0.0
    %903 = vmatprep.subr.mxu0 0.0
    %904 = vmatpush1.xpose.msra.mxu0 0.0
    %905 = vmatprep.subr.mxu0 0.0
    %906 = vmatpush1.xpose.msra.mxu0 0.0
    %907 = vmatprep.subr.mxu0 0.0
    %908 = vmatpush1.xpose.msra.mxu0 0.0
    %909 = vmatprep.subr.mxu0 0.0
    %910 = vmatpush1.xpose.msra.mxu0 0.0
    %911 = vmatprep.subr.mxu0 0.0
    %912 = vmatpush1.xpose.msra.mxu0 0.0
    %913 = vmatprep.subr.mxu0 0.0
    %914 = vmatpush1.xpose.msra.mxu0 0.0
    %915 = vmatprep.subr.mxu0 0.0
    %916 = vmatpush1.xpose.msra.mxu0 %v883
    %917 = vmatprep.subr.mxu0 0.0
    %918 = vmatpush2.xpose.msra.mxu0 0.0
    %919 = vmatprep.subr.mxu0 0.0
    %920 = vmatpush2.xpose.msra.mxu0 0.0
    %921 = vmatprep.subr.mxu0 0.0
    %922 = vmatpush2.xpose.msra.mxu0 0.0
    %923 = vmatprep.subr.mxu0 0.0
    %924 = vmatpush2.xpose.msra.mxu0 0.0
    %925 = vmatprep.subr.mxu0 0.0
    %926 = vmatpush2.xpose.msra.mxu0 0.0
    %927 = vmatprep.subr.mxu0 0.0
    %928 = vmatpush2.xpose.msra.mxu0 0.0
    %929 = vmatprep.subr.mxu0 0.0
    %930 = vmatpush2.xpose.msra.mxu0 0.0
    %931 = vmatprep.subr.mxu0 0.0
    %932 = vmatpush2.xpose.msra.mxu0 0.0
    %933 = vmatprep.subr.mxu0 0.0
    %934 = vmatpush2.xpose.msra.mxu0 0.0
    %935 = vmatprep.subr.mxu0 0.0
    %936 = vmatpush2.xpose.msra.mxu0 0.0
    %937 = vmatprep.subr.mxu0 0.0
    %938 = vmatpush2.xpose.msra.mxu0 0.0
    %939 = vmatprep.subr.mxu0 0.0
    %940 = vmatpush2.xpose.msra.mxu0 0.0
    %941 = vmatprep.subr.mxu0 0.0
    %942 = vmatpush2.xpose.msra.mxu0 0.0
    %943 = vmatprep.subr.mxu0 0.0
    %944 = vmatpush2.xpose.msra.mxu0 0.0
    %945 = vmatprep.subr.mxu0 0.0
    %946 = vmatpush2.xpose.msra.mxu0 0.0
    %947 = vmatprep.subr.mxu0 0.0
    %948 = vmatpush2.xpose.msra.mxu0 0.0
    %949 = vmatprep.mubr.f32.mxu0 0.0
    %950 = vmatmul.mubr.f32.gmra.mxu0 %v879
    %v951 = vpop.f32.mrf.mxu0
    %v952 = vadd.f32 0.0, %v951
    %v953 = vpop.f32.mrf.mxu0
    %954 = vmatprep.mubr.f32.mxu0 0.0
    %955 = vmatmul.mubr.f32.gmra.mxu0 %v881
    %v956 = vpop.f32.mrf.mxu0
    %v957 = vadd.f32 0.0, %v956
    %v958 = vpop.f32.mrf.mxu0
    %959 = vdwg.mxu0
    %960 = vrot.lane.b32.xlu0 %v177, 120
    %v961 = vpop.permute.xlu0 %960
    %962 = vrot.lane.b32.xlu0 %v182, 120
    %v963 = vpop.permute.xlu0 %962
    %964 = vrot.lane.b32.xlu0 %v344, 120
    %v965 = vpop.permute.xlu0 %964
    %v966 = vsel %vm502, %v961, 0
    %v968 = vsel %vm502, %v963, 0
    %v970 = vsel %vm502, %v965, 0
    %972 = vmatprep.subr.mxu0 0.0
    %973 = vmatpush1.xpose.msra.mxu0 0.0
    %974 = vmatprep.subr.mxu0 0.0
    %975 = vmatpush1.xpose.msra.mxu0 0.0
    %976 = vmatprep.subr.mxu0 0.0
    %977 = vmatpush1.xpose.msra.mxu0 0.0
    %978 = vmatprep.subr.mxu0 0.0
    %979 = vmatpush1.xpose.msra.mxu0 0.0
    %980 = vmatprep.subr.mxu0 0.0
    %981 = vmatpush1.xpose.msra.mxu0 0.0
    %982 = vmatprep.subr.mxu0 0.0
    %983 = vmatpush1.xpose.msra.mxu0 0.0
    %984 = vmatprep.subr.mxu0 0.0
    %985 = vmatpush1.xpose.msra.mxu0 0.0
    %986 = vmatprep.subr.mxu0 0.0
    %987 = vmatpush1.xpose.msra.mxu0 0.0
    %988 = vmatprep.subr.mxu0 0.0
    %989 = vmatpush1.xpose.msra.mxu0 0.0
    %990 = vmatprep.subr.mxu0 0.0
    %991 = vmatpush1.xpose.msra.mxu0 0.0
    %992 = vmatprep.subr.mxu0 0.0
    %993 = vmatpush1.xpose.msra.mxu0 0.0
    %994 = vmatprep.subr.mxu0 0.0
    %995 = vmatpush1.xpose.msra.mxu0 0.0
    %996 = vmatprep.subr.mxu0 0.0
    %997 = vmatpush1.xpose.msra.mxu0 0.0
    %998 = vmatprep.subr.mxu0 0.0
    %999 = vmatpush1.xpose.msra.mxu0 0.0
    %1000 = vmatprep.subr.mxu0 0.0
    %1001 = vmatpush1.xpose.msra.mxu0 0.0
    %1002 = vmatprep.subr.mxu0 0.0
    %1003 = vmatpush1.xpose.msra.mxu0 %v970
    %1004 = vmatprep.subr.mxu0 0.0
    %1005 = vmatpush2.xpose.msra.mxu0 0.0
    %1006 = vmatprep.subr.mxu0 0.0
    %1007 = vmatpush2.xpose.msra.mxu0 0.0
    %1008 = vmatprep.subr.mxu0 0.0
    %1009 = vmatpush2.xpose.msra.mxu0 0.0
    %1010 = vmatprep.subr.mxu0 0.0
    %1011 = vmatpush2.xpose.msra.mxu0 0.0
    %1012 = vmatprep.subr.mxu0 0.0
    %1013 = vmatpush2.xpose.msra.mxu0 0.0
    %1014 = vmatprep.subr.mxu0 0.0
    %1015 = vmatpush2.xpose.msra.mxu0 0.0
    %1016 = vmatprep.subr.mxu0 0.0
    %1017 = vmatpush2.xpose.msra.mxu0 0.0
    %1018 = vmatprep.subr.mxu0 0.0
    %1019 = vmatpush2.xpose.msra.mxu0 0.0
    %1020 = vmatprep.subr.mxu0 0.0
    %1021 = vmatpush2.xpose.msra.mxu0 0.0
    %1022 = vmatprep.subr.mxu0 0.0
    %1023 = vmatpush2.xpose.msra.mxu0 0.0
    %1024 = vmatprep.subr.mxu0 0.0
    %1025 = vmatpush2.xpose.msra.mxu0 0.0
    %1026 = vmatprep.subr.mxu0 0.0
    %1027 = vmatpush2.xpose.msra.mxu0 0.0
    %1028 = vmatprep.subr.mxu0 0.0
    %1029 = vmatpush2.xpose.msra.mxu0 0.0
    %1030 = vmatprep.subr.mxu0 0.0
    %1031 = vmatpush2.xpose.msra.mxu0 0.0
    %1032 = vmatprep.subr.mxu0 0.0
    %1033 = vmatpush2.xpose.msra.mxu0 0.0
    %1034 = vmatprep.subr.mxu0 0.0
    %1035 = vmatpush2.xpose.msra.mxu0 0.0
    %1036 = vmatprep.mubr.f32.mxu0 0.0
    %1037 = vmatmul.mubr.f32.gmra.mxu0 %v966
    %v1038 = vpop.f32.mrf.mxu0
    %v1039 = vadd.f32 0.0, %v1038
    %v1040 = vpop.f32.mrf.mxu0
    %1041 = vmatprep.mubr.f32.mxu0 0.0
    %1042 = vmatmul.mubr.f32.gmra.mxu0 %v968
    %v1043 = vpop.f32.mrf.mxu0
    %v1044 = vadd.f32 0.0, %v1043
    %v1045 = vpop.f32.mrf.mxu0
    %1046 = vdwg.mxu0
    %v1047 = vsel %vm502, %v952, -inf
    %1048 = vmax.xlane.f32.xlu0 %v1047
    %v1049 = vpop.xlane.xlu0 %1048
    %v1050 = vsel %vm502, %v957, -inf
    %1051 = vmax.xlane.f32.xlu0 %v1050
    %v1052 = vpop.xlane.xlu0 %1051
    %v1053 = vsel %vm502, %v1039, -inf
    %1054 = vmax.xlane.f32.xlu0 %v1053
    %v1055 = vpop.xlane.xlu0 %1054
    %v1056 = vsel %vm502, %v1044, -inf
    %1057 = vmax.xlane.f32.xlu0 %v1056
    %v1058 = vpop.xlane.xlu0 %1057
    %v1059 = vsub.f32 %v952, %v1049
    %v1060 = vsub.f32 %v957, %v1052
    %v1061 = vsub.f32 %v1039, %v1055
    %v1062 = vsub.f32 %v1044, %v1058
    %v1063 = vmul.f32 %v1059, 1.442695
    %v1064 = vpow.pop %v1063
    %v1065 = vmul.f32 %v1060, 1.442695
    %v1066 = vpow.pop %v1065
    %v1067 = vmul.f32 %v1061, 1.442695
    %v1068 = vpow.pop %v1067
    %v1069 = vmul.f32 %v1062, 1.442695
    %v1070 = vpow.pop %v1069
    %v1071 = vsel %vm502, %v1064, 0.0
    %1072 = vadd.xlane.f32.xlu0 %v1071
    %v1073 = vpop.xlane.xlu0 %1072
    %v1074 = vsel %vm502, %v1066, 0.0
    %1075 = vadd.xlane.f32.xlu0 %v1074
    %v1076 = vpop.xlane.xlu0 %1075
    %v1077 = vsel %vm502, %v1068, 0.0
    %1078 = vadd.xlane.f32.xlu0 %v1077
    %v1079 = vpop.xlane.xlu0 %1078
    %v1080 = vsel %vm502, %v1070, 0.0
    %1081 = vadd.xlane.f32.xlu0 %v1080
    %v1082 = vpop.xlane.xlu0 %1081
    %v1083 = vrcp.pop %v1073
    %v1084 = vrcp.pop %v1076
    %v1085 = vrcp.pop %v1079
    %v1086 = vrcp.pop %v1082
    %v1087 = vmul.f32 %v1064, %v1083
    %v1088 = vmul.f32 %v1066, %v1084
    %v1089 = vmul.f32 %v1068, %v1085
    %v1090 = vmul.f32 %v1070, %v1086
    %1092 = vrot.lane.b32.xlu0 %v423, 120
    %v1093 = vpop.permute.xlu0 %1092
    %v1096 = vsel %vm502, %v1087, 0
    %v1099 = vsel %vm502, %v1088, 0
    %1101 = vmatprep.subr.mxu0 0.0
    %1102 = vmatpush1.msra.mxu0 0.0
    %1103 = vmatprep.subr.mxu0 0.0
    %1104 = vmatpush1.msra.mxu0 0.0
    %1105 = vmatprep.subr.mxu0 0.0
    %1106 = vmatpush1.msra.mxu0 0.0
    %1107 = vmatprep.subr.mxu0 0.0
    %1108 = vmatpush1.msra.mxu0 0.0
    %1109 = vmatprep.subr.mxu0 0.0
    %1110 = vmatpush1.msra.mxu0 0.0
    %1111 = vmatprep.subr.mxu0 0.0
    %1112 = vmatpush1.msra.mxu0 0.0
    %1113 = vmatprep.subr.mxu0 0.0
    %1114 = vmatpush1.msra.mxu0 0.0
    %1115 = vmatprep.subr.mxu0 0.0
    %1116 = vmatpush1.msra.mxu0 0.0
    %1117 = vmatprep.subr.mxu0 0.0
    %1118 = vmatpush1.msra.mxu0 0.0
    %1119 = vmatprep.subr.mxu0 0.0
    %1120 = vmatpush1.msra.mxu0 0.0
    %1121 = vmatprep.subr.mxu0 0.0
    %1122 = vmatpush1.msra.mxu0 0.0
    %1123 = vmatprep.subr.mxu0 0.0
    %1124 = vmatpush1.msra.mxu0 0.0
    %1125 = vmatprep.subr.mxu0 0.0
    %1126 = vmatpush1.msra.mxu0 0.0
    %1127 = vmatprep.subr.mxu0 0.0
    %1128 = vmatpush1.msra.mxu0 0.0
    %1129 = vmatprep.subr.mxu0 0.0
    %1130 = vmatpush1.msra.mxu0 0.0
    %1131 = vmatprep.subr.mxu0 0.0
    %1132 = vmatpush1.msra.mxu0 %v1093
    %1133 = vmatprep.subr.mxu0 0.0
    %1134 = vmatpush2.msra.mxu0 0.0
    %1135 = vmatprep.subr.mxu0 0.0
    %1136 = vmatpush2.msra.mxu0 0.0
    %1137 = vmatprep.subr.mxu0 0.0
    %1138 = vmatpush2.msra.mxu0 0.0
    %1139 = vmatprep.subr.mxu0 0.0
    %1140 = vmatpush2.msra.mxu0 0.0
    %1141 = vmatprep.subr.mxu0 0.0
    %1142 = vmatpush2.msra.mxu0 0.0
    %1143 = vmatprep.subr.mxu0 0.0
    %1144 = vmatpush2.msra.mxu0 0.0
    %1145 = vmatprep.subr.mxu0 0.0
    %1146 = vmatpush2.msra.mxu0 0.0
    %1147 = vmatprep.subr.mxu0 0.0
    %1148 = vmatpush2.msra.mxu0 0.0
    %1149 = vmatprep.subr.mxu0 0.0
    %1150 = vmatpush2.msra.mxu0 0.0
    %1151 = vmatprep.subr.mxu0 0.0
    %1152 = vmatpush2.msra.mxu0 0.0
    %1153 = vmatprep.subr.mxu0 0.0
    %1154 = vmatpush2.msra.mxu0 0.0
    %1155 = vmatprep.subr.mxu0 0.0
    %1156 = vmatpush2.msra.mxu0 0.0
    %1157 = vmatprep.subr.mxu0 0.0
    %1158 = vmatpush2.msra.mxu0 0.0
    %1159 = vmatprep.subr.mxu0 0.0
    %1160 = vmatpush2.msra.mxu0 0.0
    %1161 = vmatprep.subr.mxu0 0.0
    %1162 = vmatpush2.msra.mxu0 0.0
    %1163 = vmatprep.subr.mxu0 0.0
    %1164 = vmatpush2.msra.mxu0 0.0
    %1165 = vmatprep.mubr.f32.mxu0 0.0
    %1166 = vmatmul.mubr.f32.gmra.mxu0 %v1096
    %v1167 = vpop.f32.mrf.mxu0
    %v1168 = vadd.f32 0.0, %v1167
    %v1169 = vpop.f32.mrf.mxu0
    %1170 = vmatprep.mubr.f32.mxu0 0.0
    %1171 = vmatmul.mubr.f32.gmra.mxu0 %v1099
    %v1172 = vpop.f32.mrf.mxu0
    %v1173 = vadd.f32 0.0, %v1172
    %v1174 = vpop.f32.mrf.mxu0
    %1175 = vdwg.mxu0
    %1177 = vrot.lane.b32.xlu0 %v499, 120
    %v1178 = vpop.permute.xlu0 %1177
    %v1181 = vsel %vm502, %v1089, 0
    %v1184 = vsel %vm502, %v1090, 0
    %1186 = vmatprep.subr.mxu0 0.0
    %1187 = vmatpush1.msra.mxu0 0.0
    %1188 = vmatprep.subr.mxu0 0.0
    %1189 = vmatpush1.msra.mxu0 0.0
    %1190 = vmatprep.subr.mxu0 0.0
    %1191 = vmatpush1.msra.mxu0 0.0
    %1192 = vmatprep.subr.mxu0 0.0
    %1193 = vmatpush1.msra.mxu0 0.0
    %1194 = vmatprep.subr.mxu0 0.0
    %1195 = vmatpush1.msra.mxu0 0.0
    %1196 = vmatprep.subr.mxu0 0.0
    %1197 = vmatpush1.msra.mxu0 0.0
    %1198 = vmatprep.subr.mxu0 0.0
    %1199 = vmatpush1.msra.mxu0 0.0
    %1200 = vmatprep.subr.mxu0 0.0
    %1201 = vmatpush1.msra.mxu0 0.0
    %1202 = vmatprep.subr.mxu0 0.0
    %1203 = vmatpush1.msra.mxu0 0.0
    %1204 = vmatprep.subr.mxu0 0.0
    %1205 = vmatpush1.msra.mxu0 0.0
    %1206 = vmatprep.subr.mxu0 0.0
    %1207 = vmatpush1.msra.mxu0 0.0
    %1208 = vmatprep.subr.mxu0 0.0
    %1209 = vmatpush1.msra.mxu0 0.0
    %1210 = vmatprep.subr.mxu0 0.0
    %1211 = vmatpush1.msra.mxu0 0.0
    %1212 = vmatprep.subr.mxu0 0.0
    %1213 = vmatpush1.msra.mxu0 0.0
    %1214 = vmatprep.subr.mxu0 0.0
    %1215 = vmatpush1.msra.mxu0 0.0
    %1216 = vmatprep.subr.mxu0 0.0
    %1217 = vmatpush1.msra.mxu0 %v1178
    %1218 = vmatprep.subr.mxu0 0.0
    %1219 = vmatpush2.msra.mxu0 0.0
    %1220 = vmatprep.subr.mxu0 0.0
    %1221 = vmatpush2.msra.mxu0 0.0
    %1222 = vmatprep.subr.mxu0 0.0
    %1223 = vmatpush2.msra.mxu0 0.0
    %1224 = vmatprep.subr.mxu0 0.0
    %1225 = vmatpush2.msra.mxu0 0.0
    %1226 = vmatprep.subr.mxu0 0.0
    %1227 = vmatpush2.msra.mxu0 0.0
    %1228 = vmatprep.subr.mxu0 0.0
    %1229 = vmatpush2.msra.mxu0 0.0
    %1230 = vmatprep.subr.mxu0 0.0
    %1231 = vmatpush2.msra.mxu0 0.0
    %1232 = vmatprep.subr.mxu0 0.0
    %1233 = vmatpush2.msra.mxu0 0.0
    %1234 = vmatprep.subr.mxu0 0.0
    %1235 = vmatpush2.msra.mxu0 0.0
    %1236 = vmatprep.subr.mxu0 0.0
    %1237 = vmatpush2.msra.mxu0 0.0
    %1238 = vmatprep.subr.mxu0 0.0
    %1239 = vmatpush2.msra.mxu0 0.0
    %1240 = vmatprep.subr.mxu0 0.0
    %1241 = vmatpush2.msra.mxu0 0.0
    %1242 = vmatprep.subr.mxu0 0.0
    %1243 = vmatpush2.msra.mxu0 0.0
    %1244 = vmatprep.subr.mxu0 0.0
    %1245 = vmatpush2.msra.mxu0 0.0
    %1246 = vmatprep.subr.mxu0 0.0
    %1247 = vmatpush2.msra.mxu0 0.0
    %1248 = vmatprep.subr.mxu0 0.0
    %1249 = vmatpush2.msra.mxu0 0.0
    %1250 = vmatprep.mubr.f32.mxu0 0.0
    %1251 = vmatmul.mubr.f32.gmra.mxu0 %v1181
    %v1252 = vpop.f32.mrf.mxu0
    %v1253 = vadd.f32 0.0, %v1252
    %v1254 = vpop.f32.mrf.mxu0
    %1255 = vmatprep.mubr.f32.mxu0 0.0
    %1256 = vmatmul.mubr.f32.gmra.mxu0 %v1184
    %v1257 = vpop.f32.mrf.mxu0
    %v1258 = vadd.f32 0.0, %v1257
    %v1259 = vpop.f32.mrf.mxu0
    %1260 = vdwg.mxu0
    %1261 = vrot.lane.b32.xlu0 %v167, 112
    %v1262 = vpop.permute.xlu0 %1261
    %1263 = vrot.lane.b32.xlu0 %v172, 112
    %v1264 = vpop.permute.xlu0 %1263
    %1265 = vrot.lane.b32.xlu0 %v266, 112
    %v1266 = vpop.permute.xlu0 %1265
    %v1267 = vsel %vm502, %v1262, 0
    %v1269 = vsel %vm502, %v1264, 0
    %v1271 = vsel %vm502, %v1266, 0
    %1273 = vmatprep.subr.mxu0 0.0
    %1274 = vmatpush1.xpose.msra.mxu0 0.0
    %1275 = vmatprep.subr.mxu0 0.0
    %1276 = vmatpush1.xpose.msra.mxu0 0.0
    %1277 = vmatprep.subr.mxu0 0.0
    %1278 = vmatpush1.xpose.msra.mxu0 0.0
    %1279 = vmatprep.subr.mxu0 0.0
    %1280 = vmatpush1.xpose.msra.mxu0 0.0
    %1281 = vmatprep.subr.mxu0 0.0
    %1282 = vmatpush1.xpose.msra.mxu0 0.0
    %1283 = vmatprep.subr.mxu0 0.0
    %1284 = vmatpush1.xpose.msra.mxu0 0.0
    %1285 = vmatprep.subr.mxu0 0.0
    %1286 = vmatpush1.xpose.msra.mxu0 0.0
    %1287 = vmatprep.subr.mxu0 0.0
    %1288 = vmatpush1.xpose.msra.mxu0 0.0
    %1289 = vmatprep.subr.mxu0 0.0
    %1290 = vmatpush1.xpose.msra.mxu0 0.0
    %1291 = vmatprep.subr.mxu0 0.0
    %1292 = vmatpush1.xpose.msra.mxu0 0.0
    %1293 = vmatprep.subr.mxu0 0.0
    %1294 = vmatpush1.xpose.msra.mxu0 0.0
    %1295 = vmatprep.subr.mxu0 0.0
    %1296 = vmatpush1.xpose.msra.mxu0 0.0
    %1297 = vmatprep.subr.mxu0 0.0
    %1298 = vmatpush1.xpose.msra.mxu0 0.0
    %1299 = vmatprep.subr.mxu0 0.0
    %1300 = vmatpush1.xpose.msra.mxu0 0.0
    %1301 = vmatprep.subr.mxu0 0.0
    %1302 = vmatpush1.xpose.msra.mxu0 0.0
    %1303 = vmatprep.subr.mxu0 0.0
    %1304 = vmatpush1.xpose.msra.mxu0 %v1271
    %1305 = vmatprep.subr.mxu0 0.0
    %1306 = vmatpush2.xpose.msra.mxu0 0.0
    %1307 = vmatprep.subr.mxu0 0.0
    %1308 = vmatpush2.xpose.msra.mxu0 0.0
    %1309 = vmatprep.subr.mxu0 0.0
    %1310 = vmatpush2.xpose.msra.mxu0 0.0
    %1311 = vmatprep.subr.mxu0 0.0
    %1312 = vmatpush2.xpose.msra.mxu0 0.0
    %1313 = vmatprep.subr.mxu0 0.0
    %1314 = vmatpush2.xpose.msra.mxu0 0.0
    %1315 = vmatprep.subr.mxu0 0.0
    %1316 = vmatpush2.xpose.msra.mxu0 0.0
    %1317 = vmatprep.subr.mxu0 0.0
    %1318 = vmatpush2.xpose.msra.mxu0 0.0
    %1319 = vmatprep.subr.mxu0 0.0
    %1320 = vmatpush2.xpose.msra.mxu0 0.0
    %1321 = vmatprep.subr.mxu0 0.0
    %1322 = vmatpush2.xpose.msra.mxu0 0.0
    %1323 = vmatprep.subr.mxu0 0.0
    %1324 = vmatpush2.xpose.msra.mxu0 0.0
    %1325 = vmatprep.subr.mxu0 0.0
    %1326 = vmatpush2.xpose.msra.mxu0 0.0
    %1327 = vmatprep.subr.mxu0 0.0
    %1328 = vmatpush2.xpose.msra.mxu0 0.0
    %1329 = vmatprep.subr.mxu0 0.0
    %1330 = vmatpush2.xpose.msra.mxu0 0.0
    %1331 = vmatprep.subr.mxu0 0.0
    %1332 = vmatpush2.xpose.msra.mxu0 0.0
    %1333 = vmatprep.subr.mxu0 0.0
    %1334 = vmatpush2.xpose.msra.mxu0 0.0
    %1335 = vmatprep.subr.mxu0 0.0
    %1336 = vmatpush2.xpose.msra.mxu0 0.0
    %1337 = vmatprep.mubr.f32.mxu0 0.0
    %1338 = vmatmul.mubr.f32.gmra.mxu0 %v1267
    %v1339 = vpop.f32.mrf.mxu0
    %v1340 = vadd.f32 0.0, %v1339
    %v1341 = vpop.f32.mrf.mxu0
    %1342 = vmatprep.mubr.f32.mxu0 0.0
    %1343 = vmatmul.mubr.f32.gmra.mxu0 %v1269
    %v1344 = vpop.f32.mrf.mxu0
    %v1345 = vadd.f32 0.0, %v1344
    %v1346 = vpop.f32.mrf.mxu0
    %1347 = vdwg.mxu0
    %1348 = vrot.lane.b32.xlu0 %v177, 112
    %v1349 = vpop.permute.xlu0 %1348
    %1350 = vrot.lane.b32.xlu0 %v182, 112
    %v1351 = vpop.permute.xlu0 %1350
    %1352 = vrot.lane.b32.xlu0 %v344, 112
    %v1353 = vpop.permute.xlu0 %1352
    %v1354 = vsel %vm502, %v1349, 0
    %v1356 = vsel %vm502, %v1351, 0
    %v1358 = vsel %vm502, %v1353, 0
    %1360 = vmatprep.subr.mxu0 0.0
    %1361 = vmatpush1.xpose.msra.mxu0 0.0
    %1362 = vmatprep.subr.mxu0 0.0
    %1363 = vmatpush1.xpose.msra.mxu0 0.0
    %1364 = vmatprep.subr.mxu0 0.0
    %1365 = vmatpush1.xpose.msra.mxu0 0.0
    %1366 = vmatprep.subr.mxu0 0.0
    %1367 = vmatpush1.xpose.msra.mxu0 0.0
    %1368 = vmatprep.subr.mxu0 0.0
    %1369 = vmatpush1.xpose.msra.mxu0 0.0
    %1370 = vmatprep.subr.mxu0 0.0
    %1371 = vmatpush1.xpose.msra.mxu0 0.0
    %1372 = vmatprep.subr.mxu0 0.0
    %1373 = vmatpush1.xpose.msra.mxu0 0.0
    %1374 = vmatprep.subr.mxu0 0.0
    %1375 = vmatpush1.xpose.msra.mxu0 0.0
    %1376 = vmatprep.subr.mxu0 0.0
    %1377 = vmatpush1.xpose.msra.mxu0 0.0
    %1378 = vmatprep.subr.mxu0 0.0
    %1379 = vmatpush1.xpose.msra.mxu0 0.0
    %1380 = vmatprep.subr.mxu0 0.0
    %1381 = vmatpush1.xpose.msra.mxu0 0.0
    %1382 = vmatprep.subr.mxu0 0.0
    %1383 = vmatpush1.xpose.msra.mxu0 0.0
    %1384 = vmatprep.subr.mxu0 0.0
    %1385 = vmatpush1.xpose.msra.mxu0 0.0
    %1386 = vmatprep.subr.mxu0 0.0
    %1387 = vmatpush1.xpose.msra.mxu0 0.0
    %1388 = vmatprep.subr.mxu0 0.0
    %1389 = vmatpush1.xpose.msra.mxu0 0.0
    %1390 = vmatprep.subr.mxu0 0.0
    %1391 = vmatpush1.xpose.msra.mxu0 %v1358
    %1392 = vmatprep.subr.mxu0 0.0
    %1393 = vmatpush2.xpose.msra.mxu0 0.0
    %1394 = vmatprep.subr.mxu0 0.0
    %1395 = vmatpush2.xpose.msra.mxu0 0.0
    %1396 = vmatprep.subr.mxu0 0.0
    %1397 = vmatpush2.xpose.msra.mxu0 0.0
    %1398 = vmatprep.subr.mxu0 0.0
    %1399 = vmatpush2.xpose.msra.mxu0 0.0
    %1400 = vmatprep.subr.mxu0 0.0
    %1401 = vmatpush2.xpose.msra.mxu0 0.0
    %1402 = vmatprep.subr.mxu0 0.0
    %1403 = vmatpush2.xpose.msra.mxu0 0.0
    %1404 = vmatprep.subr.mxu0 0.0
    %1405 = vmatpush2.xpose.msra.mxu0 0.0
    %1406 = vmatprep.subr.mxu0 0.0
    %1407 = vmatpush2.xpose.msra.mxu0 0.0
    %1408 = vmatprep.subr.mxu0 0.0
    %1409 = vmatpush2.xpose.msra.mxu0 0.0
    %1410 = vmatprep.subr.mxu0 0.0
    %1411 = vmatpush2.xpose.msra.mxu0 0.0
    %1412 = vmatprep.subr.mxu0 0.0
    %1413 = vmatpush2.xpose.msra.mxu0 0.0
    %1414 = vmatprep.subr.mxu0 0.0
    %1415 = vmatpush2.xpose.msra.mxu0 0.0
    %1416 = vmatprep.subr.mxu0 0.0
    %1417 = vmatpush2.xpose.msra.mxu0 0.0
    %1418 = vmatprep.subr.mxu0 0.0
    %1419 = vmatpush2.xpose.msra.mxu0 0.0
    %1420 = vmatprep.subr.mxu0 0.0
    %1421 = vmatpush2.xpose.msra.mxu0 0.0
    %1422 = vmatprep.subr.mxu0 0.0
    %1423 = vmatpush2.xpose.msra.mxu0 0.0
    %1424 = vmatprep.mubr.f32.mxu0 0.0
    %1425 = vmatmul.mubr.f32.gmra.mxu0 %v1354
    %v1426 = vpop.f32.mrf.mxu0
    %v1427 = vadd.f32 0.0, %v1426
    %v1428 = vpop.f32.mrf.mxu0
    %1429 = vmatprep.mubr.f32.mxu0 0.0
    %1430 = vmatmul.mubr.f32.gmra.mxu0 %v1356
    %v1431 = vpop.f32.mrf.mxu0
    %v1432 = vadd.f32 0.0, %v1431
    %v1433 = vpop.f32.mrf.mxu0
    %1434 = vdwg.mxu0
    %v1435 = vsel %vm502, %v1340, -inf
    %1436 = vmax.xlane.f32.xlu0 %v1435
    %v1437 = vpop.xlane.xlu0 %1436
    %v1438 = vsel %vm502, %v1345, -inf
    %1439 = vmax.xlane.f32.xlu0 %v1438
    %v1440 = vpop.xlane.xlu0 %1439
    %v1441 = vsel %vm502, %v1427, -inf
    %1442 = vmax.xlane.f32.xlu0 %v1441
    %v1443 = vpop.xlane.xlu0 %1442
    %v1444 = vsel %vm502, %v1432, -inf
    %1445 = vmax.xlane.f32.xlu0 %v1444
    %v1446 = vpop.xlane.xlu0 %1445
    %v1447 = vsub.f32 %v1340, %v1437
    %v1448 = vsub.f32 %v1345, %v1440
    %v1449 = vsub.f32 %v1427, %v1443
    %v1450 = vsub.f32 %v1432, %v1446
    %v1451 = vmul.f32 %v1447, 1.442695
    %v1452 = vpow.pop %v1451
    %v1453 = vmul.f32 %v1448, 1.442695
    %v1454 = vpow.pop %v1453
    %v1455 = vmul.f32 %v1449, 1.442695
    %v1456 = vpow.pop %v1455
    %v1457 = vmul.f32 %v1450, 1.442695
    %v1458 = vpow.pop %v1457
    %v1459 = vsel %vm502, %v1452, 0.0
    %1460 = vadd.xlane.f32.xlu0 %v1459
    %v1461 = vpop.xlane.xlu0 %1460
    %v1462 = vsel %vm502, %v1454, 0.0
    %1463 = vadd.xlane.f32.xlu0 %v1462
    %v1464 = vpop.xlane.xlu0 %1463
    %v1465 = vsel %vm502, %v1456, 0.0
    %1466 = vadd.xlane.f32.xlu0 %v1465
    %v1467 = vpop.xlane.xlu0 %1466
    %v1468 = vsel %vm502, %v1458, 0.0
    %1469 = vadd.xlane.f32.xlu0 %v1468
    %v1470 = vpop.xlane.xlu0 %1469
    %v1471 = vrcp.pop %v1461
    %v1472 = vrcp.pop %v1464
    %v1473 = vrcp.pop %v1467
    %v1474 = vrcp.pop %v1470
    %v1475 = vmul.f32 %v1452, %v1471
    %v1476 = vmul.f32 %v1454, %v1472
    %v1477 = vmul.f32 %v1456, %v1473
    %v1478 = vmul.f32 %v1458, %v1474
    %1479 = vrot.lane.b32.xlu0 %v423, 112
    %v1480 = vpop.permute.xlu0 %1479
    %v1483 = vsel %vm502, %v1475, 0
    %v1486 = vsel %vm502, %v1476, 0
    %1488 = vmatprep.subr.mxu0 0.0
    %1489 = vmatpush1.msra.mxu0 0.0
    %1490 = vmatprep.subr.mxu0 0.0
    %1491 = vmatpush1.msra.mxu0 0.0
    %1492 = vmatprep.subr.mxu0 0.0
    %1493 = vmatpush1.msra.mxu0 0.0
    %1494 = vmatprep.subr.mxu0 0.0
    %1495 = vmatpush1.msra.mxu0 0.0
    %1496 = vmatprep.subr.mxu0 0.0
    %1497 = vmatpush1.msra.mxu0 0.0
    %1498 = vmatprep.subr.mxu0 0.0
    %1499 = vmatpush1.msra.mxu0 0.0
    %1500 = vmatprep.subr.mxu0 0.0
    %1501 = vmatpush1.msra.mxu0 0.0
    %1502 = vmatprep.subr.mxu0 0.0
    %1503 = vmatpush1.msra.mxu0 0.0
    %1504 = vmatprep.subr.mxu0 0.0
    %1505 = vmatpush1.msra.mxu0 0.0
    %1506 = vmatprep.subr.mxu0 0.0
    %1507 = vmatpush1.msra.mxu0 0.0
    %1508 = vmatprep.subr.mxu0 0.0
    %1509 = vmatpush1.msra.mxu0 0.0
    %1510 = vmatprep.subr.mxu0 0.0
    %1511 = vmatpush1.msra.mxu0 0.0
    %1512 = vmatprep.subr.mxu0 0.0
    %1513 = vmatpush1.msra.mxu0 0.0
    %1514 = vmatprep.subr.mxu0 0.0
    %1515 = vmatpush1.msra.mxu0 0.0
    %1516 = vmatprep.subr.mxu0 0.0
    %1517 = vmatpush1.msra.mxu0 0.0
    %1518 = vmatprep.subr.mxu0 0.0
    %1519 = vmatpush1.msra.mxu0 %v1480
    %1520 = vmatprep.subr.mxu0 0.0
    %1521 = vmatpush2.msra.mxu0 0.0
    %1522 = vmatprep.subr.mxu0 0.0
    %1523 = vmatpush2.msra.mxu0 0.0
    %1524 = vmatprep.subr.mxu0 0.0
    %1525 = vmatpush2.msra.mxu0 0.0
    %1526 = vmatprep.subr.mxu0 0.0
    %1527 = vmatpush2.msra.mxu0 0.0
    %1528 = vmatprep.subr.mxu0 0.0
    %1529 = vmatpush2.msra.mxu0 0.0
    %1530 = vmatprep.subr.mxu0 0.0
    %1531 = vmatpush2.msra.mxu0 0.0
    %1532 = vmatprep.subr.mxu0 0.0
    %1533 = vmatpush2.msra.mxu0 0.0
    %1534 = vmatprep.subr.mxu0 0.0
    %1535 = vmatpush2.msra.mxu0 0.0
    %1536 = vmatprep.subr.mxu0 0.0
    %1537 = vmatpush2.msra.mxu0 0.0
    %1538 = vmatprep.subr.mxu0 0.0
    %1539 = vmatpush2.msra.mxu0 0.0
    %1540 = vmatprep.subr.mxu0 0.0
    %1541 = vmatpush2.msra.mxu0 0.0
    %1542 = vmatprep.subr.mxu0 0.0
    %1543 = vmatpush2.msra.mxu0 0.0
    %1544 = vmatprep.subr.mxu0 0.0
    %1545 = vmatpush2.msra.mxu0 0.0
    %1546 = vmatprep.subr.mxu0 0.0
    %1547 = vmatpush2.msra.mxu0 0.0
    %1548 = vmatprep.subr.mxu0 0.0
    %1549 = vmatpush2.msra.mxu0 0.0
    %1550 = vmatprep.subr.mxu0 0.0
    %1551 = vmatpush2.msra.mxu0 0.0
    %1552 = vmatprep.mubr.f32.mxu0 0.0
    %1553 = vmatmul.mubr.f32.gmra.mxu0 %v1483
    %v1554 = vpop.f32.mrf.mxu0
    %v1555 = vadd.f32 0.0, %v1554
    %v1556 = vpop.f32.mrf.mxu0
    %1557 = vmatprep.mubr.f32.mxu0 0.0
    %1558 = vmatmul.mubr.f32.gmra.mxu0 %v1486
    %v1559 = vpop.f32.mrf.mxu0
    %v1560 = vadd.f32 0.0, %v1559
    %v1561 = vpop.f32.mrf.mxu0
    %1562 = vdwg.mxu0
    %1563 = vrot.lane.b32.xlu0 %v499, 112
    %v1564 = vpop.permute.xlu0 %1563
    %v1567 = vsel %vm502, %v1477, 0
    %v1570 = vsel %vm502, %v1478, 0
    %1572 = vmatprep.subr.mxu0 0.0
    %1573 = vmatpush1.msra.mxu0 0.0
    %1574 = vmatprep.subr.mxu0 0.0
    %1575 = vmatpush1.msra.mxu0 0.0
    %1576 = vmatprep.subr.mxu0 0.0
    %1577 = vmatpush1.msra.mxu0 0.0
    %1578 = vmatprep.subr.mxu0 0.0
    %1579 = vmatpush1.msra.mxu0 0.0
    %1580 = vmatprep.subr.mxu0 0.0
    %1581 = vmatpush1.msra.mxu0 0.0
    %1582 = vmatprep.subr.mxu0 0.0
    %1583 = vmatpush1.msra.mxu0 0.0
    %1584 = vmatprep.subr.mxu0 0.0
    %1585 = vmatpush1.msra.mxu0 0.0
    %1586 = vmatprep.subr.mxu0 0.0
    %1587 = vmatpush1.msra.mxu0 0.0
    %1588 = vmatprep.subr.mxu0 0.0
    %1589 = vmatpush1.msra.mxu0 0.0
    %1590 = vmatprep.subr.mxu0 0.0
    %1591 = vmatpush1.msra.mxu0 0.0
    %1592 = vmatprep.subr.mxu0 0.0
    %1593 = vmatpush1.msra.mxu0 0.0
    %1594 = vmatprep.subr.mxu0 0.0
    %1595 = vmatpush1.msra.mxu0 0.0
    %1596 = vmatprep.subr.mxu0 0.0
    %1597 = vmatpush1.msra.mxu0 0.0
    %1598 = vmatprep.subr.mxu0 0.0
    %1599 = vmatpush1.msra.mxu0 0.0
    %1600 = vmatprep.subr.mxu0 0.0
    %1601 = vmatpush1.msra.mxu0 0.0
    %1602 = vmatprep.subr.mxu0 0.0
    %1603 = vmatpush1.msra.mxu0 %v1564
    %1604 = vmatprep.subr.mxu0 0.0
    %1605 = vmatpush2.msra.mxu0 0.0
    %1606 = vmatprep.subr.mxu0 0.0
    %1607 = vmatpush2.msra.mxu0 0.0
    %1608 = vmatprep.subr.mxu0 0.0
    %1609 = vmatpush2.msra.mxu0 0.0
    %1610 = vmatprep.subr.mxu0 0.0
    %1611 = vmatpush2.msra.mxu0 0.0
    %1612 = vmatprep.subr.mxu0 0.0
    %1613 = vmatpush2.msra.mxu0 0.0
    %1614 = vmatprep.subr.mxu0 0.0
    %1615 = vmatpush2.msra.mxu0 0.0
    %1616 = vmatprep.subr.mxu0 0.0
    %1617 = vmatpush2.msra.mxu0 0.0
    %1618 = vmatprep.subr.mxu0 0.0
    %1619 = vmatpush2.msra.mxu0 0.0
    %1620 = vmatprep.subr.mxu0 0.0
    %1621 = vmatpush2.msra.mxu0 0.0
    %1622 = vmatprep.subr.mxu0 0.0
    %1623 = vmatpush2.msra.mxu0 0.0
    %1624 = vmatprep.subr.mxu0 0.0
    %1625 = vmatpush2.msra.mxu0 0.0
    %1626 = vmatprep.subr.mxu0 0.0
    %1627 = vmatpush2.msra.mxu0 0.0
    %1628 = vmatprep.subr.mxu0 0.0
    %1629 = vmatpush2.msra.mxu0 0.0
    %1630 = vmatprep.subr.mxu0 0.0
    %1631 = vmatpush2.msra.mxu0 0.0
    %1632 = vmatprep.subr.mxu0 0.0
    %1633 = vmatpush2.msra.mxu0 0.0
    %1634 = vmatprep.subr.mxu0 0.0
    %1635 = vmatpush2.msra.mxu0 0.0
    %1636 = vmatprep.mubr.f32.mxu0 0.0
    %1637 = vmatmul.mubr.f32.gmra.mxu0 %v1567
    %v1638 = vpop.f32.mrf.mxu0
    %v1639 = vadd.f32 0.0, %v1638
    %v1640 = vpop.f32.mrf.mxu0
    %1641 = vmatprep.mubr.f32.mxu0 0.0
    %1642 = vmatmul.mubr.f32.gmra.mxu0 %v1570
    %v1643 = vpop.f32.mrf.mxu0
    %v1644 = vadd.f32 0.0, %v1643
    %v1645 = vpop.f32.mrf.mxu0
    %1646 = vdwg.mxu0
    %1647 = vrot.lane.b32.xlu0 %v167, 104
    %v1648 = vpop.permute.xlu0 %1647
    %1649 = vrot.lane.b32.xlu0 %v172, 104
    %v1650 = vpop.permute.xlu0 %1649
    %1651 = vrot.lane.b32.xlu0 %v266, 104
    %v1652 = vpop.permute.xlu0 %1651
    %v1653 = vsel %vm502, %v1648, 0
    %v1655 = vsel %vm502, %v1650, 0
    %v1657 = vsel %vm502, %v1652, 0
    %1659 = vmatprep.subr.mxu0 0.0
    %1660 = vmatpush1.xpose.msra.mxu0 0.0
    %1661 = vmatprep.subr.mxu0 0.0
    %1662 = vmatpush1.xpose.msra.mxu0 0.0
    %1663 = vmatprep.subr.mxu0 0.0
    %1664 = vmatpush1.xpose.msra.mxu0 0.0
    %1665 = vmatprep.subr.mxu0 0.0
    %1666 = vmatpush1.xpose.msra.mxu0 0.0
    %1667 = vmatprep.subr.mxu0 0.0
    %1668 = vmatpush1.xpose.msra.mxu0 0.0
    %1669 = vmatprep.subr.mxu0 0.0
    %1670 = vmatpush1.xpose.msra.mxu0 0.0
    %1671 = vmatprep.subr.mxu0 0.0
    %1672 = vmatpush1.xpose.msra.mxu0 0.0
    %1673 = vmatprep.subr.mxu0 0.0
    %1674 = vmatpush1.xpose.msra.mxu0 0.0
    %1675 = vmatprep.subr.mxu0 0.0
    %1676 = vmatpush1.xpose.msra.mxu0 0.0
    %1677 = vmatprep.subr.mxu0 0.0
    %1678 = vmatpush1.xpose.msra.mxu0 0.0
    %1679 = vmatprep.subr.mxu0 0.0
    %1680 = vmatpush1.xpose.msra.mxu0 0.0
    %1681 = vmatprep.subr.mxu0 0.0
    %1682 = vmatpush1.xpose.msra.mxu0 0.0
    %1683 = vmatprep.subr.mxu0 0.0
    %1684 = vmatpush1.xpose.msra.mxu0 0.0
    %1685 = vmatprep.subr.mxu0 0.0
    %1686 = vmatpush1.xpose.msra.mxu0 0.0
    %1687 = vmatprep.subr.mxu0 0.0
    %1688 = vmatpush1.xpose.msra.mxu0 0.0
    %1689 = vmatprep.subr.mxu0 0.0
    %1690 = vmatpush1.xpose.msra.mxu0 %v1657
    %1691 = vmatprep.subr.mxu0 0.0
    %1692 = vmatpush2.xpose.msra.mxu0 0.0
    %1693 = vmatprep.subr.mxu0 0.0
    %1694 = vmatpush2.xpose.msra.mxu0 0.0
    %1695 = vmatprep.subr.mxu0 0.0
    %1696 = vmatpush2.xpose.msra.mxu0 0.0
    %1697 = vmatprep.subr.mxu0 0.0
    %1698 = vmatpush2.xpose.msra.mxu0 0.0
    %1699 = vmatprep.subr.mxu0 0.0
    %1700 = vmatpush2.xpose.msra.mxu0 0.0
    %1701 = vmatprep.subr.mxu0 0.0
    %1702 = vmatpush2.xpose.msra.mxu0 0.0
    %1703 = vmatprep.subr.mxu0 0.0
    %1704 = vmatpush2.xpose.msra.mxu0 0.0
    %1705 = vmatprep.subr.mxu0 0.0
    %1706 = vmatpush2.xpose.msra.mxu0 0.0
    %1707 = vmatprep.subr.mxu0 0.0
    %1708 = vmatpush2.xpose.msra.mxu0 0.0
    %1709 = vmatprep.subr.mxu0 0.0
    %1710 = vmatpush2.xpose.msra.mxu0 0.0
    %1711 = vmatprep.subr.mxu0 0.0
    %1712 = vmatpush2.xpose.msra.mxu0 0.0
    %1713 = vmatprep.subr.mxu0 0.0
    %1714 = vmatpush2.xpose.msra.mxu0 0.0
    %1715 = vmatprep.subr.mxu0 0.0
    %1716 = vmatpush2.xpose.msra.mxu0 0.0
    %1717 = vmatprep.subr.mxu0 0.0
    %1718 = vmatpush2.xpose.msra.mxu0 0.0
    %1719 = vmatprep.subr.mxu0 0.0
    %1720 = vmatpush2.xpose.msra.mxu0 0.0
    %1721 = vmatprep.subr.mxu0 0.0
    %1722 = vmatpush2.xpose.msra.mxu0 0.0
    %1723 = vmatprep.mubr.f32.mxu0 0.0
    %1724 = vmatmul.mubr.f32.gmra.mxu0 %v1653
    %v1725 = vpop.f32.mrf.mxu0
    %v1726 = vadd.f32 0.0, %v1725
    %v1727 = vpop.f32.mrf.mxu0
    %1728 = vmatprep.mubr.f32.mxu0 0.0
    %1729 = vmatmul.mubr.f32.gmra.mxu0 %v1655
    %v1730 = vpop.f32.mrf.mxu0
    %v1731 = vadd.f32 0.0, %v1730
    %v1732 = vpop.f32.mrf.mxu0
    %1733 = vdwg.mxu0
    %1734 = vrot.lane.b32.xlu0 %v177, 104
    %v1735 = vpop.permute.xlu0 %1734
    %1736 = vrot.lane.b32.xlu0 %v182, 104
    %v1737 = vpop.permute.xlu0 %1736
    %1738 = vrot.lane.b32.xlu0 %v344, 104
    %v1739 = vpop.permute.xlu0 %1738
    %v1740 = vsel %vm502, %v1735, 0
    %v1742 = vsel %vm502, %v1737, 0
    %v1744 = vsel %vm502, %v1739, 0
    %1746 = vmatprep.subr.mxu0 0.0
    %1747 = vmatpush1.xpose.msra.mxu0 0.0
    %1748 = vmatprep.subr.mxu0 0.0
    %1749 = vmatpush1.xpose.msra.mxu0 0.0
    %1750 = vmatprep.subr.mxu0 0.0
    %1751 = vmatpush1.xpose.msra.mxu0 0.0
    %1752 = vmatprep.subr.mxu0 0.0
    %1753 = vmatpush1.xpose.msra.mxu0 0.0
    %1754 = vmatprep.subr.mxu0 0.0
    %1755 = vmatpush1.xpose.msra.mxu0 0.0
    %1756 = vmatprep.subr.mxu0 0.0
    %1757 = vmatpush1.xpose.msra.mxu0 0.0
    %1758 = vmatprep.subr.mxu0 0.0
    %1759 = vmatpush1.xpose.msra.mxu0 0.0
    %1760 = vmatprep.subr.mxu0 0.0
    %1761 = vmatpush1.xpose.msra.mxu0 0.0
    %1762 = vmatprep.subr.mxu0 0.0
    %1763 = vmatpush1.xpose.msra.mxu0 0.0
    %1764 = vmatprep.subr.mxu0 0.0
    %1765 = vmatpush1.xpose.msra.mxu0 0.0
    %1766 = vmatprep.subr.mxu0 0.0
    %1767 = vmatpush1.xpose.msra.mxu0 0.0
    %1768 = vmatprep.subr.mxu0 0.0
    %1769 = vmatpush1.xpose.msra.mxu0 0.0
    %1770 = vmatprep.subr.mxu0 0.0
    %1771 = vmatpush1.xpose.msra.mxu0 0.0
    %1772 = vmatprep.subr.mxu0 0.0
    %1773 = vmatpush1.xpose.msra.mxu0 0.0
    %1774 = vmatprep.subr.mxu0 0.0
    %1775 = vmatpush1.xpose.msra.mxu0 0.0
    %1776 = vmatprep.subr.mxu0 0.0
    %1777 = vmatpush1.xpose.msra.mxu0 %v1744
    %1778 = vmatprep.subr.mxu0 0.0
    %1779 = vmatpush2.xpose.msra.mxu0 0.0
    %1780 = vmatprep.subr.mxu0 0.0
    %1781 = vmatpush2.xpose.msra.mxu0 0.0
    %1782 = vmatprep.subr.mxu0 0.0
    %1783 = vmatpush2.xpose.msra.mxu0 0.0
    %1784 = vmatprep.subr.mxu0 0.0
    %1785 = vmatpush2.xpose.msra.mxu0 0.0
    %1786 = vmatprep.subr.mxu0 0.0
    %1787 = vmatpush2.xpose.msra.mxu0 0.0
    %1788 = vmatprep.subr.mxu0 0.0
    %1789 = vmatpush2.xpose.msra.mxu0 0.0
    %1790 = vmatprep.subr.mxu0 0.0
    %1791 = vmatpush2.xpose.msra.mxu0 0.0
    %1792 = vmatprep.subr.mxu0 0.0
    %1793 = vmatpush2.xpose.msra.mxu0 0.0
    %1794 = vmatprep.subr.mxu0 0.0
    %1795 = vmatpush2.xpose.msra.mxu0 0.0
    %1796 = vmatprep.subr.mxu0 0.0
    %1797 = vmatpush2.xpose.msra.mxu0 0.0
    %1798 = vmatprep.subr.mxu0 0.0
    %1799 = vmatpush2.xpose.msra.mxu0 0.0
    %1800 = vmatprep.subr.mxu0 0.0
    %1801 = vmatpush2.xpose.msra.mxu0 0.0
    %1802 = vmatprep.subr.mxu0 0.0
    %1803 = vmatpush2.xpose.msra.mxu0 0.0
    %1804 = vmatprep.subr.mxu0 0.0
    %1805 = vmatpush2.xpose.msra.mxu0 0.0
    %1806 = vmatprep.subr.mxu0 0.0
    %1807 = vmatpush2.xpose.msra.mxu0 0.0
    %1808 = vmatprep.subr.mxu0 0.0
    %1809 = vmatpush2.xpose.msra.mxu0 0.0
    %1810 = vmatprep.mubr.f32.mxu0 0.0
    %1811 = vmatmul.mubr.f32.gmra.mxu0 %v1740
    %v1812 = vpop.f32.mrf.mxu0
    %v1813 = vadd.f32 0.0, %v1812
    %v1814 = vpop.f32.mrf.mxu0
    %1815 = vmatprep.mubr.f32.mxu0 0.0
    %1816 = vmatmul.mubr.f32.gmra.mxu0 %v1742
    %v1817 = vpop.f32.mrf.mxu0
    %v1818 = vadd.f32 0.0, %v1817
    %v1819 = vpop.f32.mrf.mxu0
    %1820 = vdwg.mxu0
    %v1821 = vsel %vm502, %v1726, -inf
    %1822 = vmax.xlane.f32.xlu0 %v1821
    %v1823 = vpop.xlane.xlu0 %1822
    %v1824 = vsel %vm502, %v1731, -inf
    %1825 = vmax.xlane.f32.xlu0 %v1824
    %v1826 = vpop.xlane.xlu0 %1825
    %v1827 = vsel %vm502, %v1813, -inf
    %1828 = vmax.xlane.f32.xlu0 %v1827
    %v1829 = vpop.xlane.xlu0 %1828
    %v1830 = vsel %vm502, %v1818, -inf
    %1831 = vmax.xlane.f32.xlu0 %v1830
    %v1832 = vpop.xlane.xlu0 %1831
    %v1833 = vsub.f32 %v1726, %v1823
    %v1834 = vsub.f32 %v1731, %v1826
    %v1835 = vsub.f32 %v1813, %v1829
    %v1836 = vsub.f32 %v1818, %v1832
    %v1837 = vmul.f32 %v1833, 1.442695
    %v1838 = vpow.pop %v1837
    %v1839 = vmul.f32 %v1834, 1.442695
    %v1840 = vpow.pop %v1839
    %v1841 = vmul.f32 %v1835, 1.442695
    %v1842 = vpow.pop %v1841
    %v1843 = vmul.f32 %v1836, 1.442695
    %v1844 = vpow.pop %v1843
    %v1845 = vsel %vm502, %v1838, 0.0
    %1846 = vadd.xlane.f32.xlu0 %v1845
    %v1847 = vpop.xlane.xlu0 %1846
    %v1848 = vsel %vm502, %v1840, 0.0
    %1849 = vadd.xlane.f32.xlu0 %v1848
    %v1850 = vpop.xlane.xlu0 %1849
    %v1851 = vsel %vm502, %v1842, 0.0
    %1852 = vadd.xlane.f32.xlu0 %v1851
    %v1853 = vpop.xlane.xlu0 %1852
    %v1854 = vsel %vm502, %v1844, 0.0
    %1855 = vadd.xlane.f32.xlu0 %v1854
    %v1856 = vpop.xlane.xlu0 %1855
    %v1857 = vrcp.pop %v1847
    %v1858 = vrcp.pop %v1850
    %v1859 = vrcp.pop %v1853
    %v1860 = vrcp.pop %v1856
    %v1861 = vmul.f32 %v1838, %v1857
    %v1862 = vmul.f32 %v1840, %v1858
    %v1863 = vmul.f32 %v1842, %v1859
    %v1864 = vmul.f32 %v1844, %v1860
    %1865 = vrot.lane.b32.xlu0 %v423, 104
    %v1866 = vpop.permute.xlu0 %1865
    %v1869 = vsel %vm502, %v1861, 0
    %v1872 = vsel %vm502, %v1862, 0
    %1874 = vmatprep.subr.mxu0 0.0
    %1875 = vmatpush1.msra.mxu0 0.0
    %1876 = vmatprep.subr.mxu0 0.0
    %1877 = vmatpush1.msra.mxu0 0.0
    %1878 = vmatprep.subr.mxu0 0.0
    %1879 = vmatpush1.msra.mxu0 0.0
    %1880 = vmatprep.subr.mxu0 0.0
    %1881 = vmatpush1.msra.mxu0 0.0
    %1882 = vmatprep.subr.mxu0 0.0
    %1883 = vmatpush1.msra.mxu0 0.0
    %1884 = vmatprep.subr.mxu0 0.0
    %1885 = vmatpush1.msra.mxu0 0.0
    %1886 = vmatprep.subr.mxu0 0.0
    %1887 = vmatpush1.msra.mxu0 0.0
    %1888 = vmatprep.subr.mxu0 0.0
    %1889 = vmatpush1.msra.mxu0 0.0
    %1890 = vmatprep.subr.mxu0 0.0
    %1891 = vmatpush1.msra.mxu0 0.0
    %1892 = vmatprep.subr.mxu0 0.0
    %1893 = vmatpush1.msra.mxu0 0.0
    %1894 = vmatprep.subr.mxu0 0.0
    %1895 = vmatpush1.msra.mxu0 0.0
    %1896 = vmatprep.subr.mxu0 0.0
    %1897 = vmatpush1.msra.mxu0 0.0
    %1898 = vmatprep.subr.mxu0 0.0
    %1899 = vmatpush1.msra.mxu0 0.0
    %1900 = vmatprep.subr.mxu0 0.0
    %1901 = vmatpush1.msra.mxu0 0.0
    %1902 = vmatprep.subr.mxu0 0.0
    %1903 = vmatpush1.msra.mxu0 0.0
    %1904 = vmatprep.subr.mxu0 0.0
    %1905 = vmatpush1.msra.mxu0 %v1866
    %1906 = vmatprep.subr.mxu0 0.0
    %1907 = vmatpush2.msra.mxu0 0.0
    %1908 = vmatprep.subr.mxu0 0.0
    %1909 = vmatpush2.msra.mxu0 0.0
    %1910 = vmatprep.subr.mxu0 0.0
    %1911 = vmatpush2.msra.mxu0 0.0
    %1912 = vmatprep.subr.mxu0 0.0
    %1913 = vmatpush2.msra.mxu0 0.0
    %1914 = vmatprep.subr.mxu0 0.0
    %1915 = vmatpush2.msra.mxu0 0.0
    %1916 = vmatprep.subr.mxu0 0.0
    %1917 = vmatpush2.msra.mxu0 0.0
    %1918 = vmatprep.subr.mxu0 0.0
    %1919 = vmatpush2.msra.mxu0 0.0
    %1920 = vmatprep.subr.mxu0 0.0
    %1921 = vmatpush2.msra.mxu0 0.0
    %1922 = vmatprep.subr.mxu0 0.0
    %1923 = vmatpush2.msra.mxu0 0.0
    %1924 = vmatprep.subr.mxu0 0.0
    %1925 = vmatpush2.msra.mxu0 0.0
    %1926 = vmatprep.subr.mxu0 0.0
    %1927 = vmatpush2.msra.mxu0 0.0
    %1928 = vmatprep.subr.mxu0 0.0
    %1929 = vmatpush2.msra.mxu0 0.0
    %1930 = vmatprep.subr.mxu0 0.0
    %1931 = vmatpush2.msra.mxu0 0.0
    %1932 = vmatprep.subr.mxu0 0.0
    %1933 = vmatpush2.msra.mxu0 0.0
    %1934 = vmatprep.subr.mxu0 0.0
    %1935 = vmatpush2.msra.mxu0 0.0
    %1936 = vmatprep.subr.mxu0 0.0
    %1937 = vmatpush2.msra.mxu0 0.0
    %1938 = vmatprep.mubr.f32.mxu0 0.0
    %1939 = vmatmul.mubr.f32.gmra.mxu0 %v1869
    %v1940 = vpop.f32.mrf.mxu0
    %v1941 = vadd.f32 0.0, %v1940
    %v1942 = vpop.f32.mrf.mxu0
    %1943 = vmatprep.mubr.f32.mxu0 0.0
    %1944 = vmatmul.mubr.f32.gmra.mxu0 %v1872
    %v1945 = vpop.f32.mrf.mxu0
    %v1946 = vadd.f32 0.0, %v1945
    %v1947 = vpop.f32.mrf.mxu0
    %1948 = vdwg.mxu0
    %1949 = vrot.lane.b32.xlu0 %v499, 104
    %v1950 = vpop.permute.xlu0 %1949
    %v1953 = vsel %vm502, %v1863, 0
    %v1956 = vsel %vm502, %v1864, 0
    %1958 = vmatprep.subr.mxu0 0.0
    %1959 = vmatpush1.msra.mxu0 0.0
    %1960 = vmatprep.subr.mxu0 0.0
    %1961 = vmatpush1.msra.mxu0 0.0
    %1962 = vmatprep.subr.mxu0 0.0
    %1963 = vmatpush1.msra.mxu0 0.0
    %1964 = vmatprep.subr.mxu0 0.0
    %1965 = vmatpush1.msra.mxu0 0.0
    %1966 = vmatprep.subr.mxu0 0.0
    %1967 = vmatpush1.msra.mxu0 0.0
    %1968 = vmatprep.subr.mxu0 0.0
    %1969 = vmatpush1.msra.mxu0 0.0
    %1970 = vmatprep.subr.mxu0 0.0
    %1971 = vmatpush1.msra.mxu0 0.0
    %1972 = vmatprep.subr.mxu0 0.0
    %1973 = vmatpush1.msra.mxu0 0.0
    %1974 = vmatprep.subr.mxu0 0.0
    %1975 = vmatpush1.msra.mxu0 0.0
    %1976 = vmatprep.subr.mxu0 0.0
    %1977 = vmatpush1.msra.mxu0 0.0
    %1978 = vmatprep.subr.mxu0 0.0
    %1979 = vmatpush1.msra.mxu0 0.0
    %1980 = vmatprep.subr.mxu0 0.0
    %1981 = vmatpush1.msra.mxu0 0.0
    %1982 = vmatprep.subr.mxu0 0.0
    %1983 = vmatpush1.msra.mxu0 0.0
    %1984 = vmatprep.subr.mxu0 0.0
    %1985 = vmatpush1.msra.mxu0 0.0
    %1986 = vmatprep.subr.mxu0 0.0
    %1987 = vmatpush1.msra.mxu0 0.0
    %1988 = vmatprep.subr.mxu0 0.0
    %1989 = vmatpush1.msra.mxu0 %v1950
    %1990 = vmatprep.subr.mxu0 0.0
    %1991 = vmatpush2.msra.mxu0 0.0
    %1992 = vmatprep.subr.mxu0 0.0
    %1993 = vmatpush2.msra.mxu0 0.0
    %1994 = vmatprep.subr.mxu0 0.0
    %1995 = vmatpush2.msra.mxu0 0.0
    %1996 = vmatprep.subr.mxu0 0.0
    %1997 = vmatpush2.msra.mxu0 0.0
    %1998 = vmatprep.subr.mxu0 0.0
    %1999 = vmatpush2.msra.mxu0 0.0
    %2000 = vmatprep.subr.mxu0 0.0
    %2001 = vmatpush2.msra.mxu0 0.0
    %2002 = vmatprep.subr.mxu0 0.0
    %2003 = vmatpush2.msra.mxu0 0.0
    %2004 = vmatprep.subr.mxu0 0.0
    %2005 = vmatpush2.msra.mxu0 0.0
    %2006 = vmatprep.subr.mxu0 0.0
    %2007 = vmatpush2.msra.mxu0 0.0
    %2008 = vmatprep.subr.mxu0 0.0
    %2009 = vmatpush2.msra.mxu0 0.0
    %2010 = vmatprep.subr.mxu0 0.0
    %2011 = vmatpush2.msra.mxu0 0.0
    %2012 = vmatprep.subr.mxu0 0.0
    %2013 = vmatpush2.msra.mxu0 0.0
    %2014 = vmatprep.subr.mxu0 0.0
    %2015 = vmatpush2.msra.mxu0 0.0
    %2016 = vmatprep.subr.mxu0 0.0
    %2017 = vmatpush2.msra.mxu0 0.0
    %2018 = vmatprep.subr.mxu0 0.0
    %2019 = vmatpush2.msra.mxu0 0.0
    %2020 = vmatprep.subr.mxu0 0.0
    %2021 = vmatpush2.msra.mxu0 0.0
    %2022 = vmatprep.mubr.f32.mxu0 0.0
    %2023 = vmatmul.mubr.f32.gmra.mxu0 %v1953
    %v2024 = vpop.f32.mrf.mxu0
    %v2025 = vadd.f32 0.0, %v2024
    %v2026 = vpop.f32.mrf.mxu0
    %2027 = vmatprep.mubr.f32.mxu0 0.0
    %2028 = vmatmul.mubr.f32.gmra.mxu0 %v1956
    %v2029 = vpop.f32.mrf.mxu0
    %v2030 = vadd.f32 0.0, %v2029
    %v2031 = vpop.f32.mrf.mxu0
    %2032 = vdwg.mxu0
    %2037 = vrot.lane.b32.xlu0 %v1168, 8
    %v2038 = vpop.permute.xlu0 %2037
    %2039 = vrot.lane.b32.xlu0 %v1173, 8
    %v2040 = vpop.permute.xlu0 %2039
    %2041 = vrot.lane.b32.xlu0 %v1253, 8
    %v2042 = vpop.permute.xlu0 %2041
    %2043 = vrot.lane.b32.xlu0 %v1258, 8
    %v2044 = vpop.permute.xlu0 %2043
    %2053 = vrot.lane.b32.xlu0 %v1555, 16
    %v2054 = vpop.permute.xlu0 %2053
    %2055 = vrot.lane.b32.xlu0 %v1560, 16
    %v2056 = vpop.permute.xlu0 %2055
    %2057 = vrot.lane.b32.xlu0 %v1639, 16
    %v2058 = vpop.permute.xlu0 %2057
    %2059 = vrot.lane.b32.xlu0 %v1644, 16
    %v2060 = vpop.permute.xlu0 %2059
    %2069 = vrot.lane.b32.xlu0 %v1941, 24
    %v2070 = vpop.permute.xlu0 %2069
    %2071 = vrot.lane.b32.xlu0 %v1946, 24
    %v2072 = vpop.permute.xlu0 %2071
    %2073 = vrot.lane.b32.xlu0 %v2025, 24
    %v2074 = vpop.permute.xlu0 %2073
    %2075 = vrot.lane.b32.xlu0 %v2030, 24
    %v2076 = vpop.permute.xlu0 %2075
    %v2081 = vsel %vm502, %v784, %v2038
    %v2082 = vsel %vm502, %v789, %v2040
    %v2083 = vsel %vm502, %v865, %v2042
    %v2084 = vsel %vm502, %v870, %v2044
    %v2085 = vsel %vm195, %v2081, %v2054
    %v2086 = vsel %vm195, %v2082, %v2056
    %v2087 = vsel %vm195, %v2083, %v2058
    %v2088 = vsel %vm195, %v2084, %v2060
    %vm2089 = vcmask 195584
    %v2090 = vsel %vm2089, %v2085, %v2070
    %v2091 = vsel %vm2089, %v2086, %v2072
    %v2092 = vsel %vm2089, %v2087, %v2074
    %v2093 = vsel %vm2089, %v2088, %v2076
    %2094 = vst.msk [vmem:[#allocation10] sm:$0xff] %vm87, %v2090
    %2095 = vst.msk [vmem:[#allocation10 + $0x8] sm:$0xff] %vm87, %v2091
    %2096 = vst.msk [vmem:[#allocation10 + $0x10] sm:$0xff] %vm87, %v2092
    %2097 = vst.msk [vmem:[#allocation10 + $0x18] sm:$0xff] %vm87, %v2093
    // Predicated region
    $region38: #{tpu_custom_call.1} parent=1 // pred_check
      _
    $region39: #{tpu_custom_call.1} parent=1 // pred_check_branch
      %2099 = sbr.rel (0) target = $region41
    $region40: #{tpu_custom_call.1} parent=1 // pred_region
      %s2101 = ssub.s32 512, 512
      %2102 = vsyncadd [#allocation4], %s2101
      %s2103 = sshll.u32 [#allocation10], 4
      %s2104 = int_to_ptr.vmem [resolvable:$true] %s2103
      %2109 = dma.vmem_to_hbm [thread:$0]  %s2104, 512, %s5, [#allocation4], 128, 128, 8
    $region41: #{tpu_custom_call.1} parent=1 // pred_fallthru
      _
    // Predicated region
    $region42: #{tpu_custom_call.1} parent=1 // pred_check
      _
    $region43: #{tpu_custom_call.1} parent=1 // pred_check_branch
      %2111 = sbr.rel (0) target = $region45
    $region44: #{tpu_custom_call.1} parent=1 // pred_region
      %2112 = dma.done [#allocation4], 512
    $region45: #{tpu_custom_call.1} parent=1 // pred_fallthru
      _
    %2113 = vsyncpa [#allocation3], 1
    %2114 = vsyncpa [#allocation6], 1
    %2115 = vsyncpa [#allocation9], 1
    %2116 = vsyncpa [#allocation4], 1

</llo_original>
